<compile_context>
chip_gen: v7x
topology: tpu7x:2x2x1
jax: 0.10.0
libtpu: 0.0.40
codegen_flags: <defaults>
</compile_context>

<pallas_src>
import functools
import math

import jax
import jax.numpy as jnp
from jax.experimental import pallas as pl
from jax.experimental.pallas import tpu as pltpu


LANE = 128


def _round_up(x, m):
    return (x + m - 1) // m * m


def _pick_tile(dim, cap):
    """Largest multiple of 128 that divides `dim` and is <= cap (dim % 128 == 0)."""
    if dim < LANE:
        return dim
    t = min(dim, cap)
    t -= t % LANE
    while dim % t != 0:
        t -= LANE
    return t


# ---------------------------------------------------------------------------
# Pallas kernels
# ---------------------------------------------------------------------------
def _mm_bn_act_kernel(a_ref, w_ref, s_ref, b_ref, o_ref, *, act):
    """Tiled matmul; folded-BN scale/bias + activation fused into the epilogue.

    grid = (M tiles, N tiles, K tiles).  The output block index_map ignores k,
    so the f32 output block is resident across the K axis and we accumulate
    straight into o_ref (no scratch accumulator).  Operands are bf16, the
    accumulation and epilogue run in f32.
    """
    k = pl.program_id(2)

    @pl.when(k == 0)
    def _():
        o_ref[...] = jnp.zeros_like(o_ref)

    o_ref[...] += jnp.dot(a_ref[...], w_ref[...],
                          preferred_element_type=jnp.float32)

    @pl.when(k == pl.num_programs(2) - 1)
    def _():
        y = o_ref[...] * s_ref[...] + b_ref[...]
        if act == "relu":
            y = jnp.maximum(y, 0.0)
        elif act == "leaky_relu":
            y = jnp.where(y > 0.0, y, 0.01 * y)
        elif act == "elu":
            y = jnp.where(y > 0.0, y, jnp.exp(jnp.minimum(y, 0.0)) - 1.0)
        o_ref[...] = y


@functools.lru_cache(maxsize=None)
def _matmul_bn_act_call(M, K, N, act):
    """Build (and cache) the pallas_call for an (M,K)@(K,N) conv matmul."""
    M8 = _round_up(M, 8)
    tm = min(M8, 256)                 # bounded M tile -> bounded VMEM, parallel axis
    M_pad = _round_up(M, tm)
    tk = _pick_tile(K, 512)           # divisor of K (K is a multiple of 128)
    tn = _pick_tile(N, 512)
    grid = (M_pad // tm, N // tn, K // tk)

    call = pl.pallas_call(
        functools.partial(_mm_bn_act_kernel, act=act),
        out_shape=jax.ShapeDtypeStruct((M_pad, N), jnp.float32),
        grid_spec=pltpu.PrefetchScalarGridSpec(
            num_scalar_prefetch=0,
            grid=grid,
            in_specs=[
                pl.BlockSpec((tm, tk), lambda m, n, k: (m, k)),   # activations (bf16)
                pl.BlockSpec((tk, tn), lambda m, n, k: (k, n)),   # weights (bf16)
                pl.BlockSpec((1, tn), lambda m, n, k: (0, n)),    # folded-BN scale
                pl.BlockSpec((1, tn), lambda m, n, k: (0, n)),    # folded-BN bias
            ],
            out_specs=pl.BlockSpec((tm, tn), lambda m, n, k: (m, n)),
        ),
        compiler_params=pltpu.CompilerParams(
            dimension_semantics=("parallel", "parallel", "arbitrary")),
    )

    def run(A, Wm, scale, bias):
        if M_pad != M:
            A = jnp.pad(A, ((0, M_pad - M), (0, 0)))
        out = call(A, Wm, scale, bias)
        return out[:M] if M_pad != M else out

    return run


def _max4_kernel(a_ref, b_ref, c_ref, d_ref, o_ref):
    o_ref[...] = jnp.maximum(jnp.maximum(a_ref[...], b_ref[...]),
                             jnp.maximum(c_ref[...], d_ref[...]))


@functools.lru_cache(maxsize=None)
def _max4_call(M, C):
    """Tiled 4-way elementwise max over (M, C) arrays (lane-dense C)."""
    if M <= 1024:
        tr = _round_up(M, 8)
        M_pad = tr
    else:
        tr = 512
        M_pad = _round_up(M, tr)
    grid = (M_pad // tr,)

    def spec():
        return pl.BlockSpec((tr, C), lambda i: (i, 0))

    call = pl.pallas_call(
        _max4_kernel,
        out_shape=jax.ShapeDtypeStruct((M_pad, C), jnp.float32),
        grid_spec=pltpu.PrefetchScalarGridSpec(
            num_scalar_prefetch=0,
            grid=grid,
            in_specs=[spec() for _ in range(4)],
            out_specs=spec(),
        ),
        compiler_params=pltpu.CompilerParams(dimension_semantics=("parallel",)),
    )

    def run(a, b, c, d):
        if M_pad != M:
            pad = ((0, M_pad - M), (0, 0))
            a, b, c, d = (jnp.pad(t, pad) for t in (a, b, c, d))
        out = call(a, b, c, d)
        return out[:M] if M_pad != M else out

    return run


# ---------------------------------------------------------------------------
# Layer wrappers (called inside a single outer jax.jit)
# ---------------------------------------------------------------------------
def conv_bn_act(x, w, scale, bias, ksize, act):
    """x: (B,H,W,Cp) NHWC, channels padded to a multiple of 128.
    w: (ksize*ksize*Cp_in, Cp_out) bf16; scale/bias: (1, Cp_out) f32 (BN folded)."""
    B, H, W_, Cp = x.shape
    pad = (ksize - 1) // 2
    Ho = H + 2 * pad - ksize + 1
    Wo = W_ + 2 * pad - ksize + 1
    if ksize == 1:
        A = x.reshape(B * H * W_, Cp)
    else:
        # TODO(synk): im2col still materializes kh*kw shifted copies of the
        # activation map; a fully fused conv (kernel position as an extra
        # reduction grid axis indexing the spatially padded input) would
        # remove that HBM traffic.
        xp = jnp.pad(x, ((0, 0), (pad, pad), (pad, pad), (0, 0)))
        patches = [xp[:, i:i + Ho, j:j + Wo, :]
                   for i in range(ksize) for j in range(ksize)]
        A = jnp.stack(patches, axis=3).reshape(B * Ho * Wo, ksize * ksize * Cp)
    A = A.astype(jnp.bfloat16)                      # bf16 MXU operands
    M, K = A.shape
    N = w.shape[1]
    y = _matmul_bn_act_call(int(M), int(K), int(N), act)(A, w, scale, bias)
    return y.reshape(B, Ho, Wo, N)


def maxpool2x2(x):
    """nn.MaxPool2d(kernel_size=2) (stride 2, no padding) in NHWC."""
    B, H, W, C = x.shape
    Ho, Wo = H // 2, W // 2
    x = x[:, :2 * Ho, :2 * Wo, :]
    parts = [x[:, i::2, j::2, :].reshape(B * Ho * Wo, C)
             for i in (0, 1) for j in (0, 1)]
    out = _max4_call(int(B * Ho * Wo), int(C))(*parts)
    return out.reshape(B, Ho, Wo, C)


# ---------------------------------------------------------------------------
# Deterministic synthetic parameters (same shapes / init style as the module)
# ---------------------------------------------------------------------------
class _Keys:
    def __init__(self, key):
        self._key = key
        self._i = 0

    def __call__(self):
        self._i += 1
        return jax.random.fold_in(self._key, self._i)


def make_simple_cnn_params(key, conv_layers_spec, num_channels=3, eps=1e-5):
    """Conv bias + eval-mode BatchNorm folded into per-output-channel (scale, bias).

    Weights are stored pre-padded (channels -> multiple of 128) and pre-reshaped
    to the (K, N) matmul layout in bfloat16, so no per-forward padding is needed.
    """
    # TODO(synk): BatchNorm2d is implemented in eval mode (running stats folded
    # into scale/bias); training-mode batch statistics are not computed.
    kg = _Keys(key)
    params = []
    in_c = num_channels
    in_cp = _round_up(in_c, LANE)
    for (out_c, ksize) in conv_layers_spec:
        out_cp = _round_up(out_c, LANE)
        fan_in = in_c * ksize * ksize
        std = math.sqrt(2.0 / fan_in)
        w = std * jax.random.normal(kg(), (ksize, ksize, in_c, out_c), jnp.float32)
        conv_b = jax.random.uniform(kg(), (out_c,), minval=-0.05, maxval=0.05)
        gamma = jax.random.uniform(kg(), (out_c,), minval=0.8, maxval=1.2)
        beta = jax.random.uniform(kg(), (out_c,), minval=-0.1, maxval=0.1)
        mean = jax.random.uniform(kg(), (out_c,), minval=-0.1, maxval=0.1)
        var = jax.random.uniform(kg(), (out_c,), minval=0.8, maxval=1.2)
        scale = gamma / jnp.sqrt(var + eps)            # eval-mode BN folded
        bias = beta + scale * (conv_b - mean)          # conv bias folded in too

        w_pad = jnp.zeros((ksize, ksize, in_cp, out_cp), jnp.float32)
        w_pad = w_pad.at[:, :, :in_c, :out_c].set(w)
        params.append({
            "w": w_pad.reshape(ksize * ksize * in_cp, out_cp).astype(jnp.bfloat16),
            "scale": jnp.zeros((1, out_cp), jnp.float32).at[0, :out_c].set(scale),
            "bias": jnp.zeros((1, out_cp), jnp.float32).at[0, :out_c].set(bias),
        })
        in_c, in_cp = out_c, out_cp
    return params


# ---------------------------------------------------------------------------
# Forward pass (SimpleCNNBuilder.forward semantics)
# ---------------------------------------------------------------------------
def simple_cnn_forward(params, x_nchw, *, conv_layers_spec, pool_locations,
                       activation_fun="relu"):
    """NCHW float32 in -> NCHW float32 out (same layout as the PyTorch module)."""
    B, C, H, W = x_nchw.shape
    x = jnp.transpose(x_nchw, (0, 2, 3, 1)).astype(jnp.float32)   # -> NHWC
    Cp = _round_up(C, LANE)
    if Cp != C:
        x = jnp.pad(x, ((0, 0), (0, 0), (0, 0), (0, Cp - C)))     # pad channels once
    out_c = C
    for layer_num, ((num_kernels, ksize), p) in enumerate(
            zip(conv_layers_spec, params)):
        x = conv_bn_act(x, p["w"], p["scale"], p["bias"], ksize, activation_fun)
        if layer_num in pool_locations:
            x = maxpool2x2(x)
        out_c = num_kernels
    x = x[..., :out_c]                                            # drop channel pad
    return jnp.transpose(x, (0, 3, 1, 2))                         # -> NCHW


if __name__ == "__main__":
    key = jax.random.PRNGKey(0)
    pkey, xkey = jax.random.split(key)

    # Small configuration consistent with the module defaults:
    # conv_layers_spec = [[num_channels, kernel_size], ...], pools after layers 0 and 3.
    conv_layers_spec = ((16, 3), (16, 1), (32, 3), (32, 3), (64, 3))
    pool_locations = (0, 3)
    num_channels = 3

    params = make_simple_cnn_params(pkey, conv_layers_spec, num_channels=num_channels)
    x = jax.random.normal(xkey, (2, num_channels, 16, 16), dtype=jnp.float32)

    # One jit over the whole forward pass (im2col glue + all pallas_calls fused
    # into a single dispatch graph).
    forward = jax.jit(functools.partial(
        simple_cnn_forward,
        conv_layers_spec=conv_layers_spec,
        pool_locations=pool_locations,
        activation_fun="relu"))

    y = jax.block_until_ready(forward(params, x))
    assert y.shape == (2, 64, 4, 4), y.shape
    assert bool(jnp.all(jnp.isfinite(y)))
    print("KERNEL_OK")
</pallas_src>

<mosaic_0001>
module attributes {stable_mosaic.version = 11 : i64} {
  func.func @_mm_bn_act_kernel(%arg0: i32, %arg1: i32, %arg2: i32, %arg3: memref<256x384xbf16, #tpu.memory_space<vmem>>, %arg4: memref<384x128xbf16, #tpu.memory_space<vmem>>, %arg5: memref<1x128xf32, #tpu.memory_space<vmem>>, %arg6: memref<1x128xf32, #tpu.memory_space<vmem>>, %arg7: memref<256x128xf32, #tpu.memory_space<vmem>>) attributes {dimension_semantics = [#tpu.dimension_semantics<parallel>, #tpu.dimension_semantics<parallel>, #tpu.dimension_semantics<arbitrary>], iteration_bounds = array<i64: 2, 1, 3>, scalar_prefetch = 0 : i64, scratch_operands = 0 : i64, tpu.core_type = #tpu.core_type<tc>, window_params = [{transform_indices = @transform_0, window_bounds = array<i64: 256, 384>}, {transform_indices = @transform_1, window_bounds = array<i64: 384, 128>}, {transform_indices = @transform_2, window_bounds = array<i64: 1, 128>}, {transform_indices = @transform_3, window_bounds = array<i64: 1, 128>}, {transform_indices = @transform_4, window_bounds = array<i64: 256, 128>}]} {
    %c0_i32 = arith.constant 0 : i32
    %0 = arith.cmpi eq, %arg2, %c0_i32 : i32
    %1 = arith.extui %0 : i1 to i32
    %c0_i32_0 = arith.constant 0 : i32
    %2 = arith.cmpi ne, %1, %c0_i32_0 : i32
    scf.if %2 {
      %cst_9 = arith.constant 0.000000e+00 : f32
      %12 = vector.broadcast %cst_9 : f32 to vector<256x128xf32>
      %c0_10 = arith.constant 0 : index
      %c0_11 = arith.constant 0 : index
      %13 = vector.load %arg7[%c0_10, %c0_11] : memref<256x128xf32, #tpu.memory_space<vmem>>, vector<256x128xf32>
      tpu.vector_store %arg7[%c0_10, %c0_11], %12 {strides = array<i32>} : memref<256x128xf32, #tpu.memory_space<vmem>>, vector<256x128xf32>,
    } else {
    }
    %c0 = arith.constant 0 : index
    %c0_1 = arith.constant 0 : index
    %3 = vector.load %arg7[%c0, %c0_1] : memref<256x128xf32, #tpu.memory_space<vmem>>, vector<256x128xf32>
    %c0_2 = arith.constant 0 : index
    %c0_3 = arith.constant 0 : index
    %4 = vector.load %arg3[%c0_2, %c0_3] : memref<256x384xbf16, #tpu.memory_space<vmem>>, vector<256x384xbf16>
    %c0_4 = arith.constant 0 : index
    %c0_5 = arith.constant 0 : index
    %5 = vector.load %arg4[%c0_4, %c0_5] : memref<384x128xbf16, #tpu.memory_space<vmem>>, vector<384x128xbf16>
    %cst = arith.constant dense<0.000000e+00> : vector<256x128xf32>
    %6 = tpu.matmul %4, %5, %cst {dimension_numbers = #tpu.dot_dimension_numbers<[1], [0], [0], [1], [0, 0, 1, 1], [], []>} : vector<256x384xbf16>, vector<384x128xbf16>, vector<256x128xf32> -> vector<256x128xf32>
    %7 = arith.addf %3, %6 : vector<256x128xf32>
    %c0_6 = arith.constant 0 : index
    %c0_7 = arith.constant 0 : index
    %8 = vector.load %arg7[%c0_6, %c0_7] : memref<256x128xf32, #tpu.memory_space<vmem>>, vector<256x128xf32>
    tpu.vector_store %arg7[%c0_6, %c0_7], %7 {strides = array<i32>} : memref<256x128xf32, #tpu.memory_space<vmem>>, vector<256x128xf32>,
    %c2_i32 = arith.constant 2 : i32
    %9 = arith.cmpi eq, %arg2, %c2_i32 : i32
    %10 = arith.extui %9 : i1 to i32
    %c0_i32_8 = arith.constant 0 : i32
    %11 = arith.cmpi ne, %10, %c0_i32_8 : i32
    scf.if %11 {
      %c0_9 = arith.constant 0 : index
      %c0_10 = arith.constant 0 : index
      %12 = vector.load %arg7[%c0_9, %c0_10] : memref<256x128xf32, #tpu.memory_space<vmem>>, vector<256x128xf32>
      %c0_11 = arith.constant 0 : index
      %c0_12 = arith.constant 0 : index
      %13 = vector.load %arg5[%c0_11, %c0_12] : memref<1x128xf32, #tpu.memory_space<vmem>>, vector<1x128xf32>
      %14 = vector.broadcast %13 : vector<1x128xf32> to vector<256x128xf32>
      %15 = arith.mulf %12, %14 : vector<256x128xf32>
      %c0_13 = arith.constant 0 : index
      %c0_14 = arith.constant 0 : index
      %16 = vector.load %arg6[%c0_13, %c0_14] : memref<1x128xf32, #tpu.memory_space<vmem>>, vector<1x128xf32>
      %17 = vector.broadcast %16 : vector<1x128xf32> to vector<256x128xf32>
      %18 = arith.addf %15, %17 : vector<256x128xf32>
      %cst_15 = arith.constant 0.000000e+00 : f32
      %19 = vector.broadcast %cst_15 : f32 to vector<256x128xf32>
      %20 = arith.maximumf %18, %19 : vector<256x128xf32>
      %c0_16 = arith.constant 0 : index
      %c0_17 = arith.constant 0 : index
      %21 = vector.load %arg7[%c0_16, %c0_17] : memref<256x128xf32, #tpu.memory_space<vmem>>, vector<256x128xf32>
      tpu.vector_store %arg7[%c0_16, %c0_17], %20 {strides = array<i32>} : memref<256x128xf32, #tpu.memory_space<vmem>>, vector<256x128xf32>,
    } else {
    }
    return
  }
  func.func @transform_0(%arg0: i32, %arg1: i32, %arg2: i32) -> (i32, i32) {
    %c0_i32 = arith.constant 0 : i32
    return %arg0, %arg2 : i32, i32
  }
  func.func @transform_1(%arg0: i32, %arg1: i32, %arg2: i32) -> (i32, i32) {
    %c0_i32 = arith.constant 0 : i32
    return %arg2, %arg1 : i32, i32
  }
  func.func @transform_2(%arg0: i32, %arg1: i32, %arg2: i32) -> (i32, i32) {
    %c0_i32 = arith.constant 0 : i32
    %c0_i32_0 = arith.constant 0 : i32
    return %c0_i32, %arg1 : i32, i32
  }
  func.func @transform_3(%arg0: i32, %arg1: i32, %arg2: i32) -> (i32, i32) {
    %c0_i32 = arith.constant 0 : i32
    %c0_i32_0 = arith.constant 0 : i32
    return %c0_i32, %arg1 : i32, i32
  }
  func.func @transform_4(%arg0: i32, %arg1: i32, %arg2: i32) -> (i32, i32) {
    %c0_i32 = arith.constant 0 : i32
    return %arg0, %arg1 : i32, i32
  }
}

module attributes {stable_mosaic.version = 11 : i64} {
  func.func @_max4_kernel(%arg0: i32, %arg1: memref<128x128xf32, #tpu.memory_space<vmem>>, %arg2: memref<128x128xf32, #tpu.memory_space<vmem>>, %arg3: memref<128x128xf32, #tpu.memory_space<vmem>>, %arg4: memref<128x128xf32, #tpu.memory_space<vmem>>, %arg5: memref<128x128xf32, #tpu.memory_space<vmem>>) attributes {dimension_semantics = [#tpu.dimension_semantics<parallel>], iteration_bounds = array<i64: 1>, scalar_prefetch = 0 : i64, scratch_operands = 0 : i64, tpu.core_type = #tpu.core_type<tc>, window_params = [{transform_indices = @transform_0, window_bounds = array<i64: 128, 128>}, {transform_indices = @transform_1, window_bounds = array<i64: 128, 128>}, {transform_indices = @transform_2, window_bounds = array<i64: 128, 128>}, {transform_indices = @transform_3, window_bounds = array<i64: 128, 128>}, {transform_indices = @transform_4, window_bounds = array<i64: 128, 128>}]} {
    %c0 = arith.constant 0 : index
    %c0_0 = arith.constant 0 : index
    %0 = vector.load %arg1[%c0, %c0_0] : memref<128x128xf32, #tpu.memory_space<vmem>>, vector<128x128xf32>
    %c0_1 = arith.constant 0 : index
    %c0_2 = arith.constant 0 : index
    %1 = vector.load %arg2[%c0_1, %c0_2] : memref<128x128xf32, #tpu.memory_space<vmem>>, vector<128x128xf32>
    %2 = arith.maximumf %0, %1 : vector<128x128xf32>
    %c0_3 = arith.constant 0 : index
    %c0_4 = arith.constant 0 : index
    %3 = vector.load %arg3[%c0_3, %c0_4] : memref<128x128xf32, #tpu.memory_space<vmem>>, vector<128x128xf32>
    %c0_5 = arith.constant 0 : index
    %c0_6 = arith.constant 0 : index
    %4 = vector.load %arg4[%c0_5, %c0_6] : memref<128x128xf32, #tpu.memory_space<vmem>>, vector<128x128xf32>
    %5 = arith.maximumf %3, %4 : vector<128x128xf32>
    %6 = arith.maximumf %2, %5 : vector<128x128xf32>
    %c0_7 = arith.constant 0 : index
    %c0_8 = arith.constant 0 : index
    %7 = vector.load %arg5[%c0_7, %c0_8] : memref<128x128xf32, #tpu.memory_space<vmem>>, vector<128x128xf32>
    tpu.vector_store %arg5[%c0_7, %c0_8], %6 {strides = array<i32>} : memref<128x128xf32, #tpu.memory_space<vmem>>, vector<128x128xf32>,
    return
  }
  func.func @transform_0(%arg0: i32) -> (i32, i32) {
    %c0_i32 = arith.constant 0 : i32
    %c0_i32_0 = arith.constant 0 : i32
    return %arg0, %c0_i32 : i32, i32
  }
  func.func @transform_1(%arg0: i32) -> (i32, i32) {
    %c0_i32 = arith.constant 0 : i32
    %c0_i32_0 = arith.constant 0 : i32
    return %arg0, %c0_i32 : i32, i32
  }
  func.func @transform_2(%arg0: i32) -> (i32, i32) {
    %c0_i32 = arith.constant 0 : i32
    %c0_i32_0 = arith.constant 0 : i32
    return %arg0, %c0_i32 : i32, i32
  }
  func.func @transform_3(%arg0: i32) -> (i32, i32) {
    %c0_i32 = arith.constant 0 : i32
    %c0_i32_0 = arith.constant 0 : i32
    return %arg0, %c0_i32 : i32, i32
  }
  func.func @transform_4(%arg0: i32) -> (i32, i32) {
    %c0_i32 = arith.constant 0 : i32
    %c0_i32_0 = arith.constant 0 : i32
    return %arg0, %c0_i32 : i32, i32
  }
}

module attributes {stable_mosaic.version = 11 : i64} {
  func.func @_mm_bn_act_kernel(%arg0: i32, %arg1: i32, %arg2: i32, %arg3: memref<128x128xbf16, #tpu.memory_space<vmem>>, %arg4: memref<128x128xbf16, #tpu.memory_space<vmem>>, %arg5: memref<1x128xf32, #tpu.memory_space<vmem>>, %arg6: memref<1x128xf32, #tpu.memory_space<vmem>>, %arg7: memref<128x128xf32, #tpu.memory_space<vmem>>) attributes {dimension_semantics = [#tpu.dimension_semantics<parallel>, #tpu.dimension_semantics<parallel>, #tpu.dimension_semantics<arbitrary>], iteration_bounds = array<i64: 1, 1, 1>, scalar_prefetch = 0 : i64, scratch_operands = 0 : i64, tpu.core_type = #tpu.core_type<tc>, window_params = [{transform_indices = @transform_0, window_bounds = array<i64: 128, 128>}, {transform_indices = @transform_1, window_bounds = array<i64: 128, 128>}, {transform_indices = @transform_2, window_bounds = array<i64: 1, 128>}, {transform_indices = @transform_3, window_bounds = array<i64: 1, 128>}, {transform_indices = @transform_4, window_bounds = array<i64: 128, 128>}]} {
    %c0_i32 = arith.constant 0 : i32
    %0 = arith.cmpi eq, %arg2, %c0_i32 : i32
    %1 = arith.extui %0 : i1 to i32
    %c0_i32_0 = arith.constant 0 : i32
    %2 = arith.cmpi ne, %1, %c0_i32_0 : i32
    scf.if %2 {
      %cst_10 = arith.constant 0.000000e+00 : f32
      %12 = vector.broadcast %cst_10 : f32 to vector<128x128xf32>
      %c0_11 = arith.constant 0 : index
      %c0_12 = arith.constant 0 : index
      %13 = vector.load %arg7[%c0_11, %c0_12] : memref<128x128xf32, #tpu.memory_space<vmem>>, vector<128x128xf32>
      tpu.vector_store %arg7[%c0_11, %c0_12], %12 {strides = array<i32>} : memref<128x128xf32, #tpu.memory_space<vmem>>, vector<128x128xf32>,
    } else {
    }
    %c0 = arith.constant 0 : index
    %c0_1 = arith.constant 0 : index
    %3 = vector.load %arg7[%c0, %c0_1] : memref<128x128xf32, #tpu.memory_space<vmem>>, vector<128x128xf32>
    %c0_2 = arith.constant 0 : index
    %c0_3 = arith.constant 0 : index
    %4 = vector.load %arg3[%c0_2, %c0_3] : memref<128x128xbf16, #tpu.memory_space<vmem>>, vector<128x128xbf16>
    %c0_4 = arith.constant 0 : index
    %c0_5 = arith.constant 0 : index
    %5 = vector.load %arg4[%c0_4, %c0_5] : memref<128x128xbf16, #tpu.memory_space<vmem>>, vector<128x128xbf16>
    %cst = arith.constant dense<0.000000e+00> : vector<128x128xf32>
    %6 = tpu.matmul %4, %5, %cst {dimension_numbers = #tpu.dot_dimension_numbers<[1], [0], [0], [1], [0, 0, 1, 1], [], []>} : vector<128x128xbf16>, vector<128x128xbf16>, vector<128x128xf32> -> vector<128x128xf32>
    %7 = arith.addf %3, %6 : vector<128x128xf32>
    %c0_6 = arith.constant 0 : index
    %c0_7 = arith.constant 0 : index
    %8 = vector.load %arg7[%c0_6, %c0_7] : memref<128x128xf32, #tpu.memory_space<vmem>>, vector<128x128xf32>
    tpu.vector_store %arg7[%c0_6, %c0_7], %7 {strides = array<i32>} : memref<128x128xf32, #tpu.memory_space<vmem>>, vector<128x128xf32>,
    %c0_i32_8 = arith.constant 0 : i32
    %9 = arith.cmpi eq, %arg2, %c0_i32_8 : i32
    %10 = arith.extui %9 : i1 to i32
    %c0_i32_9 = arith.constant 0 : i32
    %11 = arith.cmpi ne, %10, %c0_i32_9 : i32
    scf.if %11 {
      %c0_10 = arith.constant 0 : index
      %c0_11 = arith.constant 0 : index
      %12 = vector.load %arg7[%c0_10, %c0_11] : memref<128x128xf32, #tpu.memory_space<vmem>>, vector<128x128xf32>
      %c0_12 = arith.constant 0 : index
      %c0_13 = arith.constant 0 : index
      %13 = vector.load %arg5[%c0_12, %c0_13] : memref<1x128xf32, #tpu.memory_space<vmem>>, vector<1x128xf32>
      %14 = vector.broadcast %13 : vector<1x128xf32> to vector<128x128xf32>
      %15 = arith.mulf %12, %14 : vector<128x128xf32>
      %c0_14 = arith.constant 0 : index
      %c0_15 = arith.constant 0 : index
      %16 = vector.load %arg6[%c0_14, %c0_15] : memref<1x128xf32, #tpu.memory_space<vmem>>, vector<1x128xf32>
      %17 = vector.broadcast %16 : vector<1x128xf32> to vector<128x128xf32>
      %18 = arith.addf %15, %17 : vector<128x128xf32>
      %cst_16 = arith.constant 0.000000e+00 : f32
      %19 = vector.broadcast %cst_16 : f32 to vector<128x128xf32>
      %20 = arith.maximumf %18, %19 : vector<128x128xf32>
      %c0_17 = arith.constant 0 : index
      %c0_18 = arith.constant 0 : index
      %21 = vector.load %arg7[%c0_17, %c0_18] : memref<128x128xf32, #tpu.memory_space<vmem>>, vector<128x128xf32>
      tpu.vector_store %arg7[%c0_17, %c0_18], %20 {strides = array<i32>} : memref<128x128xf32, #tpu.memory_space<vmem>>, vector<128x128xf32>,
    } else {
    }
    return
  }
  func.func @transform_0(%arg0: i32, %arg1: i32, %arg2: i32) -> (i32, i32) {
    %c0_i32 = arith.constant 0 : i32
    return %arg0, %arg2 : i32, i32
  }
  func.func @transform_1(%arg0: i32, %arg1: i32, %arg2: i32) -> (i32, i32) {
    %c0_i32 = arith.constant 0 : i32
    return %arg2, %arg1 : i32, i32
  }
  func.func @transform_2(%arg0: i32, %arg1: i32, %arg2: i32) -> (i32, i32) {
    %c0_i32 = arith.constant 0 : i32
    %c0_i32_0 = arith.constant 0 : i32
    return %c0_i32, %arg1 : i32, i32
  }
  func.func @transform_3(%arg0: i32, %arg1: i32, %arg2: i32) -> (i32, i32) {
    %c0_i32 = arith.constant 0 : i32
    %c0_i32_0 = arith.constant 0 : i32
    return %c0_i32, %arg1 : i32, i32
  }
  func.func @transform_4(%arg0: i32, %arg1: i32, %arg2: i32) -> (i32, i32) {
    %c0_i32 = arith.constant 0 : i32
    return %arg0, %arg1 : i32, i32
  }
}

module attributes {stable_mosaic.version = 11 : i64} {
  func.func @_mm_bn_act_kernel(%arg0: i32, %arg1: i32, %arg2: i32, %arg3: memref<128x384xbf16, #tpu.memory_space<vmem>>, %arg4: memref<384x128xbf16, #tpu.memory_space<vmem>>, %arg5: memref<1x128xf32, #tpu.memory_space<vmem>>, %arg6: memref<1x128xf32, #tpu.memory_space<vmem>>, %arg7: memref<128x128xf32, #tpu.memory_space<vmem>>) attributes {dimension_semantics = [#tpu.dimension_semantics<parallel>, #tpu.dimension_semantics<parallel>, #tpu.dimension_semantics<arbitrary>], iteration_bounds = array<i64: 1, 1, 3>, scalar_prefetch = 0 : i64, scratch_operands = 0 : i64, tpu.core_type = #tpu.core_type<tc>, window_params = [{transform_indices = @transform_0, window_bounds = array<i64: 128, 384>}, {transform_indices = @transform_1, window_bounds = array<i64: 384, 128>}, {transform_indices = @transform_2, window_bounds = array<i64: 1, 128>}, {transform_indices = @transform_3, window_bounds = array<i64: 1, 128>}, {transform_indices = @transform_4, window_bounds = array<i64: 128, 128>}]} {
    %c0_i32 = arith.constant 0 : i32
    %0 = arith.cmpi eq, %arg2, %c0_i32 : i32
    %1 = arith.extui %0 : i1 to i32
    %c0_i32_0 = arith.constant 0 : i32
    %2 = arith.cmpi ne, %1, %c0_i32_0 : i32
    scf.if %2 {
      %cst_9 = arith.constant 0.000000e+00 : f32
      %12 = vector.broadcast %cst_9 : f32 to vector<128x128xf32>
      %c0_10 = arith.constant 0 : index
      %c0_11 = arith.constant 0 : index
      %13 = vector.load %arg7[%c0_10, %c0_11] : memref<128x128xf32, #tpu.memory_space<vmem>>, vector<128x128xf32>
      tpu.vector_store %arg7[%c0_10, %c0_11], %12 {strides = array<i32>} : memref<128x128xf32, #tpu.memory_space<vmem>>, vector<128x128xf32>,
    } else {
    }
    %c0 = arith.constant 0 : index
    %c0_1 = arith.constant 0 : index
    %3 = vector.load %arg7[%c0, %c0_1] : memref<128x128xf32, #tpu.memory_space<vmem>>, vector<128x128xf32>
    %c0_2 = arith.constant 0 : index
    %c0_3 = arith.constant 0 : index
    %4 = vector.load %arg3[%c0_2, %c0_3] : memref<128x384xbf16, #tpu.memory_space<vmem>>, vector<128x384xbf16>
    %c0_4 = arith.constant 0 : index
    %c0_5 = arith.constant 0 : index
    %5 = vector.load %arg4[%c0_4, %c0_5] : memref<384x128xbf16, #tpu.memory_space<vmem>>, vector<384x128xbf16>
    %cst = arith.constant dense<0.000000e+00> : vector<128x128xf32>
    %6 = tpu.matmul %4, %5, %cst {dimension_numbers = #tpu.dot_dimension_numbers<[1], [0], [0], [1], [0, 0, 1, 1], [], []>} : vector<128x384xbf16>, vector<384x128xbf16>, vector<128x128xf32> -> vector<128x128xf32>
    %7 = arith.addf %3, %6 : vector<128x128xf32>
    %c0_6 = arith.constant 0 : index
    %c0_7 = arith.constant 0 : index
    %8 = vector.load %arg7[%c0_6, %c0_7] : memref<128x128xf32, #tpu.memory_space<vmem>>, vector<128x128xf32>
    tpu.vector_store %arg7[%c0_6, %c0_7], %7 {strides = array<i32>} : memref<128x128xf32, #tpu.memory_space<vmem>>, vector<128x128xf32>,
    %c2_i32 = arith.constant 2 : i32
    %9 = arith.cmpi eq, %arg2, %c2_i32 : i32
    %10 = arith.extui %9 : i1 to i32
    %c0_i32_8 = arith.constant 0 : i32
    %11 = arith.cmpi ne, %10, %c0_i32_8 : i32
    scf.if %11 {
      %c0_9 = arith.constant 0 : index
      %c0_10 = arith.constant 0 : index
      %12 = vector.load %arg7[%c0_9, %c0_10] : memref<128x128xf32, #tpu.memory_space<vmem>>, vector<128x128xf32>
      %c0_11 = arith.constant 0 : index
      %c0_12 = arith.constant 0 : index
      %13 = vector.load %arg5[%c0_11, %c0_12] : memref<1x128xf32, #tpu.memory_space<vmem>>, vector<1x128xf32>
      %14 = vector.broadcast %13 : vector<1x128xf32> to vector<128x128xf32>
      %15 = arith.mulf %12, %14 : vector<128x128xf32>
      %c0_13 = arith.constant 0 : index
      %c0_14 = arith.constant 0 : index
      %16 = vector.load %arg6[%c0_13, %c0_14] : memref<1x128xf32, #tpu.memory_space<vmem>>, vector<1x128xf32>
      %17 = vector.broadcast %16 : vector<1x128xf32> to vector<128x128xf32>
      %18 = arith.addf %15, %17 : vector<128x128xf32>
      %cst_15 = arith.constant 0.000000e+00 : f32
      %19 = vector.broadcast %cst_15 : f32 to vector<128x128xf32>
      %20 = arith.maximumf %18, %19 : vector<128x128xf32>
      %c0_16 = arith.constant 0 : index
      %c0_17 = arith.constant 0 : index
      %21 = vector.load %arg7[%c0_16, %c0_17] : memref<128x128xf32, #tpu.memory_space<vmem>>, vector<128x128xf32>
      tpu.vector_store %arg7[%c0_16, %c0_17], %20 {strides = array<i32>} : memref<128x128xf32, #tpu.memory_space<vmem>>, vector<128x128xf32>,
    } else {
    }
    return
  }
  func.func @transform_0(%arg0: i32, %arg1: i32, %arg2: i32) -> (i32, i32) {
    %c0_i32 = arith.constant 0 : i32
    return %arg0, %arg2 : i32, i32
  }
  func.func @transform_1(%arg0: i32, %arg1: i32, %arg2: i32) -> (i32, i32) {
    %c0_i32 = arith.constant 0 : i32
    return %arg2, %arg1 : i32, i32
  }
  func.func @transform_2(%arg0: i32, %arg1: i32, %arg2: i32) -> (i32, i32) {
    %c0_i32 = arith.constant 0 : i32
    %c0_i32_0 = arith.constant 0 : i32
    return %c0_i32, %arg1 : i32, i32
  }
  func.func @transform_3(%arg0: i32, %arg1: i32, %arg2: i32) -> (i32, i32) {
    %c0_i32 = arith.constant 0 : i32
    %c0_i32_0 = arith.constant 0 : i32
    return %c0_i32, %arg1 : i32, i32
  }
  func.func @transform_4(%arg0: i32, %arg1: i32, %arg2: i32) -> (i32, i32) {
    %c0_i32 = arith.constant 0 : i32
    return %arg0, %arg1 : i32, i32
  }
}

module attributes {stable_mosaic.version = 11 : i64} {
  func.func @_max4_kernel(%arg0: i32, %arg1: memref<32x128xf32, #tpu.memory_space<vmem>>, %arg2: memref<32x128xf32, #tpu.memory_space<vmem>>, %arg3: memref<32x128xf32, #tpu.memory_space<vmem>>, %arg4: memref<32x128xf32, #tpu.memory_space<vmem>>, %arg5: memref<32x128xf32, #tpu.memory_space<vmem>>) attributes {dimension_semantics = [#tpu.dimension_semantics<parallel>], iteration_bounds = array<i64: 1>, scalar_prefetch = 0 : i64, scratch_operands = 0 : i64, tpu.core_type = #tpu.core_type<tc>, window_params = [{transform_indices = @transform_0, window_bounds = array<i64: 32, 128>}, {transform_indices = @transform_1, window_bounds = array<i64: 32, 128>}, {transform_indices = @transform_2, window_bounds = array<i64: 32, 128>}, {transform_indices = @transform_3, window_bounds = array<i64: 32, 128>}, {transform_indices = @transform_4, window_bounds = array<i64: 32, 128>}]} {
    %c0 = arith.constant 0 : index
    %c0_0 = arith.constant 0 : index
    %0 = vector.load %arg1[%c0, %c0_0] : memref<32x128xf32, #tpu.memory_space<vmem>>, vector<32x128xf32>
    %c0_1 = arith.constant 0 : index
    %c0_2 = arith.constant 0 : index
    %1 = vector.load %arg2[%c0_1, %c0_2] : memref<32x128xf32, #tpu.memory_space<vmem>>, vector<32x128xf32>
    %2 = arith.maximumf %0, %1 : vector<32x128xf32>
    %c0_3 = arith.constant 0 : index
    %c0_4 = arith.constant 0 : index
    %3 = vector.load %arg3[%c0_3, %c0_4] : memref<32x128xf32, #tpu.memory_space<vmem>>, vector<32x128xf32>
    %c0_5 = arith.constant 0 : index
    %c0_6 = arith.constant 0 : index
    %4 = vector.load %arg4[%c0_5, %c0_6] : memref<32x128xf32, #tpu.memory_space<vmem>>, vector<32x128xf32>
    %5 = arith.maximumf %3, %4 : vector<32x128xf32>
    %6 = arith.maximumf %2, %5 : vector<32x128xf32>
    %c0_7 = arith.constant 0 : index
    %c0_8 = arith.constant 0 : index
    %7 = vector.load %arg5[%c0_7, %c0_8] : memref<32x128xf32, #tpu.memory_space<vmem>>, vector<32x128xf32>
    tpu.vector_store %arg5[%c0_7, %c0_8], %6 {strides = array<i32>} : memref<32x128xf32, #tpu.memory_space<vmem>>, vector<32x128xf32>,
    return
  }
  func.func @transform_0(%arg0: i32) -> (i32, i32) {
    %c0_i32 = arith.constant 0 : i32
    %c0_i32_0 = arith.constant 0 : i32
    return %arg0, %c0_i32 : i32, i32
  }
  func.func @transform_1(%arg0: i32) -> (i32, i32) {
    %c0_i32 = arith.constant 0 : i32
    %c0_i32_0 = arith.constant 0 : i32
    return %arg0, %c0_i32 : i32, i32
  }
  func.func @transform_2(%arg0: i32) -> (i32, i32) {
    %c0_i32 = arith.constant 0 : i32
    %c0_i32_0 = arith.constant 0 : i32
    return %arg0, %c0_i32 : i32, i32
  }
  func.func @transform_3(%arg0: i32) -> (i32, i32) {
    %c0_i32 = arith.constant 0 : i32
    %c0_i32_0 = arith.constant 0 : i32
    return %arg0, %c0_i32 : i32, i32
  }
  func.func @transform_4(%arg0: i32) -> (i32, i32) {
    %c0_i32 = arith.constant 0 : i32
    %c0_i32_0 = arith.constant 0 : i32
    return %arg0, %c0_i32 : i32, i32
  }
}

module attributes {stable_mosaic.version = 11 : i64} {
  func.func @_mm_bn_act_kernel(%arg0: i32, %arg1: i32, %arg2: i32, %arg3: memref<32x384xbf16, #tpu.memory_space<vmem>>, %arg4: memref<384x128xbf16, #tpu.memory_space<vmem>>, %arg5: memref<1x128xf32, #tpu.memory_space<vmem>>, %arg6: memref<1x128xf32, #tpu.memory_space<vmem>>, %arg7: memref<32x128xf32, #tpu.memory_space<vmem>>) attributes {dimension_semantics = [#tpu.dimension_semantics<parallel>, #tpu.dimension_semantics<parallel>, #tpu.dimension_semantics<arbitrary>], iteration_bounds = array<i64: 1, 1, 3>, scalar_prefetch = 0 : i64, scratch_operands = 0 : i64, tpu.core_type = #tpu.core_type<tc>, window_params = [{transform_indices = @transform_0, window_bounds = array<i64: 32, 384>}, {transform_indices = @transform_1, window_bounds = array<i64: 384, 128>}, {transform_indices = @transform_2, window_bounds = array<i64: 1, 128>}, {transform_indices = @transform_3, window_bounds = array<i64: 1, 128>}, {transform_indices = @transform_4, window_bounds = array<i64: 32, 128>}]} {
    %c0_i32 = arith.constant 0 : i32
    %0 = arith.cmpi eq, %arg2, %c0_i32 : i32
    %1 = arith.extui %0 : i1 to i32
    %c0_i32_0 = arith.constant 0 : i32
    %2 = arith.cmpi ne, %1, %c0_i32_0 : i32
    scf.if %2 {
      %cst_9 = arith.constant 0.000000e+00 : f32
      %12 = vector.broadcast %cst_9 : f32 to vector<32x128xf32>
      %c0_10 = arith.constant 0 : index
      %c0_11 = arith.constant 0 : index
      %13 = vector.load %arg7[%c0_10, %c0_11] : memref<32x128xf32, #tpu.memory_space<vmem>>, vector<32x128xf32>
      tpu.vector_store %arg7[%c0_10, %c0_11], %12 {strides = array<i32>} : memref<32x128xf32, #tpu.memory_space<vmem>>, vector<32x128xf32>,
    } else {
    }
    %c0 = arith.constant 0 : index
    %c0_1 = arith.constant 0 : index
    %3 = vector.load %arg7[%c0, %c0_1] : memref<32x128xf32, #tpu.memory_space<vmem>>, vector<32x128xf32>
    %c0_2 = arith.constant 0 : index
    %c0_3 = arith.constant 0 : index
    %4 = vector.load %arg3[%c0_2, %c0_3] : memref<32x384xbf16, #tpu.memory_space<vmem>>, vector<32x384xbf16>
    %c0_4 = arith.constant 0 : index
    %c0_5 = arith.constant 0 : index
    %5 = vector.load %arg4[%c0_4, %c0_5] : memref<384x128xbf16, #tpu.memory_space<vmem>>, vector<384x128xbf16>
    %cst = arith.constant dense<0.000000e+00> : vector<32x128xf32>
    %6 = tpu.matmul %4, %5, %cst {dimension_numbers = #tpu.dot_dimension_numbers<[1], [0], [0], [1], [0, 0, 1, 1], [], []>} : vector<32x384xbf16>, vector<384x128xbf16>, vector<32x128xf32> -> vector<32x128xf32>
    %7 = arith.addf %3, %6 : vector<32x128xf32>
    %c0_6 = arith.constant 0 : index
    %c0_7 = arith.constant 0 : index
    %8 = vector.load %arg7[%c0_6, %c0_7] : memref<32x128xf32, #tpu.memory_space<vmem>>, vector<32x128xf32>
    tpu.vector_store %arg7[%c0_6, %c0_7], %7 {strides = array<i32>} : memref<32x128xf32, #tpu.memory_space<vmem>>, vector<32x128xf32>,
    %c2_i32 = arith.constant 2 : i32
    %9 = arith.cmpi eq, %arg2, %c2_i32 : i32
    %10 = arith.extui %9 : i1 to i32
    %c0_i32_8 = arith.constant 0 : i32
    %11 = arith.cmpi ne, %10, %c0_i32_8 : i32
    scf.if %11 {
      %c0_9 = arith.constant 0 : index
      %c0_10 = arith.constant 0 : index
      %12 = vector.load %arg7[%c0_9, %c0_10] : memref<32x128xf32, #tpu.memory_space<vmem>>, vector<32x128xf32>
      %c0_11 = arith.constant 0 : index
      %c0_12 = arith.constant 0 : index
      %13 = vector.load %arg5[%c0_11, %c0_12] : memref<1x128xf32, #tpu.memory_space<vmem>>, vector<1x128xf32>
      %14 = vector.broadcast %13 : vector<1x128xf32> to vector<32x128xf32>
      %15 = arith.mulf %12, %14 : vector<32x128xf32>
      %c0_13 = arith.constant 0 : index
      %c0_14 = arith.constant 0 : index
      %16 = vector.load %arg6[%c0_13, %c0_14] : memref<1x128xf32, #tpu.memory_space<vmem>>, vector<1x128xf32>
      %17 = vector.broadcast %16 : vector<1x128xf32> to vector<32x128xf32>
      %18 = arith.addf %15, %17 : vector<32x128xf32>
      %cst_15 = arith.constant 0.000000e+00 : f32
      %19 = vector.broadcast %cst_15 : f32 to vector<32x128xf32>
      %20 = arith.maximumf %18, %19 : vector<32x128xf32>
      %c0_16 = arith.constant 0 : index
      %c0_17 = arith.constant 0 : index
      %21 = vector.load %arg7[%c0_16, %c0_17] : memref<32x128xf32, #tpu.memory_space<vmem>>, vector<32x128xf32>
      tpu.vector_store %arg7[%c0_16, %c0_17], %20 {strides = array<i32>} : memref<32x128xf32, #tpu.memory_space<vmem>>, vector<32x128xf32>,
    } else {
    }
    return
  }
  func.func @transform_0(%arg0: i32, %arg1: i32, %arg2: i32) -> (i32, i32) {
    %c0_i32 = arith.constant 0 : i32
    return %arg0, %arg2 : i32, i32
  }
  func.func @transform_1(%arg0: i32, %arg1: i32, %arg2: i32) -> (i32, i32) {
    %c0_i32 = arith.constant 0 : i32
    return %arg2, %arg1 : i32, i32
  }
  func.func @transform_2(%arg0: i32, %arg1: i32, %arg2: i32) -> (i32, i32) {
    %c0_i32 = arith.constant 0 : i32
    %c0_i32_0 = arith.constant 0 : i32
    return %c0_i32, %arg1 : i32, i32
  }
  func.func @transform_3(%arg0: i32, %arg1: i32, %arg2: i32) -> (i32, i32) {
    %c0_i32 = arith.constant 0 : i32
    %c0_i32_0 = arith.constant 0 : i32
    return %c0_i32, %arg1 : i32, i32
  }
  func.func @transform_4(%arg0: i32, %arg1: i32, %arg2: i32) -> (i32, i32) {
    %c0_i32 = arith.constant 0 : i32
    return %arg0, %arg1 : i32, i32
  }
}

</mosaic_0001>

<llo_original>
// kernel: simple_cnn_forward.7
$region0: #{simple_cnn_forward.7}
  #allocation0 [shape = 'u32[]', space=smem, size = 0x4, offset = 0x4, fixed_abs, tag = 'smem constant byte address 0x4 - core index']
  #allocation1 [shape = 'u32[144,128]{1,0:T(1,128)}', space=vmem, size = 0x12000, scoped, tag = 'internal scratch']
  %s0 = inlined_call_operand.vmem [shape: bf16[512,1152], index: 0, kind: input, shape index: {}]
  %s1 = inlined_call_operand.vmem [shape: bf16[1152,128], index: 1, kind: input, shape index: {}]
  %s2 = inlined_call_operand.vmem [shape: f32[1,128], index: 2, kind: input, shape index: {}]
  %s3 = inlined_call_operand.vmem [shape: f32[1,128], index: 3, kind: input, shape index: {}]
  %s4 = inlined_call_operand.vmem [shape: f32[512,128], index: 4, kind: output, shape index: {}]
  %s5 = sld [smem:[#allocation0]]
  $region83: #{simple_cnn_forward.7} parent=0
    _
  %s7 = ssub.s32 1, %s5
  %s8 = scalar_select 0, %s7, %s5
  $region1: #{simple_cnn_forward.7} parent=0
    #allocation2 [shape = 'u8[393216]{0}', space=vmem, size = 0x60000, scoped, tag = 'input window, operand 0']
    loop: start=0, step=1, limit=8
    $region2: #{simple_cnn_forward.7} parent=1 // loop_pre_header
      _
    $region3: #{simple_cnn_forward.7} parent=1 // loop_header
      %s10 = sphi 0, %s14
      %p11 = scmp.ge.s32.totalorder %s10, 8
      %s17 = sphi 0, %s36
      %s18 = sphi 0, %s32
      %s19 = sphi 0, %s28
      %s20 = sphi 0, %s17
      %s21 = sphi 0, %s18
      %s22 = sphi 0, %s19
      %s23 = sphi 0, %s20
      %s24 = sphi 0, %s21
      %s25 = sphi 0, %s22
      %s41 = sphi 0, %s43
      %s44 = sphi 0, %s41
      %s45 = sphi 0, %s44
      %s61 = sphi 0, %s45
      %s69 = sphi 0, %s71
      %s72 = sphi 0, %s69
      %s73 = sphi 0, %s72
      %s89 = sphi 0, %s73
      %s95 = sphi 0, %s97
      %s98 = sphi 0, %s95
      %s99 = sphi 0, %s98
      %s115 = sphi 0, %s99
      %s121 = sphi 0, %s123
      %s124 = sphi 0, %s121
      %s125 = sphi 0, %s124
      %s141 = sphi 0, %s125
      %s149 = sphi 0, %s151
      %s152 = sphi 0, %s149
      %s153 = sphi 0, %s152
      %s169 = sphi 0, %s153
    $region4: #{simple_cnn_forward.7} parent=1 // loop_header_branch
      %13 = sbr.rel (%p11) target = $region8
    $region5: #{simple_cnn_forward.7} parent=1 // loop_body
      %s15 = ssub.s32 %s10, 1
      %s16 = ssub.s32 %s10, 2
      %s26 = sadd.s32 1, %s19
      %p27 = scmp.ge.s32.totalorder %s26, 3
      %s28 = scalar_select %p27, 0, %s26
      %s29 = sadd.s32 1, %s18
      %s30 = scalar_select %p27, %s29, %s18
      %p31 = scmp.ge.s32.totalorder %s30, 1
      %s32 = scalar_select %p31, 0, %s30
      %s33 = sadd.s32 1, %s17
      %s34 = scalar_select %p31, %s33, %s17
      %p35 = scmp.ge.s32.totalorder %s34, 2
      %s36 = scalar_select %p35, 0, %s34
      %s37 = ssub.s32 %s17, %s36
      %s38 = ssub.s32 %s19, %s28
      %s39 = sor.u32 %s37, %s38
      %p40 = scmp.eq.s32.totalorder %s39, 0
      %s42 = sadd.s32 %s41, 1
      %s43 = scalar_select %p40, %s41, %s42
      %p46 = pneg %p40
      %p47 = scmp.eq.s32.totalorder %s10, 5
      %p48 = por %p46, %p47
      %p49 = scmp.ne.s32.totalorder %s41, %s44
      %p50 = scmp.eq.s32.totalorder %s10, 0
      %p51 = por %p49, %p50
      %p52 = scmp.ne.s32.totalorder %s41, %s44
      %p53 = scmp.eq.s32.totalorder %s15, 5
      %p54 = por %p52, %p53
      %p55 = scmp.ne.s32.totalorder %s44, %s45
      %p56 = scmp.eq.s32.totalorder %s15, 0
      %p57 = por %p55, %p56
      %p58 = scmp.ne.s32.totalorder %s44, %s45
      %p59 = scmp.eq.s32.totalorder %s16, 5
      %p60 = por %p58, %p59
      %p62 = scmp.ne.s32.totalorder %s45, %s61
      %p63 = scmp.eq.s32.totalorder %s16, 0
      %p64 = por %p62, %p63
      %s65 = ssub.s32 %s19, %s28
      %s66 = ssub.s32 %s18, %s32
      %s67 = sor.u32 %s65, %s66
      %p68 = scmp.eq.s32.totalorder %s67, 0
      %s70 = sadd.s32 %s69, 1
      %s71 = scalar_select %p68, %s69, %s70
      %p74 = pneg %p68
      %p75 = scmp.eq.s32.totalorder %s10, 5
      %p76 = por %p74, %p75
      %p77 = scmp.ne.s32.totalorder %s69, %s72
      %p78 = scmp.eq.s32.totalorder %s10, 0
      %p79 = por %p77, %p78
      %p80 = scmp.ne.s32.totalorder %s69, %s72
      %p81 = scmp.eq.s32.totalorder %s15, 5
      %p82 = por %p80, %p81
      %p83 = scmp.ne.s32.totalorder %s72, %s73
      %p84 = scmp.eq.s32.totalorder %s15, 0
      %p85 = por %p83, %p84
      %p86 = scmp.ne.s32.totalorder %s72, %s73
      %p87 = scmp.eq.s32.totalorder %s16, 5
      %p88 = por %p86, %p87
      %p90 = scmp.ne.s32.totalorder %s73, %s89
      %p91 = scmp.eq.s32.totalorder %s16, 0
      %p92 = por %p90, %p91
      %s93 = ssub.s32 %s18, %s32
      %p94 = scmp.eq.s32.totalorder %s93, 0
      %s96 = sadd.s32 %s95, 1
      %s97 = scalar_select %p94, %s95, %s96
      %p100 = pneg %p94
      %p101 = scmp.eq.s32.totalorder %s10, 5
      %p102 = por %p100, %p101
      %p103 = scmp.ne.s32.totalorder %s95, %s98
      %p104 = scmp.eq.s32.totalorder %s10, 0
      %p105 = por %p103, %p104
      %p106 = scmp.ne.s32.totalorder %s95, %s98
      %p107 = scmp.eq.s32.totalorder %s15, 5
      %p108 = por %p106, %p107
      %p109 = scmp.ne.s32.totalorder %s98, %s99
      %p110 = scmp.eq.s32.totalorder %s15, 0
      %p111 = por %p109, %p110
      %p112 = scmp.ne.s32.totalorder %s98, %s99
      %p113 = scmp.eq.s32.totalorder %s16, 5
      %p114 = por %p112, %p113
      %p116 = scmp.ne.s32.totalorder %s99, %s115
      %p117 = scmp.eq.s32.totalorder %s16, 0
      %p118 = por %p116, %p117
      %s119 = ssub.s32 %s18, %s32
      %p120 = scmp.eq.s32.totalorder %s119, 0
      %s122 = sadd.s32 %s121, 1
      %s123 = scalar_select %p120, %s121, %s122
      %p126 = pneg %p120
      %p127 = scmp.eq.s32.totalorder %s10, 5
      %p128 = por %p126, %p127
      %p129 = scmp.ne.s32.totalorder %s121, %s124
      %p130 = scmp.eq.s32.totalorder %s10, 0
      %p131 = por %p129, %p130
      %p132 = scmp.ne.s32.totalorder %s121, %s124
      %p133 = scmp.eq.s32.totalorder %s15, 5
      %p134 = por %p132, %p133
      %p135 = scmp.ne.s32.totalorder %s124, %s125
      %p136 = scmp.eq.s32.totalorder %s15, 0
      %p137 = por %p135, %p136
      %p138 = scmp.ne.s32.totalorder %s124, %s125
      %p139 = scmp.eq.s32.totalorder %s16, 5
      %p140 = por %p138, %p139
      %p142 = scmp.ne.s32.totalorder %s125, %s141
      %p143 = scmp.eq.s32.totalorder %s16, 0
      %p144 = por %p142, %p143
      %s145 = ssub.s32 %s17, %s36
      %s146 = ssub.s32 %s18, %s32
      %s147 = sor.u32 %s145, %s146
      %p148 = scmp.eq.s32.totalorder %s147, 0
      %s150 = sadd.s32 %s149, 1
      %s151 = scalar_select %p148, %s149, %s150
      %p154 = pneg %p148
      %p155 = scmp.eq.s32.totalorder %s10, 5
      %p156 = por %p154, %p155
      %p157 = scmp.ne.s32.totalorder %s149, %s152
      %p158 = scmp.eq.s32.totalorder %s10, 0
      %p159 = por %p157, %p158
      %p160 = scmp.ne.s32.totalorder %s149, %s152
      %p161 = scmp.eq.s32.totalorder %s15, 5
      %p162 = por %p160, %p161
      %p163 = scmp.ne.s32.totalorder %s152, %s153
      %p164 = scmp.eq.s32.totalorder %s15, 0
      %p165 = por %p163, %p164
      %p166 = scmp.ne.s32.totalorder %s152, %s153
      %p167 = scmp.eq.s32.totalorder %s16, 5
      %p168 = por %p166, %p167
      %p170 = scmp.ne.s32.totalorder %s153, %s169
      %p171 = scmp.eq.s32.totalorder %s16, 0
      %p172 = por %p170, %p171
      %p173 = scmp.le.s32.totalorder 1, %s10
      %p174 = scmp.lt.s32.totalorder %s10, 7
      %p175 = pnand %p173, %p174
      %p176 = pneg %p175
      // Predicated region
      $region9: #{simple_cnn_forward.7} parent=5 // pred_check
        _
      $region10: #{simple_cnn_forward.7} parent=5 // pred_check_branch
        %178 = sbr.rel (%p175) target = $region12
      $region11: #{simple_cnn_forward.7} parent=5 // pred_region
        %s179 = ssub.s32 %s10, 1
        // Predicated region
        $region13: #{simple_cnn_forward.7} parent=11 // pred_check
          %p180 = pneg %p111
        $region14: #{simple_cnn_forward.7} parent=11 // pred_check_branch
          %182 = sbr.rel (%p180) target = $region16
        $region15: #{simple_cnn_forward.7} parent=11 // pred_region
          %p183 = scmp.lt.s32.totalorder %s21, 0
          %s184 = scalar_select %p183, %s21, 0
          %s185 = scalar_lea.vmem %s2, %s184
        $region16: #{simple_cnn_forward.7} parent=11 // pred_fallthru
          _
        // Predicated region
        $region17: #{simple_cnn_forward.7} parent=11 // pred_check
          %p186 = pneg %p137
        $region18: #{simple_cnn_forward.7} parent=11 // pred_check_branch
          %188 = sbr.rel (%p186) target = $region20
        $region19: #{simple_cnn_forward.7} parent=11 // pred_region
          %p189 = scmp.lt.s32.totalorder %s21, 0
          %s190 = scalar_select %p189, %s21, 0
          %s191 = scalar_lea.vmem %s3, %s190
        $region20: #{simple_cnn_forward.7} parent=11 // pred_fallthru
          _
      $region12: #{simple_cnn_forward.7} parent=5 // pred_fallthru
        _
      %p192 = scmp.lt.s32.totalorder %s10, 6
      // Predicated region
      $region21: #{simple_cnn_forward.7} parent=5 // pred_check
        %p193 = pneg %p192
      $region22: #{simple_cnn_forward.7} parent=5 // pred_check_branch
        %195 = sbr.rel (%p193) target = $region24
      $region23: #{simple_cnn_forward.7} parent=5 // pred_region
        // Predicated region
        $region25: #{simple_cnn_forward.7} parent=23 // pred_check
          %p196 = pneg %p51
        $region26: #{simple_cnn_forward.7} parent=23 // pred_check_branch
          %198 = sbr.rel (%p196) target = $region28
        $region27: #{simple_cnn_forward.7} parent=23 // pred_region
          %s199 = sand.u32 %s41, 1
          %s200 = sand.u32 %s41, 1
          %s201 = smul.addr %s200, 384
          %s202 = scalar_lea.vmem [#allocation2], %s201
          %s203 = smul.u32 32, %s17
          %s204 = smul.u32 3, %s19
          %s205 = smul.addr %s203, 9
          %s206 = sadd.s32 %s204, %s205
          %s207 = smul.addr %s206, 4
          %s208 = scalar_lea.vmem %s0, %s207
          // Predicated region
          $region29: #{simple_cnn_forward.7} parent=27 // pred_check
            _
          $region30: #{simple_cnn_forward.7} parent=27 // pred_check_branch
            %210 = sbr.rel (0) target = $region32
          $region31: #{simple_cnn_forward.7} parent=27 // pred_region
            // Predicated region
            $region33: #{simple_cnn_forward.7} parent=31 // pred_check
              _
            $region34: #{simple_cnn_forward.7} parent=31 // pred_check_branch
              %212 = sbr.rel (0) target = $region36
            $region35: #{simple_cnn_forward.7} parent=31 // pred_region
              %s213 = scalar_lea.vmem %s208, 8
              %s214 = scalar_lea.vmem %s202, 8 [#allocation2]
              loop: start=0, step=1, limit=1
              $region37: #{simple_cnn_forward.7} parent=35 // loop_pre_header
                _
              $region38: #{simple_cnn_forward.7} parent=35 // loop_header
                %s216 = sphi 0, %s220
                %p217 = scmp.ge.s32.totalorder %s216, 1
                %s221 = sphi %s208, %s208
                %s222 = sphi %s202, %s202
              $region39: #{simple_cnn_forward.7} parent=35 // loop_header_branch
                %219 = sbr.rel (%p217) target = $region43
              $region40: #{simple_cnn_forward.7} parent=35 // loop_body
                %v223 = vld [vmem:[%s221] sm:$0xff]
                %224 = vst [vmem:[%s222] sm:$0xff] %v223
                %v225 = vld [vmem:[%s221 + $0x24] sm:$0xff]
                %226 = vst [vmem:[%s222 + $0xc] sm:$0xff] %v225
                %v227 = vld [vmem:[%s221 + $0x48] sm:$0xff]
                %228 = vst [vmem:[%s222 + $0x18] sm:$0xff] %v227
                %v229 = vld [vmem:[%s221 + $0x6c] sm:$0xff]
                %230 = vst [vmem:[%s222 + $0x24] sm:$0xff] %v229
                %v231 = vld [vmem:[%s221 + $0x90] sm:$0xff]
                %232 = vst [vmem:[%s222 + $0x30] sm:$0xff] %v231
                %v233 = vld [vmem:[%s221 + $0xb4] sm:$0xff]
                %234 = vst [vmem:[%s222 + $0x3c] sm:$0xff] %v233
                %v235 = vld [vmem:[%s221 + $0xd8] sm:$0xff]
                %236 = vst [vmem:[%s222 + $0x48] sm:$0xff] %v235
                %v237 = vld [vmem:[%s221 + $0xfc] sm:$0xff]
                %238 = vst [vmem:[%s222 + $0x54] sm:$0xff] %v237
                %v239 = vld [vmem:[%s221 + $0x120] sm:$0xff]
                %240 = vst [vmem:[%s222 + $0x60] sm:$0xff] %v239
                %v241 = vld [vmem:[%s221 + $0x144] sm:$0xff]
                %242 = vst [vmem:[%s222 + $0x6c] sm:$0xff] %v241
                %v243 = vld [vmem:[%s221 + $0x168] sm:$0xff]
                %244 = vst [vmem:[%s222 + $0x78] sm:$0xff] %v243
                %v245 = vld [vmem:[%s221 + $0x18c] sm:$0xff]
                %246 = vst [vmem:[%s222 + $0x84] sm:$0xff] %v245
                %v247 = vld [vmem:[%s221 + $0x1b0] sm:$0xff]
                %248 = vst [vmem:[%s222 + $0x90] sm:$0xff] %v247
                %v249 = vld [vmem:[%s221 + $0x1d4] sm:$0xff]
                %250 = vst [vmem:[%s222 + $0x9c] sm:$0xff] %v249
                %v251 = vld [vmem:[%s221 + $0x1f8] sm:$0xff]
                %252 = vst [vmem:[%s222 + $0xa8] sm:$0xff] %v251
                %v253 = vld [vmem:[%s221 + $0x21c] sm:$0xff]
                %254 = vst [vmem:[%s222 + $0xb4] sm:$0xff] %v253
                %v255 = vld [vmem:[%s221 + $0x240] sm:$0xff]
                %256 = vst [vmem:[%s222 + $0xc0] sm:$0xff] %v255
                %v257 = vld [vmem:[%s221 + $0x264] sm:$0xff]
                %258 = vst [vmem:[%s222 + $0xcc] sm:$0xff] %v257
                %v259 = vld [vmem:[%s221 + $0x288] sm:$0xff]
                %260 = vst [vmem:[%s222 + $0xd8] sm:$0xff] %v259
                %v261 = vld [vmem:[%s221 + $0x2ac] sm:$0xff]
                %262 = vst [vmem:[%s222 + $0xe4] sm:$0xff] %v261
                %v263 = vld [vmem:[%s221 + $0x2d0] sm:$0xff]
                %264 = vst [vmem:[%s222 + $0xf0] sm:$0xff] %v263
                %v265 = vld [vmem:[%s221 + $0x2f4] sm:$0xff]
                %266 = vst [vmem:[%s222 + $0xfc] sm:$0xff] %v265
                %v267 = vld [vmem:[%s221 + $0x318] sm:$0xff]
                %268 = vst [vmem:[%s222 + $0x108] sm:$0xff] %v267
                %v269 = vld [vmem:[%s221 + $0x33c] sm:$0xff]
                %270 = vst [vmem:[%s222 + $0x114] sm:$0xff] %v269
                %v271 = vld [vmem:[%s221 + $0x360] sm:$0xff]
                %272 = vst [vmem:[%s222 + $0x120] sm:$0xff] %v271
                %v273 = vld [vmem:[%s221 + $0x384] sm:$0xff]
                %274 = vst [vmem:[%s222 + $0x12c] sm:$0xff] %v273
                %v275 = vld [vmem:[%s221 + $0x3a8] sm:$0xff]
                %276 = vst [vmem:[%s222 + $0x138] sm:$0xff] %v275
                %v277 = vld [vmem:[%s221 + $0x3cc] sm:$0xff]
                %278 = vst [vmem:[%s222 + $0x144] sm:$0xff] %v277
                %v279 = vld [vmem:[%s221 + $0x3f0] sm:$0xff]
                %280 = vst [vmem:[%s222 + $0x150] sm:$0xff] %v279
                %v281 = vld [vmem:[%s221 + $0x414] sm:$0xff]
                %282 = vst [vmem:[%s222 + $0x15c] sm:$0xff] %v281
                %v283 = vld [vmem:[%s221 + $0x438] sm:$0xff]
                %284 = vst [vmem:[%s222 + $0x168] sm:$0xff] %v283
                %v285 = vld [vmem:[%s221 + $0x45c] sm:$0xff]
                %286 = vst [vmem:[%s222 + $0x174] sm:$0xff] %v285
              $region41: #{simple_cnn_forward.7} parent=35 // loop_footer
                %s220 = sadd.s32 1, %s216
              $region42: #{simple_cnn_forward.7} parent=35 // loop_footer_branch
                %215 = sbr.rel target = $region38
              $region43: #{simple_cnn_forward.7} parent=35 // loop_exit
                _
              loop: start=0, step=1, limit=1
              $region44: #{simple_cnn_forward.7} parent=35 // loop_pre_header
                _
              $region45: #{simple_cnn_forward.7} parent=35 // loop_header
                %s289 = sphi 0, %s293
                %p290 = scmp.ge.s32.totalorder %s289, 1
                %s294 = sphi %s213, %s213
                %s295 = sphi %s214, %s214
              $region46: #{simple_cnn_forward.7} parent=35 // loop_header_branch
                %292 = sbr.rel (%p290) target = $region50
              $region47: #{simple_cnn_forward.7} parent=35 // loop_body
                %v296 = vld [vmem:[%s294] sm:$0xf]
                %297 = vst [vmem:[%s295] sm:$0xf] %v296
                %v298 = vld [vmem:[%s294 + $0x24] sm:$0xf]
                %299 = vst [vmem:[%s295 + $0xc] sm:$0xf] %v298
                %v300 = vld [vmem:[%s294 + $0x48] sm:$0xf]
                %301 = vst [vmem:[%s295 + $0x18] sm:$0xf] %v300
                %v302 = vld [vmem:[%s294 + $0x6c] sm:$0xf]
                %303 = vst [vmem:[%s295 + $0x24] sm:$0xf] %v302
                %v304 = vld [vmem:[%s294 + $0x90] sm:$0xf]
                %305 = vst [vmem:[%s295 + $0x30] sm:$0xf] %v304
                %v306 = vld [vmem:[%s294 + $0xb4] sm:$0xf]
                %307 = vst [vmem:[%s295 + $0x3c] sm:$0xf] %v306
                %v308 = vld [vmem:[%s294 + $0xd8] sm:$0xf]
                %309 = vst [vmem:[%s295 + $0x48] sm:$0xf] %v308
                %v310 = vld [vmem:[%s294 + $0xfc] sm:$0xf]
                %311 = vst [vmem:[%s295 + $0x54] sm:$0xf] %v310
                %v312 = vld [vmem:[%s294 + $0x120] sm:$0xf]
                %313 = vst [vmem:[%s295 + $0x60] sm:$0xf] %v312
                %v314 = vld [vmem:[%s294 + $0x144] sm:$0xf]
                %315 = vst [vmem:[%s295 + $0x6c] sm:$0xf] %v314
                %v316 = vld [vmem:[%s294 + $0x168] sm:$0xf]
                %317 = vst [vmem:[%s295 + $0x78] sm:$0xf] %v316
                %v318 = vld [vmem:[%s294 + $0x18c] sm:$0xf]
                %319 = vst [vmem:[%s295 + $0x84] sm:$0xf] %v318
                %v320 = vld [vmem:[%s294 + $0x1b0] sm:$0xf]
                %321 = vst [vmem:[%s295 + $0x90] sm:$0xf] %v320
                %v322 = vld [vmem:[%s294 + $0x1d4] sm:$0xf]
                %323 = vst [vmem:[%s295 + $0x9c] sm:$0xf] %v322
                %v324 = vld [vmem:[%s294 + $0x1f8] sm:$0xf]
                %325 = vst [vmem:[%s295 + $0xa8] sm:$0xf] %v324
                %v326 = vld [vmem:[%s294 + $0x21c] sm:$0xf]
                %327 = vst [vmem:[%s295 + $0xb4] sm:$0xf] %v326
                %v328 = vld [vmem:[%s294 + $0x240] sm:$0xf]
                %329 = vst [vmem:[%s295 + $0xc0] sm:$0xf] %v328
                %v330 = vld [vmem:[%s294 + $0x264] sm:$0xf]
                %331 = vst [vmem:[%s295 + $0xcc] sm:$0xf] %v330
                %v332 = vld [vmem:[%s294 + $0x288] sm:$0xf]
                %333 = vst [vmem:[%s295 + $0xd8] sm:$0xf] %v332
                %v334 = vld [vmem:[%s294 + $0x2ac] sm:$0xf]
                %335 = vst [vmem:[%s295 + $0xe4] sm:$0xf] %v334
                %v336 = vld [vmem:[%s294 + $0x2d0] sm:$0xf]
                %337 = vst [vmem:[%s295 + $0xf0] sm:$0xf] %v336
                %v338 = vld [vmem:[%s294 + $0x2f4] sm:$0xf]
                %339 = vst [vmem:[%s295 + $0xfc] sm:$0xf] %v338
                %v340 = vld [vmem:[%s294 + $0x318] sm:$0xf]
                %341 = vst [vmem:[%s295 + $0x108] sm:$0xf] %v340
                %v342 = vld [vmem:[%s294 + $0x33c] sm:$0xf]
                %343 = vst [vmem:[%s295 + $0x114] sm:$0xf] %v342
                %v344 = vld [vmem:[%s294 + $0x360] sm:$0xf]
                %345 = vst [vmem:[%s295 + $0x120] sm:$0xf] %v344
                %v346 = vld [vmem:[%s294 + $0x384] sm:$0xf]
                %347 = vst [vmem:[%s295 + $0x12c] sm:$0xf] %v346
                %v348 = vld [vmem:[%s294 + $0x3a8] sm:$0xf]
                %349 = vst [vmem:[%s295 + $0x138] sm:$0xf] %v348
                %v350 = vld [vmem:[%s294 + $0x3cc] sm:$0xf]
                %351 = vst [vmem:[%s295 + $0x144] sm:$0xf] %v350
                %v352 = vld [vmem:[%s294 + $0x3f0] sm:$0xf]
                %353 = vst [vmem:[%s295 + $0x150] sm:$0xf] %v352
                %v354 = vld [vmem:[%s294 + $0x414] sm:$0xf]
                %355 = vst [vmem:[%s295 + $0x15c] sm:$0xf] %v354
                %v356 = vld [vmem:[%s294 + $0x438] sm:$0xf]
                %357 = vst [vmem:[%s295 + $0x168] sm:$0xf] %v356
                %v358 = vld [vmem:[%s294 + $0x45c] sm:$0xf]
                %359 = vst [vmem:[%s295 + $0x174] sm:$0xf] %v358
              $region48: #{simple_cnn_forward.7} parent=35 // loop_footer
                %s293 = sadd.s32 1, %s289
              $region49: #{simple_cnn_forward.7} parent=35 // loop_footer_branch
                %288 = sbr.rel target = $region45
              $region50: #{simple_cnn_forward.7} parent=35 // loop_exit
                _
            $region36: #{simple_cnn_forward.7} parent=31 // pred_fallthru
              _
          $region32: #{simple_cnn_forward.7} parent=27 // pred_fallthru
            _
          %360 = vnop
        $region28: #{simple_cnn_forward.7} parent=23 // pred_fallthru
          _
        // Predicated region
        $region51: #{simple_cnn_forward.7} parent=23 // pred_check
          %p361 = pneg %p79
        $region52: #{simple_cnn_forward.7} parent=23 // pred_check_branch
          %363 = sbr.rel (%p361) target = $region54
        $region53: #{simple_cnn_forward.7} parent=23 // pred_region
          %s364 = smul.u32 48, %s19
          %p365 = scmp.lt.s32.totalorder %s364, 143
          %s366 = scalar_select %p365, %s364, 143
          %p367 = scmp.lt.s32.totalorder %s18, 0
          %s368 = scalar_select %p367, %s18, 0
          %s369 = sadd.s32 %s368, %s366
          %s370 = smul.addr %s369, 4
          %s371 = scalar_lea.vmem %s1, %s370
          %s372 = smul.u32 48, %s19
        $region54: #{simple_cnn_forward.7} parent=23 // pred_fallthru
          _
      $region24: #{simple_cnn_forward.7} parent=5 // pred_fallthru
        _
      %p373 = scmp.le.s32.totalorder 1, %s10
      %p374 = scmp.lt.s32.totalorder %s10, 7
      %p375 = pnand %p373, %p374
      %p376 = pneg %p375
      // Predicated region
      $region55: #{simple_cnn_forward.7} parent=5 // pred_check
        _
      $region56: #{simple_cnn_forward.7} parent=5 // pred_check_branch
        %378 = sbr.rel (%p375) target = $region58
      $region57: #{simple_cnn_forward.7} parent=5 // pred_region
        %s379 = ssub.s32 %s10, 1
        %s380 = sand.u32 %s44, 1
        %s381 = sand.u32 %s44, 1
        %s382 = smul.addr %s381, 384
        %s383 = scalar_lea.vmem [#allocation2], %s382
        // Predicated region
        $region59: #{simple_cnn_forward.7} parent=57 // pred_check
          %p384 = pneg %p57
        $region60: #{simple_cnn_forward.7} parent=57 // pred_check_branch
          %386 = sbr.rel (%p384) target = $region62
        $region61: #{simple_cnn_forward.7} parent=57 // pred_region
          _
        $region62: #{simple_cnn_forward.7} parent=57 // pred_fallthru
          _
        %s387 = sand.u32 %s44, 1
        %s388 = sand.u32 %s44, 1
        %s389 = smul.addr %s388, 384
        %s390 = scalar_lea.vmem [#allocation2], %s389
        %p391 = pneg %p57
        %p392 = pneg %p54
        %s393 = smul.u32 48, %s22
        %p394 = scmp.lt.s32.totalorder %s393, 143
        %s395 = scalar_select %p394, %s393, 143
        %p396 = scmp.lt.s32.totalorder %s21, 0
        %s397 = scalar_select %p396, %s21, 0
        %s398 = sadd.s32 %s397, %s395
        %s399 = smul.addr %s398, 4
        %s400 = scalar_lea.vmem %s1, %s399
        %p401 = pneg %p85
        %p402 = pneg %p82
        %p403 = scmp.lt.s32.totalorder %s21, 0
        %s404 = scalar_select %p403, %s21, 0
        %s405 = scalar_lea.vmem %s2, %s404
        %p406 = pneg %p111
        %p407 = pneg %p108
        %p408 = scmp.lt.s32.totalorder %s21, 0
        %s409 = scalar_select %p408, %s21, 0
        %s410 = scalar_lea.vmem %s3, %s409
        %p411 = pneg %p137
        %p412 = pneg %p134
        %p413 = pneg %p165
        %p414 = pneg %p162
        %s415 = smul.u32 32, %s20
        %p416 = scmp.lt.s32.totalorder %s415, 63
        %s417 = scalar_select %p416, %s415, 63
        %p418 = scmp.lt.s32.totalorder %s21, 0
        %s419 = scalar_select %p418, %s21, 0
        %s420 = sadd.s32 %s419, %s417
        %s421 = smul.addr %s420, 8
        %s422 = scalar_lea.vmem %s4, %s421
        %s423 = smul.u32 32, %s20
        %s424 = smul.u32 3, %s22
        %s425 = smul.u32 48, %s22
        %p426 = scmp.lt.s32.totalorder %s425, 143
        %s427 = scalar_select %p426, %s425, 143
        %p428 = scmp.lt.s32.totalorder %s21, 0
        %s429 = scalar_select %p428, %s21, 0
        %s430 = sadd.s32 %s429, %s427
        %s431 = smul.addr %s430, 4
        %s432 = scalar_lea.vmem %s1, %s431
        %s433 = smul.u32 48, %s22
        %p434 = scmp.lt.s32.totalorder %s21, 0
        %s435 = scalar_select %p434, %s21, 0
        %s436 = scalar_lea.vmem %s2, %s435
        %p437 = scmp.lt.s32.totalorder %s21, 0
        %s438 = scalar_select %p437, %s21, 0
        %s439 = scalar_lea.vmem %s3, %s438
        %s440 = smul.u32 32, %s20
        %p441 = scmp.lt.s32.totalorder %s440, 63
        %s442 = scalar_select %p441, %s440, 63
        %p443 = scmp.lt.s32.totalorder %s21, 0
        %s444 = scalar_select %p443, %s21, 0
        %s445 = sadd.s32 %s444, %s442
        %s446 = smul.addr %s445, 8
        %s447 = scalar_lea.vmem %s4, %s446
        %s448 = smul.u32 32, %s20
        %p450 = scmp.eq.s32.totalorder %s22, 0
        // Predicated region
        $region63: #{simple_cnn_forward.7} parent=57 // pred_check
          %p451 = pneg %p450
        $region64: #{simple_cnn_forward.7} parent=57 // pred_check_branch
          %453 = sbr.rel (%p451) target = $region66
        $region65: #{simple_cnn_forward.7} parent=57 // pred_region
          %454 = vst [vmem:[%s447] sm:$0xff] 0.0
          %455 = vst [vmem:[%s447 + $0x8] sm:$0xff] 0.0
          %456 = vst [vmem:[%s447 + $0x10] sm:$0xff] 0.0
          %457 = vst [vmem:[%s447 + $0x18] sm:$0xff] 0.0
          %458 = vst [vmem:[%s447 + $0x20] sm:$0xff] 0.0
          %459 = vst [vmem:[%s447 + $0x28] sm:$0xff] 0.0
          %460 = vst [vmem:[%s447 + $0x30] sm:$0xff] 0.0
          %461 = vst [vmem:[%s447 + $0x38] sm:$0xff] 0.0
          %462 = vst [vmem:[%s447 + $0x40] sm:$0xff] 0.0
          %463 = vst [vmem:[%s447 + $0x48] sm:$0xff] 0.0
          %464 = vst [vmem:[%s447 + $0x50] sm:$0xff] 0.0
          %465 = vst [vmem:[%s447 + $0x58] sm:$0xff] 0.0
          %466 = vst [vmem:[%s447 + $0x60] sm:$0xff] 0.0
          %467 = vst [vmem:[%s447 + $0x68] sm:$0xff] 0.0
          %468 = vst [vmem:[%s447 + $0x70] sm:$0xff] 0.0
          %469 = vst [vmem:[%s447 + $0x78] sm:$0xff] 0.0
          %470 = vst [vmem:[%s447 + $0x80] sm:$0xff] 0.0
          %471 = vst [vmem:[%s447 + $0x88] sm:$0xff] 0.0
          %472 = vst [vmem:[%s447 + $0x90] sm:$0xff] 0.0
          %473 = vst [vmem:[%s447 + $0x98] sm:$0xff] 0.0
          %474 = vst [vmem:[%s447 + $0xa0] sm:$0xff] 0.0
          %475 = vst [vmem:[%s447 + $0xa8] sm:$0xff] 0.0
          %476 = vst [vmem:[%s447 + $0xb0] sm:$0xff] 0.0
          %477 = vst [vmem:[%s447 + $0xb8] sm:$0xff] 0.0
          %478 = vst [vmem:[%s447 + $0xc0] sm:$0xff] 0.0
          %479 = vst [vmem:[%s447 + $0xc8] sm:$0xff] 0.0
          %480 = vst [vmem:[%s447 + $0xd0] sm:$0xff] 0.0
          %481 = vst [vmem:[%s447 + $0xd8] sm:$0xff] 0.0
          %482 = vst [vmem:[%s447 + $0xe0] sm:$0xff] 0.0
          %483 = vst [vmem:[%s447 + $0xe8] sm:$0xff] 0.0
          %484 = vst [vmem:[%s447 + $0xf0] sm:$0xff] 0.0
          %485 = vst [vmem:[%s447 + $0xf8] sm:$0xff] 0.0
        $region66: #{simple_cnn_forward.7} parent=57 // pred_fallthru
          _
        %v486 = vld [vmem:[%s447] sm:$0xff]
        %v487 = vld [vmem:[%s447 + $0x8] sm:$0xff]
        %v488 = vld [vmem:[%s447 + $0x10] sm:$0xff]
        %v489 = vld [vmem:[%s447 + $0x18] sm:$0xff]
        %v490 = vld [vmem:[%s447 + $0x20] sm:$0xff]
        %v491 = vld [vmem:[%s447 + $0x28] sm:$0xff]
        %v492 = vld [vmem:[%s447 + $0x30] sm:$0xff]
        %v493 = vld [vmem:[%s447 + $0x38] sm:$0xff]
        %v494 = vld [vmem:[%s447 + $0x40] sm:$0xff]
        %v495 = vld [vmem:[%s447 + $0x48] sm:$0xff]
        %v496 = vld [vmem:[%s447 + $0x50] sm:$0xff]
        %v497 = vld [vmem:[%s447 + $0x58] sm:$0xff]
        %v498 = vld [vmem:[%s447 + $0x60] sm:$0xff]
        %v499 = vld [vmem:[%s447 + $0x68] sm:$0xff]
        %v500 = vld [vmem:[%s447 + $0x70] sm:$0xff]
        %v501 = vld [vmem:[%s447 + $0x78] sm:$0xff]
        %v502 = vld [vmem:[%s447 + $0x80] sm:$0xff]
        %v503 = vld [vmem:[%s447 + $0x88] sm:$0xff]
        %v504 = vld [vmem:[%s447 + $0x90] sm:$0xff]
        %v505 = vld [vmem:[%s447 + $0x98] sm:$0xff]
        %v506 = vld [vmem:[%s447 + $0xa0] sm:$0xff]
        %v507 = vld [vmem:[%s447 + $0xa8] sm:$0xff]
        %v508 = vld [vmem:[%s447 + $0xb0] sm:$0xff]
        %v509 = vld [vmem:[%s447 + $0xb8] sm:$0xff]
        %v510 = vld [vmem:[%s447 + $0xc0] sm:$0xff]
        %v511 = vld [vmem:[%s447 + $0xc8] sm:$0xff]
        %v512 = vld [vmem:[%s447 + $0xd0] sm:$0xff]
        %v513 = vld [vmem:[%s447 + $0xd8] sm:$0xff]
        %v514 = vld [vmem:[%s447 + $0xe0] sm:$0xff]
        %v515 = vld [vmem:[%s447 + $0xe8] sm:$0xff]
        %v516 = vld [vmem:[%s447 + $0xf0] sm:$0xff]
        %v517 = vld [vmem:[%s447 + $0xf8] sm:$0xff]
        %v518 = vld [vmem:[%s383] sm:$0xff]
        %v519 = vld [vmem:[%s383 + $0x8] sm:$0xf]
        %v520 = vld [vmem:[%s383 + $0xc] sm:$0xff]
        %v521 = vld [vmem:[%s383 + $0x14] sm:$0xf]
        %v522 = vld [vmem:[%s383 + $0x18] sm:$0xff]
        %v523 = vld [vmem:[%s383 + $0x20] sm:$0xf]
        %v524 = vld [vmem:[%s383 + $0x24] sm:$0xff]
        %v525 = vld [vmem:[%s383 + $0x2c] sm:$0xf]
        %v526 = vld [vmem:[%s383 + $0x30] sm:$0xff]
        %v527 = vld [vmem:[%s383 + $0x38] sm:$0xf]
        %v528 = vld [vmem:[%s383 + $0x3c] sm:$0xff]
        %v529 = vld [vmem:[%s383 + $0x44] sm:$0xf]
        %v530 = vld [vmem:[%s383 + $0x48] sm:$0xff]
        %v531 = vld [vmem:[%s383 + $0x50] sm:$0xf]
        %v532 = vld [vmem:[%s383 + $0x54] sm:$0xff]
        %v533 = vld [vmem:[%s383 + $0x5c] sm:$0xf]
        %v534 = vld [vmem:[%s383 + $0x60] sm:$0xff]
        %v535 = vld [vmem:[%s383 + $0x68] sm:$0xf]
        %v536 = vld [vmem:[%s383 + $0x6c] sm:$0xff]
        %v537 = vld [vmem:[%s383 + $0x74] sm:$0xf]
        %v538 = vld [vmem:[%s383 + $0x78] sm:$0xff]
        %v539 = vld [vmem:[%s383 + $0x80] sm:$0xf]
        %v540 = vld [vmem:[%s383 + $0x84] sm:$0xff]
        %v541 = vld [vmem:[%s383 + $0x8c] sm:$0xf]
        %v542 = vld [vmem:[%s383 + $0x90] sm:$0xff]
        %v543 = vld [vmem:[%s383 + $0x98] sm:$0xf]
        %v544 = vld [vmem:[%s383 + $0x9c] sm:$0xff]
        %v545 = vld [vmem:[%s383 + $0xa4] sm:$0xf]
        %v546 = vld [vmem:[%s383 + $0xa8] sm:$0xff]
        %v547 = vld [vmem:[%s383 + $0xb0] sm:$0xf]
        %v548 = vld [vmem:[%s383 + $0xb4] sm:$0xff]
        %v549 = vld [vmem:[%s383 + $0xbc] sm:$0xf]
        %v550 = vld [vmem:[%s383 + $0xc0] sm:$0xff]
        %v551 = vld [vmem:[%s383 + $0xc8] sm:$0xf]
        %v552 = vld [vmem:[%s383 + $0xcc] sm:$0xff]
        %v553 = vld [vmem:[%s383 + $0xd4] sm:$0xf]
        %v554 = vld [vmem:[%s383 + $0xd8] sm:$0xff]
        %v555 = vld [vmem:[%s383 + $0xe0] sm:$0xf]
        %v556 = vld [vmem:[%s383 + $0xe4] sm:$0xff]
        %v557 = vld [vmem:[%s383 + $0xec] sm:$0xf]
        %v558 = vld [vmem:[%s383 + $0xf0] sm:$0xff]
        %v559 = vld [vmem:[%s383 + $0xf8] sm:$0xf]
        %v560 = vld [vmem:[%s383 + $0xfc] sm:$0xff]
        %v561 = vld [vmem:[%s383 + $0x104] sm:$0xf]
        %v562 = vld [vmem:[%s383 + $0x108] sm:$0xff]
        %v563 = vld [vmem:[%s383 + $0x110] sm:$0xf]
        %v564 = vld [vmem:[%s383 + $0x114] sm:$0xff]
        %v565 = vld [vmem:[%s383 + $0x11c] sm:$0xf]
        %v566 = vld [vmem:[%s383 + $0x120] sm:$0xff]
        %v567 = vld [vmem:[%s383 + $0x128] sm:$0xf]
        %v568 = vld [vmem:[%s383 + $0x12c] sm:$0xff]
        %v569 = vld [vmem:[%s383 + $0x134] sm:$0xf]
        %v570 = vld [vmem:[%s383 + $0x138] sm:$0xff]
        %v571 = vld [vmem:[%s383 + $0x140] sm:$0xf]
        %v572 = vld [vmem:[%s383 + $0x144] sm:$0xff]
        %v573 = vld [vmem:[%s383 + $0x14c] sm:$0xf]
        %v574 = vld [vmem:[%s383 + $0x150] sm:$0xff]
        %v575 = vld [vmem:[%s383 + $0x158] sm:$0xf]
        %v576 = vld [vmem:[%s383 + $0x15c] sm:$0xff]
        %v577 = vld [vmem:[%s383 + $0x164] sm:$0xf]
        %v578 = vld [vmem:[%s383 + $0x168] sm:$0xff]
        %v579 = vld [vmem:[%s383 + $0x170] sm:$0xf]
        %v580 = vld [vmem:[%s383 + $0x174] sm:$0xff]
        %v581 = vld [vmem:[%s383 + $0x17c] sm:$0xf]
        %v582 = vld [vmem:[%s432] sm:$0xf]
        %v583 = vld [vmem:[%s432 + $0x4] sm:$0xf]
        %v584 = vld [vmem:[%s432 + $0x8] sm:$0xf]
        %v585 = vld [vmem:[%s432 + $0xc] sm:$0xf]
        %v586 = vld [vmem:[%s432 + $0x10] sm:$0xf]
        %v587 = vld [vmem:[%s432 + $0x14] sm:$0xf]
        %v588 = vld [vmem:[%s432 + $0x18] sm:$0xf]
        %v589 = vld [vmem:[%s432 + $0x1c] sm:$0xf]
        %v590 = vld [vmem:[%s432 + $0x20] sm:$0xf]
        %v591 = vld [vmem:[%s432 + $0x24] sm:$0xf]
        %v592 = vld [vmem:[%s432 + $0x28] sm:$0xf]
        %v593 = vld [vmem:[%s432 + $0x2c] sm:$0xf]
        %v594 = vld [vmem:[%s432 + $0x30] sm:$0xf]
        %v595 = vld [vmem:[%s432 + $0x34] sm:$0xf]
        %v596 = vld [vmem:[%s432 + $0x38] sm:$0xf]
        %v597 = vld [vmem:[%s432 + $0x3c] sm:$0xf]
        %v598 = vld [vmem:[%s432 + $0x40] sm:$0xf]
        %v599 = vld [vmem:[%s432 + $0x44] sm:$0xf]
        %v600 = vld [vmem:[%s432 + $0x48] sm:$0xf]
        %v601 = vld [vmem:[%s432 + $0x4c] sm:$0xf]
        %v602 = vld [vmem:[%s432 + $0x50] sm:$0xf]
        %v603 = vld [vmem:[%s432 + $0x54] sm:$0xf]
        %v604 = vld [vmem:[%s432 + $0x58] sm:$0xf]
        %v605 = vld [vmem:[%s432 + $0x5c] sm:$0xf]
        %v606 = vld [vmem:[%s432 + $0x60] sm:$0xf]
        %v607 = vld [vmem:[%s432 + $0x64] sm:$0xf]
        %v608 = vld [vmem:[%s432 + $0x68] sm:$0xf]
        %v609 = vld [vmem:[%s432 + $0x6c] sm:$0xf]
        %v610 = vld [vmem:[%s432 + $0x70] sm:$0xf]
        %v611 = vld [vmem:[%s432 + $0x74] sm:$0xf]
        %v612 = vld [vmem:[%s432 + $0x78] sm:$0xf]
        %v613 = vld [vmem:[%s432 + $0x7c] sm:$0xf]
        %v614 = vld [vmem:[%s432 + $0x80] sm:$0xf]
        %v615 = vld [vmem:[%s432 + $0x84] sm:$0xf]
        %v616 = vld [vmem:[%s432 + $0x88] sm:$0xf]
        %v617 = vld [vmem:[%s432 + $0x8c] sm:$0xf]
        %v618 = vld [vmem:[%s432 + $0x90] sm:$0xf]
        %v619 = vld [vmem:[%s432 + $0x94] sm:$0xf]
        %v620 = vld [vmem:[%s432 + $0x98] sm:$0xf]
        %v621 = vld [vmem:[%s432 + $0x9c] sm:$0xf]
        %v622 = vld [vmem:[%s432 + $0xa0] sm:$0xf]
        %v623 = vld [vmem:[%s432 + $0xa4] sm:$0xf]
        %v624 = vld [vmem:[%s432 + $0xa8] sm:$0xf]
        %v625 = vld [vmem:[%s432 + $0xac] sm:$0xf]
        %v626 = vld [vmem:[%s432 + $0xb0] sm:$0xf]
        %v627 = vld [vmem:[%s432 + $0xb4] sm:$0xf]
        %v628 = vld [vmem:[%s432 + $0xb8] sm:$0xf]
        %v629 = vld [vmem:[%s432 + $0xbc] sm:$0xf]
        %v694 = vunpack.c.l.b16 %v518
        %v695 = vunpack.c.h.b16 %v518
        %v696 = vunpack.c.l.b16 %v519
        %v697 = vunpack.c.l.b16 %v520
        %v698 = vunpack.c.h.b16 %v520
        %v699 = vunpack.c.l.b16 %v521
        %v700 = vunpack.c.l.b16 %v522
        %v701 = vunpack.c.h.b16 %v522
        %v702 = vunpack.c.l.b16 %v523
        %v703 = vunpack.c.l.b16 %v524
        %v704 = vunpack.c.h.b16 %v524
        %v705 = vunpack.c.l.b16 %v525
        %v706 = vunpack.c.l.b16 %v526
        %v707 = vunpack.c.h.b16 %v526
        %v708 = vunpack.c.l.b16 %v527
        %v709 = vunpack.c.l.b16 %v528
        %v710 = vunpack.c.h.b16 %v528
        %v711 = vunpack.c.l.b16 %v529
        %v712 = vunpack.c.l.b16 %v530
        %v713 = vunpack.c.h.b16 %v530
        %v714 = vunpack.c.l.b16 %v531
        %v715 = vunpack.c.l.b16 %v532
        %v716 = vunpack.c.h.b16 %v532
        %v717 = vunpack.c.l.b16 %v533
        %v718 = vunpack.c.l.b16 %v534
        %v719 = vunpack.c.h.b16 %v534
        %v720 = vunpack.c.l.b16 %v535
        %v721 = vunpack.c.l.b16 %v536
        %v722 = vunpack.c.h.b16 %v536
        %v723 = vunpack.c.l.b16 %v537
        %v724 = vunpack.c.l.b16 %v538
        %v725 = vunpack.c.h.b16 %v538
        %v726 = vunpack.c.l.b16 %v539
        %v727 = vunpack.c.l.b16 %v540
        %v728 = vunpack.c.h.b16 %v540
        %v729 = vunpack.c.l.b16 %v541
        %v730 = vunpack.c.l.b16 %v542
        %v731 = vunpack.c.h.b16 %v542
        %v732 = vunpack.c.l.b16 %v543
        %v733 = vunpack.c.l.b16 %v544
        %v734 = vunpack.c.h.b16 %v544
        %v735 = vunpack.c.l.b16 %v545
        %v736 = vunpack.c.l.b16 %v546
        %v737 = vunpack.c.h.b16 %v546
        %v738 = vunpack.c.l.b16 %v547
        %v739 = vunpack.c.l.b16 %v548
        %v740 = vunpack.c.h.b16 %v548
        %v741 = vunpack.c.l.b16 %v549
        %v742 = vunpack.c.l.b16 %v550
        %v743 = vunpack.c.h.b16 %v550
        %v744 = vunpack.c.l.b16 %v551
        %v745 = vunpack.c.l.b16 %v552
        %v746 = vunpack.c.h.b16 %v552
        %v747 = vunpack.c.l.b16 %v553
        %v748 = vunpack.c.l.b16 %v554
        %v749 = vunpack.c.h.b16 %v554
        %v750 = vunpack.c.l.b16 %v555
        %v751 = vunpack.c.l.b16 %v556
        %v752 = vunpack.c.h.b16 %v556
        %v753 = vunpack.c.l.b16 %v557
        %v754 = vunpack.c.l.b16 %v558
        %v755 = vunpack.c.h.b16 %v558
        %v756 = vunpack.c.l.b16 %v559
        %v757 = vunpack.c.l.b16 %v560
        %v758 = vunpack.c.h.b16 %v560
        %v759 = vunpack.c.l.b16 %v561
        %v760 = vunpack.c.l.b16 %v562
        %v761 = vunpack.c.h.b16 %v562
        %v762 = vunpack.c.l.b16 %v563
        %v763 = vunpack.c.l.b16 %v564
        %v764 = vunpack.c.h.b16 %v564
        %v765 = vunpack.c.l.b16 %v565
        %v766 = vunpack.c.l.b16 %v566
        %v767 = vunpack.c.h.b16 %v566
        %v768 = vunpack.c.l.b16 %v567
        %v769 = vunpack.c.l.b16 %v568
        %v770 = vunpack.c.h.b16 %v568
        %v771 = vunpack.c.l.b16 %v569
        %v772 = vunpack.c.l.b16 %v570
        %v773 = vunpack.c.h.b16 %v570
        %v774 = vunpack.c.l.b16 %v571
        %v775 = vunpack.c.l.b16 %v572
        %v776 = vunpack.c.h.b16 %v572
        %v777 = vunpack.c.l.b16 %v573
        %v778 = vunpack.c.l.b16 %v574
        %v779 = vunpack.c.h.b16 %v574
        %v780 = vunpack.c.l.b16 %v575
        %v781 = vunpack.c.l.b16 %v576
        %v782 = vunpack.c.h.b16 %v576
        %v783 = vunpack.c.l.b16 %v577
        %v784 = vunpack.c.l.b16 %v578
        %v785 = vunpack.c.h.b16 %v578
        %v786 = vunpack.c.l.b16 %v579
        %v787 = vunpack.c.l.b16 %v580
        %v788 = vunpack.c.h.b16 %v580
        %v789 = vunpack.c.l.b16 %v581
        %v790 = vpack.c.b16 %v697, %v694
        %v791 = vpack.c.b16 %v698, %v695
        %v792 = vpack.c.b16 %v699, %v696
        %v793 = vpack.c.b16 %v703, %v700
        %v794 = vpack.c.b16 %v704, %v701
        %v795 = vpack.c.b16 %v705, %v702
        %v796 = vpack.c.b16 %v709, %v706
        %v797 = vpack.c.b16 %v710, %v707
        %v798 = vpack.c.b16 %v711, %v708
        %v799 = vpack.c.b16 %v715, %v712
        %v800 = vpack.c.b16 %v716, %v713
        %v801 = vpack.c.b16 %v717, %v714
        %v802 = vpack.c.b16 %v721, %v718
        %v803 = vpack.c.b16 %v722, %v719
        %v804 = vpack.c.b16 %v723, %v720
        %v805 = vpack.c.b16 %v727, %v724
        %v806 = vpack.c.b16 %v728, %v725
        %v807 = vpack.c.b16 %v729, %v726
        %v808 = vpack.c.b16 %v733, %v730
        %v809 = vpack.c.b16 %v734, %v731
        %v810 = vpack.c.b16 %v735, %v732
        %v811 = vpack.c.b16 %v739, %v736
        %v812 = vpack.c.b16 %v740, %v737
        %v813 = vpack.c.b16 %v741, %v738
        %v814 = vpack.c.b16 %v745, %v742
        %v815 = vpack.c.b16 %v746, %v743
        %v816 = vpack.c.b16 %v747, %v744
        %v817 = vpack.c.b16 %v751, %v748
        %v818 = vpack.c.b16 %v752, %v749
        %v819 = vpack.c.b16 %v753, %v750
        %v820 = vpack.c.b16 %v757, %v754
        %v821 = vpack.c.b16 %v758, %v755
        %v822 = vpack.c.b16 %v759, %v756
        %v823 = vpack.c.b16 %v763, %v760
        %v824 = vpack.c.b16 %v764, %v761
        %v825 = vpack.c.b16 %v765, %v762
        %v826 = vpack.c.b16 %v769, %v766
        %v827 = vpack.c.b16 %v770, %v767
        %v828 = vpack.c.b16 %v771, %v768
        %v829 = vpack.c.b16 %v775, %v772
        %v830 = vpack.c.b16 %v776, %v773
        %v831 = vpack.c.b16 %v777, %v774
        %v832 = vpack.c.b16 %v781, %v778
        %v833 = vpack.c.b16 %v782, %v779
        %v834 = vpack.c.b16 %v783, %v780
        %v835 = vpack.c.b16 %v787, %v784
        %v836 = vpack.c.b16 %v788, %v785
        %v837 = vpack.c.b16 %v789, %v786
        %v934 = vunpack.c.l.b16 %v582
        %v935 = vunpack.c.l.b16 %v583
        %v936 = vunpack.c.l.b16 %v584
        %v937 = vunpack.c.l.b16 %v585
        %v938 = vunpack.c.l.b16 %v586
        %v939 = vunpack.c.l.b16 %v587
        %v940 = vunpack.c.l.b16 %v588
        %v941 = vunpack.c.l.b16 %v589
        %v942 = vunpack.c.l.b16 %v590
        %v943 = vunpack.c.l.b16 %v591
        %v944 = vunpack.c.l.b16 %v592
        %v945 = vunpack.c.l.b16 %v593
        %v946 = vunpack.c.l.b16 %v594
        %v947 = vunpack.c.l.b16 %v595
        %v948 = vunpack.c.l.b16 %v596
        %v949 = vunpack.c.l.b16 %v597
        %v950 = vunpack.c.l.b16 %v598
        %v951 = vunpack.c.l.b16 %v599
        %v952 = vunpack.c.l.b16 %v600
        %v953 = vunpack.c.l.b16 %v601
        %v954 = vunpack.c.l.b16 %v602
        %v955 = vunpack.c.l.b16 %v603
        %v956 = vunpack.c.l.b16 %v604
        %v957 = vunpack.c.l.b16 %v605
        %v958 = vunpack.c.l.b16 %v606
        %v959 = vunpack.c.l.b16 %v607
        %v960 = vunpack.c.l.b16 %v608
        %v961 = vunpack.c.l.b16 %v609
        %v962 = vunpack.c.l.b16 %v610
        %v963 = vunpack.c.l.b16 %v611
        %v964 = vunpack.c.l.b16 %v612
        %v965 = vunpack.c.l.b16 %v613
        %v966 = vunpack.c.l.b16 %v614
        %v967 = vunpack.c.l.b16 %v615
        %v968 = vunpack.c.l.b16 %v616
        %v969 = vunpack.c.l.b16 %v617
        %v970 = vunpack.c.l.b16 %v618
        %v971 = vunpack.c.l.b16 %v619
        %v972 = vunpack.c.l.b16 %v620
        %v973 = vunpack.c.l.b16 %v621
        %v974 = vunpack.c.l.b16 %v622
        %v975 = vunpack.c.l.b16 %v623
        %v976 = vunpack.c.l.b16 %v624
        %v977 = vunpack.c.l.b16 %v625
        %v978 = vunpack.c.l.b16 %v626
        %v979 = vunpack.c.l.b16 %v627
        %v980 = vunpack.c.l.b16 %v628
        %v981 = vunpack.c.l.b16 %v629
        %v982 = vpack.c.b16 %v935, %v934
        %v983 = vpack.c.b16 %v937, %v936
        %v984 = vpack.c.b16 %v939, %v938
        %v985 = vpack.c.b16 %v941, %v940
        %v986 = vpack.c.b16 %v943, %v942
        %v987 = vpack.c.b16 %v945, %v944
        %v988 = vpack.c.b16 %v947, %v946
        %v989 = vpack.c.b16 %v949, %v948
        %v990 = vpack.c.b16 %v951, %v950
        %v991 = vpack.c.b16 %v953, %v952
        %v992 = vpack.c.b16 %v955, %v954
        %v993 = vpack.c.b16 %v957, %v956
        %v994 = vpack.c.b16 %v959, %v958
        %v995 = vpack.c.b16 %v961, %v960
        %v996 = vpack.c.b16 %v963, %v962
        %v997 = vpack.c.b16 %v965, %v964
        %v998 = vpack.c.b16 %v967, %v966
        %v999 = vpack.c.b16 %v969, %v968
        %v1000 = vpack.c.b16 %v971, %v970
        %v1001 = vpack.c.b16 %v973, %v972
        %v1002 = vpack.c.b16 %v975, %v974
        %v1003 = vpack.c.b16 %v977, %v976
        %v1004 = vpack.c.b16 %v979, %v978
        %v1005 = vpack.c.b16 %v981, %v980
        %1030 = vmatprep.subr.bf16.mxu0 0
        %1031 = vmatpush1.bf16.msra.mxu0 %v982
        %1032 = vmatprep.subr.bf16.mxu0 0
        %1033 = vmatpush1.bf16.msra.mxu0 %v983
        %1034 = vmatprep.subr.bf16.mxu0 0
        %1035 = vmatpush1.bf16.msra.mxu0 %v984
        %1036 = vmatprep.subr.bf16.mxu0 0
        %1037 = vmatpush1.bf16.msra.mxu0 %v985
        %1038 = vmatprep.subr.bf16.mxu0 0
        %1039 = vmatpush1.bf16.msra.mxu0 %v986
        %1040 = vmatprep.subr.bf16.mxu0 0
        %1041 = vmatpush1.bf16.msra.mxu0 %v987
        %1042 = vmatprep.subr.bf16.mxu0 0
        %1043 = vmatpush1.bf16.msra.mxu0 %v988
        %1044 = vmatprep.subr.bf16.mxu0 0
        %1045 = vmatpush1.bf16.msra.mxu0 %v989
        %1046 = vmatprep.subr.bf16.mxu0 0
        %1047 = vmatpush1.bf16.msra.mxu0 %v990
        %1048 = vmatprep.subr.bf16.mxu0 0
        %1049 = vmatpush1.bf16.msra.mxu0 %v991
        %1050 = vmatprep.subr.bf16.mxu0 0
        %1051 = vmatpush1.bf16.msra.mxu0 %v992
        %1052 = vmatprep.subr.bf16.mxu0 0
        %1053 = vmatpush1.bf16.msra.mxu0 %v993
        %1054 = vmatprep.subr.bf16.mxu0 0
        %1055 = vmatpush1.bf16.msra.mxu0 %v994
        %1056 = vmatprep.subr.bf16.mxu0 0
        %1057 = vmatpush1.bf16.msra.mxu0 %v995
        %1058 = vmatprep.subr.bf16.mxu0 0
        %1059 = vmatpush1.bf16.msra.mxu0 %v996
        %1060 = vmatprep.subr.bf16.mxu0 0
        %1061 = vmatpush1.bf16.msra.mxu0 %v997
        %1062 = vmatprep.mubr.bf16.mxu0 %v791
        %1063 = vmatmul.mubr.bf16.gmra.mrb[0].mxu0 %v790
        %v1064 = vpop.f32.mrb[0].mxu0
        %v1065 = vadd.f32 0.0, %v1064
        %v1066 = vpop.f32.mrb[0].mxu0
        %v1067 = vpop.f32.mrb[0].mxu0
        %v1068 = vadd.f32 0.0, %v1067
        %v1069 = vpop.f32.mrb[0].mxu0
        %1070 = vmatprep.mubr.bf16.mxu0 %v794
        %1071 = vmatmul.mubr.bf16.gmra.mrb[0].mxu0 %v793
        %v1072 = vpop.f32.mrb[0].mxu0
        %v1073 = vadd.f32 0.0, %v1072
        %v1074 = vpop.f32.mrb[0].mxu0
        %v1075 = vpop.f32.mrb[0].mxu0
        %v1076 = vadd.f32 0.0, %v1075
        %v1077 = vpop.f32.mrb[0].mxu0
        %1078 = vmatprep.mubr.bf16.mxu0 %v797
        %1079 = vmatmul.mubr.bf16.gmra.mrb[0].mxu0 %v796
        %v1080 = vpop.f32.mrb[0].mxu0
        %v1081 = vadd.f32 0.0, %v1080
        %v1082 = vpop.f32.mrb[0].mxu0
        %v1083 = vpop.f32.mrb[0].mxu0
        %v1084 = vadd.f32 0.0, %v1083
        %v1085 = vpop.f32.mrb[0].mxu0
        %1086 = vmatprep.mubr.bf16.mxu0 %v800
        %1087 = vmatmul.mubr.bf16.gmra.mrb[0].mxu0 %v799
        %v1088 = vpop.f32.mrb[0].mxu0
        %v1089 = vadd.f32 0.0, %v1088
        %v1090 = vpop.f32.mrb[0].mxu0
        %v1091 = vpop.f32.mrb[0].mxu0
        %v1092 = vadd.f32 0.0, %v1091
        %v1093 = vpop.f32.mrb[0].mxu0
        %1094 = vmatprep.mubr.bf16.mxu0 %v803
        %1095 = vmatmul.mubr.bf16.gmra.mrb[0].mxu0 %v802
        %v1096 = vpop.f32.mrb[0].mxu0
        %v1097 = vadd.f32 0.0, %v1096
        %v1098 = vpop.f32.mrb[0].mxu0
        %v1099 = vpop.f32.mrb[0].mxu0
        %v1100 = vadd.f32 0.0, %v1099
        %v1101 = vpop.f32.mrb[0].mxu0
        %1102 = vmatprep.mubr.bf16.mxu0 %v806
        %1103 = vmatmul.mubr.bf16.gmra.mrb[0].mxu0 %v805
        %v1104 = vpop.f32.mrb[0].mxu0
        %v1105 = vadd.f32 0.0, %v1104
        %v1106 = vpop.f32.mrb[0].mxu0
        %v1107 = vpop.f32.mrb[0].mxu0
        %v1108 = vadd.f32 0.0, %v1107
        %v1109 = vpop.f32.mrb[0].mxu0
        %1110 = vmatprep.mubr.bf16.mxu0 %v809
        %1111 = vmatmul.mubr.bf16.gmra.mrb[0].mxu0 %v808
        %v1112 = vpop.f32.mrb[0].mxu0
        %v1113 = vadd.f32 0.0, %v1112
        %v1114 = vpop.f32.mrb[0].mxu0
        %v1115 = vpop.f32.mrb[0].mxu0
        %v1116 = vadd.f32 0.0, %v1115
        %v1117 = vpop.f32.mrb[0].mxu0
        %1118 = vmatprep.mubr.bf16.mxu0 %v812
        %1119 = vmatmul.mubr.bf16.gmra.mrb[0].mxu0 %v811
        %v1120 = vpop.f32.mrb[0].mxu0
        %v1121 = vadd.f32 0.0, %v1120
        %v1122 = vpop.f32.mrb[0].mxu0
        %v1123 = vpop.f32.mrb[0].mxu0
        %v1124 = vadd.f32 0.0, %v1123
        %v1125 = vpop.f32.mrb[0].mxu0
        %1126 = vmatprep.mubr.bf16.mxu0 %v815
        %1127 = vmatmul.mubr.bf16.gmra.mrb[0].mxu0 %v814
        %v1128 = vpop.f32.mrb[0].mxu0
        %v1129 = vadd.f32 0.0, %v1128
        %v1130 = vpop.f32.mrb[0].mxu0
        %v1131 = vpop.f32.mrb[0].mxu0
        %v1132 = vadd.f32 0.0, %v1131
        %v1133 = vpop.f32.mrb[0].mxu0
        %1134 = vmatprep.mubr.bf16.mxu0 %v818
        %1135 = vmatmul.mubr.bf16.gmra.mrb[0].mxu0 %v817
        %v1136 = vpop.f32.mrb[0].mxu0
        %v1137 = vadd.f32 0.0, %v1136
        %v1138 = vpop.f32.mrb[0].mxu0
        %v1139 = vpop.f32.mrb[0].mxu0
        %v1140 = vadd.f32 0.0, %v1139
        %v1141 = vpop.f32.mrb[0].mxu0
        %1142 = vmatprep.mubr.bf16.mxu0 %v821
        %1143 = vmatmul.mubr.bf16.gmra.mrb[0].mxu0 %v820
        %v1144 = vpop.f32.mrb[0].mxu0
        %v1145 = vadd.f32 0.0, %v1144
        %v1146 = vpop.f32.mrb[0].mxu0
        %v1147 = vpop.f32.mrb[0].mxu0
        %v1148 = vadd.f32 0.0, %v1147
        %v1149 = vpop.f32.mrb[0].mxu0
        %1150 = vmatprep.mubr.bf16.mxu0 %v824
        %1151 = vmatmul.mubr.bf16.gmra.mrb[0].mxu0 %v823
        %v1152 = vpop.f32.mrb[0].mxu0
        %v1153 = vadd.f32 0.0, %v1152
        %v1154 = vpop.f32.mrb[0].mxu0
        %v1155 = vpop.f32.mrb[0].mxu0
        %v1156 = vadd.f32 0.0, %v1155
        %v1157 = vpop.f32.mrb[0].mxu0
        %1158 = vmatprep.mubr.bf16.mxu0 %v827
        %1159 = vmatmul.mubr.bf16.gmra.mrb[0].mxu0 %v826
        %v1160 = vpop.f32.mrb[0].mxu0
        %v1161 = vadd.f32 0.0, %v1160
        %v1162 = vpop.f32.mrb[0].mxu0
        %v1163 = vpop.f32.mrb[0].mxu0
        %v1164 = vadd.f32 0.0, %v1163
        %v1165 = vpop.f32.mrb[0].mxu0
        %1166 = vmatprep.mubr.bf16.mxu0 %v830
        %1167 = vmatmul.mubr.bf16.gmra.mrb[0].mxu0 %v829
        %v1168 = vpop.f32.mrb[0].mxu0
        %v1169 = vadd.f32 0.0, %v1168
        %v1170 = vpop.f32.mrb[0].mxu0
        %v1171 = vpop.f32.mrb[0].mxu0
        %v1172 = vadd.f32 0.0, %v1171
        %v1173 = vpop.f32.mrb[0].mxu0
        %1174 = vmatprep.mubr.bf16.mxu0 %v833
        %1175 = vmatmul.mubr.bf16.gmra.mrb[0].mxu0 %v832
        %v1176 = vpop.f32.mrb[0].mxu0
        %v1177 = vadd.f32 0.0, %v1176
        %v1178 = vpop.f32.mrb[0].mxu0
        %v1179 = vpop.f32.mrb[0].mxu0
        %v1180 = vadd.f32 0.0, %v1179
        %v1181 = vpop.f32.mrb[0].mxu0
        %1182 = vmatprep.mubr.bf16.mxu0 %v836
        %1183 = vmatmul.mubr.bf16.gmra.mrb[0].mxu0 %v835
        %v1184 = vpop.f32.mrb[0].mxu0
        %v1185 = vadd.f32 0.0, %v1184
        %v1186 = vpop.f32.mrb[0].mxu0
        %v1187 = vpop.f32.mrb[0].mxu0
        %v1188 = vadd.f32 0.0, %v1187
        %v1189 = vpop.f32.mrb[0].mxu0
        %1190 = vdwg.mxu0
        %1191 = vmatprep.subr.bf16.mxu0 0
        %1192 = vmatpush1.bf16.msra.mxu0 %v998
        %1193 = vmatprep.subr.bf16.mxu0 0
        %1194 = vmatpush1.bf16.msra.mxu0 %v999
        %1195 = vmatprep.subr.bf16.mxu0 0
        %1196 = vmatpush1.bf16.msra.mxu0 %v1000
        %1197 = vmatprep.subr.bf16.mxu0 0
        %1198 = vmatpush1.bf16.msra.mxu0 %v1001
        %1199 = vmatprep.subr.bf16.mxu0 0
        %1200 = vmatpush1.bf16.msra.mxu0 %v1002
        %1201 = vmatprep.subr.bf16.mxu0 0
        %1202 = vmatpush1.bf16.msra.mxu0 %v1003
        %1203 = vmatprep.subr.bf16.mxu0 0
        %1204 = vmatpush1.bf16.msra.mxu0 %v1004
        %1205 = vmatprep.subr.bf16.mxu0 0
        %1206 = vmatpush1.bf16.msra.mxu0 %v1005
        %1207 = vmatprep.subr.bf16.mxu0 0
        %1208 = vmatpush1.bf16.msra.mxu0 0
        %1209 = vmatprep.subr.bf16.mxu0 0
        %1210 = vmatpush1.bf16.msra.mxu0 0
        %1211 = vmatprep.subr.bf16.mxu0 0
        %1212 = vmatpush1.bf16.msra.mxu0 0
        %1213 = vmatprep.subr.bf16.mxu0 0
        %1214 = vmatpush1.bf16.msra.mxu0 0
        %1215 = vmatprep.subr.bf16.mxu0 0
        %1216 = vmatpush1.bf16.msra.mxu0 0
        %1217 = vmatprep.subr.bf16.mxu0 0
        %1218 = vmatpush1.bf16.msra.mxu0 0
        %1219 = vmatprep.subr.bf16.mxu0 0
        %1220 = vmatpush1.bf16.msra.mxu0 0
        %1221 = vmatprep.subr.bf16.mxu0 0
        %1222 = vmatpush1.bf16.msra.mxu0 0
        %1223 = vmatprep.mubr.bf16.mxu0 0
        %1224 = vmatmul.mubr.bf16.gmra.mrb[0].mxu0 %v792
        %v1225 = vpop.f32.mrb[0].mxu0
        %v1226 = vadd.f32 %v1065, %v1225
        %v1227 = vpop.f32.mrb[0].mxu0
        %v1228 = vpop.f32.mrb[0].mxu0
        %v1229 = vadd.f32 %v1068, %v1228
        %v1230 = vpop.f32.mrb[0].mxu0
        %1231 = vmatprep.mubr.bf16.mxu0 0
        %1232 = vmatmul.mubr.bf16.gmra.mrb[0].mxu0 %v795
        %v1233 = vpop.f32.mrb[0].mxu0
        %v1234 = vadd.f32 %v1073, %v1233
        %v1235 = vpop.f32.mrb[0].mxu0
        %v1236 = vpop.f32.mrb[0].mxu0
        %v1237 = vadd.f32 %v1076, %v1236
        %v1238 = vpop.f32.mrb[0].mxu0
        %1239 = vmatprep.mubr.bf16.mxu0 0
        %1240 = vmatmul.mubr.bf16.gmra.mrb[0].mxu0 %v798
        %v1241 = vpop.f32.mrb[0].mxu0
        %v1242 = vadd.f32 %v1081, %v1241
        %v1243 = vpop.f32.mrb[0].mxu0
        %v1244 = vpop.f32.mrb[0].mxu0
        %v1245 = vadd.f32 %v1084, %v1244
        %v1246 = vpop.f32.mrb[0].mxu0
        %1247 = vmatprep.mubr.bf16.mxu0 0
        %1248 = vmatmul.mubr.bf16.gmra.mrb[0].mxu0 %v801
        %v1249 = vpop.f32.mrb[0].mxu0
        %v1250 = vadd.f32 %v1089, %v1249
        %v1251 = vpop.f32.mrb[0].mxu0
        %v1252 = vpop.f32.mrb[0].mxu0
        %v1253 = vadd.f32 %v1092, %v1252
        %v1254 = vpop.f32.mrb[0].mxu0
        %1255 = vmatprep.mubr.bf16.mxu0 0
        %1256 = vmatmul.mubr.bf16.gmra.mrb[0].mxu0 %v804
        %v1257 = vpop.f32.mrb[0].mxu0
        %v1258 = vadd.f32 %v1097, %v1257
        %v1259 = vpop.f32.mrb[0].mxu0
        %v1260 = vpop.f32.mrb[0].mxu0
        %v1261 = vadd.f32 %v1100, %v1260
        %v1262 = vpop.f32.mrb[0].mxu0
        %1263 = vmatprep.mubr.bf16.mxu0 0
        %1264 = vmatmul.mubr.bf16.gmra.mrb[0].mxu0 %v807
        %v1265 = vpop.f32.mrb[0].mxu0
        %v1266 = vadd.f32 %v1105, %v1265
        %v1267 = vpop.f32.mrb[0].mxu0
        %v1268 = vpop.f32.mrb[0].mxu0
        %v1269 = vadd.f32 %v1108, %v1268
        %v1270 = vpop.f32.mrb[0].mxu0
        %1271 = vmatprep.mubr.bf16.mxu0 0
        %1272 = vmatmul.mubr.bf16.gmra.mrb[0].mxu0 %v810
        %v1273 = vpop.f32.mrb[0].mxu0
        %v1274 = vadd.f32 %v1113, %v1273
        %v1275 = vpop.f32.mrb[0].mxu0
        %v1276 = vpop.f32.mrb[0].mxu0
        %v1277 = vadd.f32 %v1116, %v1276
        %v1278 = vpop.f32.mrb[0].mxu0
        %1279 = vmatprep.mubr.bf16.mxu0 0
        %1280 = vmatmul.mubr.bf16.gmra.mrb[0].mxu0 %v813
        %v1281 = vpop.f32.mrb[0].mxu0
        %v1282 = vadd.f32 %v1121, %v1281
        %v1283 = vpop.f32.mrb[0].mxu0
        %v1284 = vpop.f32.mrb[0].mxu0
        %v1285 = vadd.f32 %v1124, %v1284
        %v1286 = vpop.f32.mrb[0].mxu0
        %1287 = vmatprep.mubr.bf16.mxu0 0
        %1288 = vmatmul.mubr.bf16.gmra.mrb[0].mxu0 %v816
        %v1289 = vpop.f32.mrb[0].mxu0
        %v1290 = vadd.f32 %v1129, %v1289
        %v1291 = vpop.f32.mrb[0].mxu0
        %v1292 = vpop.f32.mrb[0].mxu0
        %v1293 = vadd.f32 %v1132, %v1292
        %v1294 = vpop.f32.mrb[0].mxu0
        %1295 = vmatprep.mubr.bf16.mxu0 0
        %1296 = vmatmul.mubr.bf16.gmra.mrb[0].mxu0 %v819
        %v1297 = vpop.f32.mrb[0].mxu0
        %v1298 = vadd.f32 %v1137, %v1297
        %v1299 = vpop.f32.mrb[0].mxu0
        %v1300 = vpop.f32.mrb[0].mxu0
        %v1301 = vadd.f32 %v1140, %v1300
        %v1302 = vpop.f32.mrb[0].mxu0
        %1303 = vmatprep.mubr.bf16.mxu0 0
        %1304 = vmatmul.mubr.bf16.gmra.mrb[0].mxu0 %v822
        %v1305 = vpop.f32.mrb[0].mxu0
        %v1306 = vadd.f32 %v1145, %v1305
        %v1307 = vpop.f32.mrb[0].mxu0
        %v1308 = vpop.f32.mrb[0].mxu0
        %v1309 = vadd.f32 %v1148, %v1308
        %v1310 = vpop.f32.mrb[0].mxu0
        %1311 = vmatprep.mubr.bf16.mxu0 0
        %1312 = vmatmul.mubr.bf16.gmra.mrb[0].mxu0 %v825
        %v1313 = vpop.f32.mrb[0].mxu0
        %v1314 = vadd.f32 %v1153, %v1313
        %v1315 = vpop.f32.mrb[0].mxu0
        %v1316 = vpop.f32.mrb[0].mxu0
        %v1317 = vadd.f32 %v1156, %v1316
        %v1318 = vpop.f32.mrb[0].mxu0
        %1319 = vmatprep.mubr.bf16.mxu0 0
        %1320 = vmatmul.mubr.bf16.gmra.mrb[0].mxu0 %v828
        %v1321 = vpop.f32.mrb[0].mxu0
        %v1322 = vadd.f32 %v1161, %v1321
        %v1323 = vpop.f32.mrb[0].mxu0
        %v1324 = vpop.f32.mrb[0].mxu0
        %v1325 = vadd.f32 %v1164, %v1324
        %v1326 = vpop.f32.mrb[0].mxu0
        %1327 = vmatprep.mubr.bf16.mxu0 0
        %1328 = vmatmul.mubr.bf16.gmra.mrb[0].mxu0 %v831
        %v1329 = vpop.f32.mrb[0].mxu0
        %v1330 = vadd.f32 %v1169, %v1329
        %v1331 = vpop.f32.mrb[0].mxu0
        %v1332 = vpop.f32.mrb[0].mxu0
        %v1333 = vadd.f32 %v1172, %v1332
        %v1334 = vpop.f32.mrb[0].mxu0
        %1335 = vmatprep.mubr.bf16.mxu0 0
        %1336 = vmatmul.mubr.bf16.gmra.mrb[0].mxu0 %v834
        %v1337 = vpop.f32.mrb[0].mxu0
        %v1338 = vadd.f32 %v1177, %v1337
        %v1339 = vpop.f32.mrb[0].mxu0
        %v1340 = vpop.f32.mrb[0].mxu0
        %v1341 = vadd.f32 %v1180, %v1340
        %v1342 = vpop.f32.mrb[0].mxu0
        %1343 = vmatprep.mubr.bf16.mxu0 0
        %1344 = vmatmul.mubr.bf16.gmra.mrb[0].mxu0 %v837
        %v1345 = vpop.f32.mrb[0].mxu0
        %v1346 = vadd.f32 %v1185, %v1345
        %v1347 = vpop.f32.mrb[0].mxu0
        %v1348 = vpop.f32.mrb[0].mxu0
        %v1349 = vadd.f32 %v1188, %v1348
        %v1350 = vpop.f32.mrb[0].mxu0
        %1351 = vdwg.mxu0
        %v1352 = vadd.f32 %v486, %v1226
        %v1353 = vadd.f32 %v487, %v1229
        %v1354 = vadd.f32 %v488, %v1234
        %v1355 = vadd.f32 %v489, %v1237
        %v1356 = vadd.f32 %v490, %v1242
        %v1357 = vadd.f32 %v491, %v1245
        %v1358 = vadd.f32 %v492, %v1250
        %v1359 = vadd.f32 %v493, %v1253
        %v1360 = vadd.f32 %v494, %v1258
        %v1361 = vadd.f32 %v495, %v1261
        %v1362 = vadd.f32 %v496, %v1266
        %v1363 = vadd.f32 %v497, %v1269
        %v1364 = vadd.f32 %v498, %v1274
        %v1365 = vadd.f32 %v499, %v1277
        %v1366 = vadd.f32 %v500, %v1282
        %v1367 = vadd.f32 %v501, %v1285
        %v1368 = vadd.f32 %v502, %v1290
        %v1369 = vadd.f32 %v503, %v1293
        %v1370 = vadd.f32 %v504, %v1298
        %v1371 = vadd.f32 %v505, %v1301
        %v1372 = vadd.f32 %v506, %v1306
        %v1373 = vadd.f32 %v507, %v1309
        %v1374 = vadd.f32 %v508, %v1314
        %v1375 = vadd.f32 %v509, %v1317
        %v1376 = vadd.f32 %v510, %v1322
        %v1377 = vadd.f32 %v511, %v1325
        %v1378 = vadd.f32 %v512, %v1330
        %v1379 = vadd.f32 %v513, %v1333
        %v1380 = vadd.f32 %v514, %v1338
        %v1381 = vadd.f32 %v515, %v1341
        %v1382 = vadd.f32 %v516, %v1346
        %v1383 = vadd.f32 %v517, %v1349
        %1384 = vst [vmem:[%s447] sm:$0xff] %v1352
        %1385 = vst [vmem:[%s447 + $0x8] sm:$0xff] %v1353
        %1386 = vst [vmem:[%s447 + $0x10] sm:$0xff] %v1354
        %1387 = vst [vmem:[%s447 + $0x18] sm:$0xff] %v1355
        %1388 = vst [vmem:[%s447 + $0x20] sm:$0xff] %v1356
        %1389 = vst [vmem:[%s447 + $0x28] sm:$0xff] %v1357
        %1390 = vst [vmem:[%s447 + $0x30] sm:$0xff] %v1358
        %1391 = vst [vmem:[%s447 + $0x38] sm:$0xff] %v1359
        %1392 = vst [vmem:[%s447 + $0x40] sm:$0xff] %v1360
        %1393 = vst [vmem:[%s447 + $0x48] sm:$0xff] %v1361
        %1394 = vst [vmem:[%s447 + $0x50] sm:$0xff] %v1362
        %1395 = vst [vmem:[%s447 + $0x58] sm:$0xff] %v1363
        %1396 = vst [vmem:[%s447 + $0x60] sm:$0xff] %v1364
        %1397 = vst [vmem:[%s447 + $0x68] sm:$0xff] %v1365
        %1398 = vst [vmem:[%s447 + $0x70] sm:$0xff] %v1366
        %1399 = vst [vmem:[%s447 + $0x78] sm:$0xff] %v1367
        %1400 = vst [vmem:[%s447 + $0x80] sm:$0xff] %v1368
        %1401 = vst [vmem:[%s447 + $0x88] sm:$0xff] %v1369
        %1402 = vst [vmem:[%s447 + $0x90] sm:$0xff] %v1370
        %1403 = vst [vmem:[%s447 + $0x98] sm:$0xff] %v1371
        %1404 = vst [vmem:[%s447 + $0xa0] sm:$0xff] %v1372
        %1405 = vst [vmem:[%s447 + $0xa8] sm:$0xff] %v1373
        %1406 = vst [vmem:[%s447 + $0xb0] sm:$0xff] %v1374
        %1407 = vst [vmem:[%s447 + $0xb8] sm:$0xff] %v1375
        %1408 = vst [vmem:[%s447 + $0xc0] sm:$0xff] %v1376
        %1409 = vst [vmem:[%s447 + $0xc8] sm:$0xff] %v1377
        %1410 = vst [vmem:[%s447 + $0xd0] sm:$0xff] %v1378
        %1411 = vst [vmem:[%s447 + $0xd8] sm:$0xff] %v1379
        %1412 = vst [vmem:[%s447 + $0xe0] sm:$0xff] %v1380
        %1413 = vst [vmem:[%s447 + $0xe8] sm:$0xff] %v1381
        %1414 = vst [vmem:[%s447 + $0xf0] sm:$0xff] %v1382
        %1415 = vst [vmem:[%s447 + $0xf8] sm:$0xff] %v1383
        %p1416 = scmp.eq.s32.totalorder %s22, 2
        // Predicated region
        $region67: #{simple_cnn_forward.7} parent=57 // pred_check
          %p1417 = pneg %p1416
        $region68: #{simple_cnn_forward.7} parent=57 // pred_check_branch
          %1419 = sbr.rel (%p1417) target = $region70
        $region69: #{simple_cnn_forward.7} parent=57 // pred_region
          %v1420 = vld [vmem:[%s447] sm:$0xff]
          %v1421 = vld [vmem:[%s447 + $0x8] sm:$0xff]
          %v1422 = vld [vmem:[%s447 + $0x10] sm:$0xff]
          %v1423 = vld [vmem:[%s447 + $0x18] sm:$0xff]
          %v1424 = vld [vmem:[%s447 + $0x20] sm:$0xff]
          %v1425 = vld [vmem:[%s447 + $0x28] sm:$0xff]
          %v1426 = vld [vmem:[%s447 + $0x30] sm:$0xff]
          %v1427 = vld [vmem:[%s447 + $0x38] sm:$0xff]
          %v1428 = vld [vmem:[%s447 + $0x40] sm:$0xff]
          %v1429 = vld [vmem:[%s447 + $0x48] sm:$0xff]
          %v1430 = vld [vmem:[%s447 + $0x50] sm:$0xff]
          %v1431 = vld [vmem:[%s447 + $0x58] sm:$0xff]
          %v1432 = vld [vmem:[%s447 + $0x60] sm:$0xff]
          %v1433 = vld [vmem:[%s447 + $0x68] sm:$0xff]
          %v1434 = vld [vmem:[%s447 + $0x70] sm:$0xff]
          %v1435 = vld [vmem:[%s447 + $0x78] sm:$0xff]
          %v1436 = vld [vmem:[%s447 + $0x80] sm:$0xff]
          %v1437 = vld [vmem:[%s447 + $0x88] sm:$0xff]
          %v1438 = vld [vmem:[%s447 + $0x90] sm:$0xff]
          %v1439 = vld [vmem:[%s447 + $0x98] sm:$0xff]
          %v1440 = vld [vmem:[%s447 + $0xa0] sm:$0xff]
          %v1441 = vld [vmem:[%s447 + $0xa8] sm:$0xff]
          %v1442 = vld [vmem:[%s447 + $0xb0] sm:$0xff]
          %v1443 = vld [vmem:[%s447 + $0xb8] sm:$0xff]
          %v1444 = vld [vmem:[%s447 + $0xc0] sm:$0xff]
          %v1445 = vld [vmem:[%s447 + $0xc8] sm:$0xff]
          %v1446 = vld [vmem:[%s447 + $0xd0] sm:$0xff]
          %v1447 = vld [vmem:[%s447 + $0xd8] sm:$0xff]
          %v1448 = vld [vmem:[%s447 + $0xe0] sm:$0xff]
          %v1449 = vld [vmem:[%s447 + $0xe8] sm:$0xff]
          %v1450 = vld [vmem:[%s447 + $0xf0] sm:$0xff]
          %v1451 = vld [vmem:[%s447 + $0xf8] sm:$0xff]
          %v1452 = vld [vmem:[%s436] sm:$0x1]
          %v1454 = vlaneseq
          %v1455 = vshrl.u32 %v1454, 7
          %v1456 = vsub.s32 0, %v1455
          %v1457 = vrot.slane %v1452, %v1456
          %v1459 = vmul.f32 %v1420, %v1457
          %v1460 = vmul.f32 %v1421, %v1457
          %v1461 = vmul.f32 %v1422, %v1457
          %v1462 = vmul.f32 %v1423, %v1457
          %v1463 = vmul.f32 %v1424, %v1457
          %v1464 = vmul.f32 %v1425, %v1457
          %v1465 = vmul.f32 %v1426, %v1457
          %v1466 = vmul.f32 %v1427, %v1457
          %v1467 = vmul.f32 %v1428, %v1457
          %v1468 = vmul.f32 %v1429, %v1457
          %v1469 = vmul.f32 %v1430, %v1457
          %v1470 = vmul.f32 %v1431, %v1457
          %v1471 = vmul.f32 %v1432, %v1457
          %v1472 = vmul.f32 %v1433, %v1457
          %v1473 = vmul.f32 %v1434, %v1457
          %v1474 = vmul.f32 %v1435, %v1457
          %v1475 = vmul.f32 %v1436, %v1457
          %v1476 = vmul.f32 %v1437, %v1457
          %v1477 = vmul.f32 %v1438, %v1457
          %v1478 = vmul.f32 %v1439, %v1457
          %v1479 = vmul.f32 %v1440, %v1457
          %v1480 = vmul.f32 %v1441, %v1457
          %v1481 = vmul.f32 %v1442, %v1457
          %v1482 = vmul.f32 %v1443, %v1457
          %v1483 = vmul.f32 %v1444, %v1457
          %v1484 = vmul.f32 %v1445, %v1457
          %v1485 = vmul.f32 %v1446, %v1457
          %v1486 = vmul.f32 %v1447, %v1457
          %v1487 = vmul.f32 %v1448, %v1457
          %v1488 = vmul.f32 %v1449, %v1457
          %v1489 = vmul.f32 %v1450, %v1457
          %v1490 = vmul.f32 %v1451, %v1457
          %v1491 = vld [vmem:[%s439] sm:$0x1]
          %v1493 = vlaneseq
          %v1494 = vshrl.u32 %v1493, 7
          %v1495 = vsub.s32 0, %v1494
          %v1496 = vrot.slane %v1491, %v1495
          %v1498 = vadd.f32 %v1459, %v1496
          %v1499 = vadd.f32 %v1460, %v1496
          %v1500 = vadd.f32 %v1461, %v1496
          %v1501 = vadd.f32 %v1462, %v1496
          %v1502 = vadd.f32 %v1463, %v1496
          %v1503 = vadd.f32 %v1464, %v1496
          %v1504 = vadd.f32 %v1465, %v1496
          %v1505 = vadd.f32 %v1466, %v1496
          %v1506 = vadd.f32 %v1467, %v1496
          %v1507 = vadd.f32 %v1468, %v1496
          %v1508 = vadd.f32 %v1469, %v1496
          %v1509 = vadd.f32 %v1470, %v1496
          %v1510 = vadd.f32 %v1471, %v1496
          %v1511 = vadd.f32 %v1472, %v1496
          %v1512 = vadd.f32 %v1473, %v1496
          %v1513 = vadd.f32 %v1474, %v1496
          %v1514 = vadd.f32 %v1475, %v1496
          %v1515 = vadd.f32 %v1476, %v1496
          %v1516 = vadd.f32 %v1477, %v1496
          %v1517 = vadd.f32 %v1478, %v1496
          %v1518 = vadd.f32 %v1479, %v1496
          %v1519 = vadd.f32 %v1480, %v1496
          %v1520 = vadd.f32 %v1481, %v1496
          %v1521 = vadd.f32 %v1482, %v1496
          %v1522 = vadd.f32 %v1483, %v1496
          %v1523 = vadd.f32 %v1484, %v1496
          %v1524 = vadd.f32 %v1485, %v1496
          %v1525 = vadd.f32 %v1486, %v1496
          %v1526 = vadd.f32 %v1487, %v1496
          %v1527 = vadd.f32 %v1488, %v1496
          %v1528 = vadd.f32 %v1489, %v1496
          %v1529 = vadd.f32 %v1490, %v1496
          %v1530 = vmax.f32 %v1498, 0.0
          %v1531 = vmax.f32 %v1499, 0.0
          %v1532 = vmax.f32 %v1500, 0.0
          %v1533 = vmax.f32 %v1501, 0.0
          %v1534 = vmax.f32 %v1502, 0.0
          %v1535 = vmax.f32 %v1503, 0.0
          %v1536 = vmax.f32 %v1504, 0.0
          %v1537 = vmax.f32 %v1505, 0.0
          %v1538 = vmax.f32 %v1506, 0.0
          %v1539 = vmax.f32 %v1507, 0.0
          %v1540 = vmax.f32 %v1508, 0.0
          %v1541 = vmax.f32 %v1509, 0.0
          %v1542 = vmax.f32 %v1510, 0.0
          %v1543 = vmax.f32 %v1511, 0.0
          %v1544 = vmax.f32 %v1512, 0.0
          %v1545 = vmax.f32 %v1513, 0.0
          %v1546 = vmax.f32 %v1514, 0.0
          %v1547 = vmax.f32 %v1515, 0.0
          %v1548 = vmax.f32 %v1516, 0.0
          %v1549 = vmax.f32 %v1517, 0.0
          %v1550 = vmax.f32 %v1518, 0.0
          %v1551 = vmax.f32 %v1519, 0.0
          %v1552 = vmax.f32 %v1520, 0.0
          %v1553 = vmax.f32 %v1521, 0.0
          %v1554 = vmax.f32 %v1522, 0.0
          %v1555 = vmax.f32 %v1523, 0.0
          %v1556 = vmax.f32 %v1524, 0.0
          %v1557 = vmax.f32 %v1525, 0.0
          %v1558 = vmax.f32 %v1526, 0.0
          %v1559 = vmax.f32 %v1527, 0.0
          %v1560 = vmax.f32 %v1528, 0.0
          %v1561 = vmax.f32 %v1529, 0.0
          %1562 = vst [vmem:[%s447] sm:$0xff] %v1530
          %1563 = vst [vmem:[%s447 + $0x8] sm:$0xff] %v1531
          %1564 = vst [vmem:[%s447 + $0x10] sm:$0xff] %v1532
          %1565 = vst [vmem:[%s447 + $0x18] sm:$0xff] %v1533
          %1566 = vst [vmem:[%s447 + $0x20] sm:$0xff] %v1534
          %1567 = vst [vmem:[%s447 + $0x28] sm:$0xff] %v1535
          %1568 = vst [vmem:[%s447 + $0x30] sm:$0xff] %v1536
          %1569 = vst [vmem:[%s447 + $0x38] sm:$0xff] %v1537
          %1570 = vst [vmem:[%s447 + $0x40] sm:$0xff] %v1538
          %1571 = vst [vmem:[%s447 + $0x48] sm:$0xff] %v1539
          %1572 = vst [vmem:[%s447 + $0x50] sm:$0xff] %v1540
          %1573 = vst [vmem:[%s447 + $0x58] sm:$0xff] %v1541
          %1574 = vst [vmem:[%s447 + $0x60] sm:$0xff] %v1542
          %1575 = vst [vmem:[%s447 + $0x68] sm:$0xff] %v1543
          %1576 = vst [vmem:[%s447 + $0x70] sm:$0xff] %v1544
          %1577 = vst [vmem:[%s447 + $0x78] sm:$0xff] %v1545
          %1578 = vst [vmem:[%s447 + $0x80] sm:$0xff] %v1546
          %1579 = vst [vmem:[%s447 + $0x88] sm:$0xff] %v1547
          %1580 = vst [vmem:[%s447 + $0x90] sm:$0xff] %v1548
          %1581 = vst [vmem:[%s447 + $0x98] sm:$0xff] %v1549
          %1582 = vst [vmem:[%s447 + $0xa0] sm:$0xff] %v1550
          %1583 = vst [vmem:[%s447 + $0xa8] sm:$0xff] %v1551
          %1584 = vst [vmem:[%s447 + $0xb0] sm:$0xff] %v1552
          %1585 = vst [vmem:[%s447 + $0xb8] sm:$0xff] %v1553
          %1586 = vst [vmem:[%s447 + $0xc0] sm:$0xff] %v1554
          %1587 = vst [vmem:[%s447 + $0xc8] sm:$0xff] %v1555
          %1588 = vst [vmem:[%s447 + $0xd0] sm:$0xff] %v1556
          %1589 = vst [vmem:[%s447 + $0xd8] sm:$0xff] %v1557
          %1590 = vst [vmem:[%s447 + $0xe0] sm:$0xff] %v1558
          %1591 = vst [vmem:[%s447 + $0xe8] sm:$0xff] %v1559
          %1592 = vst [vmem:[%s447 + $0xf0] sm:$0xff] %v1560
          %1593 = vst [vmem:[%s447 + $0xf8] sm:$0xff] %v1561
        $region70: #{simple_cnn_forward.7} parent=57 // pred_fallthru
          _
        %s1594 = smul.u32 32, %s20
        %p1595 = scmp.lt.s32.totalorder %s1594, 63
        %s1596 = scalar_select %p1595, %s1594, 63
        %p1597 = scmp.lt.s32.totalorder %s21, 0
        %s1598 = scalar_select %p1597, %s21, 0
        %s1599 = sadd.s32 %s1598, %s1596
        %s1600 = smul.addr %s1599, 8
        %s1601 = scalar_lea.vmem %s4, %s1600
        // Predicated region
        $region71: #{simple_cnn_forward.7} parent=57 // pred_check
          %p1602 = pneg %p162
        $region72: #{simple_cnn_forward.7} parent=57 // pred_check_branch
          %1604 = sbr.rel (%p1602) target = $region74
        $region73: #{simple_cnn_forward.7} parent=57 // pred_region
          %s1605 = smul.u32 32, %s20
        $region74: #{simple_cnn_forward.7} parent=57 // pred_fallthru
          _
      $region58: #{simple_cnn_forward.7} parent=5 // pred_fallthru
        _
      %p1606 = scmp.le.s32.totalorder 2, %s10
      // Predicated region
      $region75: #{simple_cnn_forward.7} parent=5 // pred_check
        %p1607 = pneg %p1606
      $region76: #{simple_cnn_forward.7} parent=5 // pred_check_branch
        %1609 = sbr.rel (%p1607) target = $region78
      $region77: #{simple_cnn_forward.7} parent=5 // pred_region
        %s1610 = ssub.s32 %s10, 2
        // Predicated region
        $region79: #{simple_cnn_forward.7} parent=77 // pred_check
          %p1611 = pneg %p168
        $region80: #{simple_cnn_forward.7} parent=77 // pred_check_branch
          %1613 = sbr.rel (%p1611) target = $region82
        $region81: #{simple_cnn_forward.7} parent=77 // pred_region
          %s1614 = smul.u32 32, %s23
          %p1615 = scmp.lt.s32.totalorder %s1614, 63
          %s1616 = scalar_select %p1615, %s1614, 63
          %p1617 = scmp.lt.s32.totalorder %s24, 0
          %s1618 = scalar_select %p1617, %s24, 0
          %s1619 = sadd.s32 %s1618, %s1616
          %s1620 = smul.addr %s1619, 8
          %s1621 = scalar_lea.vmem %s4, %s1620
        $region82: #{simple_cnn_forward.7} parent=77 // pred_fallthru
          _
      $region78: #{simple_cnn_forward.7} parent=5 // pred_fallthru
        _
    $region6: #{simple_cnn_forward.7} parent=1 // loop_footer
      %s14 = sadd.s32 1, %s10
    $region7: #{simple_cnn_forward.7} parent=1 // loop_footer_branch
      %9 = sbr.rel target = $region3
    $region8: #{simple_cnn_forward.7} parent=1 // loop_exit
      _

// kernel: simple_cnn_forward.8
$region0: #{simple_cnn_forward.8}
  #allocation0 [shape = 'u32[]', space=smem, size = 0x4, offset = 0x4, fixed_abs, tag = 'smem constant byte address 0x4 - core index']
  #allocation1 [shape = 'u32[144,128]{1,0:T(1,128)}', space=vmem, size = 0x12000, scoped, tag = 'internal scratch']
  %s0 = inlined_call_operand.vmem [shape: f32[128,128], index: 0, kind: input, shape index: {}]
  %s1 = inlined_call_operand.vmem [shape: f32[128,128], index: 1, kind: input, shape index: {}]
  %s2 = inlined_call_operand.vmem [shape: f32[128,128], index: 2, kind: input, shape index: {}]
  %s3 = inlined_call_operand.vmem [shape: f32[128,128], index: 3, kind: input, shape index: {}]
  %s4 = inlined_call_operand.vmem [shape: f32[128,128], index: 4, kind: output, shape index: {}]
  %s5 = sld [smem:[#allocation0]]
  $region26: #{simple_cnn_forward.8} parent=0
    _
  %s7 = ssub.s32 1, %s5
  %s8 = scalar_select 0, %s7, %s5
  // Predicated region
  $region2: #{simple_cnn_forward.8} parent=0 // pred_check
    _
  $region3: #{simple_cnn_forward.8} parent=0 // pred_check_branch
    %10 = sbr.rel (0) target = $region5
  $region4: #{simple_cnn_forward.8} parent=0 // pred_region
    _
  $region5: #{simple_cnn_forward.8} parent=0 // pred_fallthru
    _
  // Predicated region
  $region6: #{simple_cnn_forward.8} parent=0 // pred_check
    _
  $region7: #{simple_cnn_forward.8} parent=0 // pred_check_branch
    %12 = sbr.rel (0) target = $region9
  $region8: #{simple_cnn_forward.8} parent=0 // pred_region
    _
  $region9: #{simple_cnn_forward.8} parent=0 // pred_fallthru
    _
  // Predicated region
  $region10: #{simple_cnn_forward.8} parent=0 // pred_check
    _
  $region11: #{simple_cnn_forward.8} parent=0 // pred_check_branch
    %14 = sbr.rel (0) target = $region13
  $region12: #{simple_cnn_forward.8} parent=0 // pred_region
    _
  $region13: #{simple_cnn_forward.8} parent=0 // pred_fallthru
    _
  // Predicated region
  $region14: #{simple_cnn_forward.8} parent=0 // pred_check
    _
  $region15: #{simple_cnn_forward.8} parent=0 // pred_check_branch
    %16 = sbr.rel (0) target = $region17
  $region16: #{simple_cnn_forward.8} parent=0 // pred_region
    _
  $region17: #{simple_cnn_forward.8} parent=0 // pred_fallthru
    _
  %v17 = vld [vmem:[%s0] sm:$0xff]
  %v18 = vld [vmem:[%s0 + $0x8] sm:$0xff]
  %v19 = vld [vmem:[%s0 + $0x10] sm:$0xff]
  %v20 = vld [vmem:[%s0 + $0x18] sm:$0xff]
  %v21 = vld [vmem:[%s0 + $0x20] sm:$0xff]
  %v22 = vld [vmem:[%s0 + $0x28] sm:$0xff]
  %v23 = vld [vmem:[%s0 + $0x30] sm:$0xff]
  %v24 = vld [vmem:[%s0 + $0x38] sm:$0xff]
  %v25 = vld [vmem:[%s0 + $0x40] sm:$0xff]
  %v26 = vld [vmem:[%s0 + $0x48] sm:$0xff]
  %v27 = vld [vmem:[%s0 + $0x50] sm:$0xff]
  %v28 = vld [vmem:[%s0 + $0x58] sm:$0xff]
  %v29 = vld [vmem:[%s0 + $0x60] sm:$0xff]
  %v30 = vld [vmem:[%s0 + $0x68] sm:$0xff]
  %v31 = vld [vmem:[%s0 + $0x70] sm:$0xff]
  %v32 = vld [vmem:[%s0 + $0x78] sm:$0xff]
  %v33 = vld [vmem:[%s1] sm:$0xff]
  %v34 = vld [vmem:[%s1 + $0x8] sm:$0xff]
  %v35 = vld [vmem:[%s1 + $0x10] sm:$0xff]
  %v36 = vld [vmem:[%s1 + $0x18] sm:$0xff]
  %v37 = vld [vmem:[%s1 + $0x20] sm:$0xff]
  %v38 = vld [vmem:[%s1 + $0x28] sm:$0xff]
  %v39 = vld [vmem:[%s1 + $0x30] sm:$0xff]
  %v40 = vld [vmem:[%s1 + $0x38] sm:$0xff]
  %v41 = vld [vmem:[%s1 + $0x40] sm:$0xff]
  %v42 = vld [vmem:[%s1 + $0x48] sm:$0xff]
  %v43 = vld [vmem:[%s1 + $0x50] sm:$0xff]
  %v44 = vld [vmem:[%s1 + $0x58] sm:$0xff]
  %v45 = vld [vmem:[%s1 + $0x60] sm:$0xff]
  %v46 = vld [vmem:[%s1 + $0x68] sm:$0xff]
  %v47 = vld [vmem:[%s1 + $0x70] sm:$0xff]
  %v48 = vld [vmem:[%s1 + $0x78] sm:$0xff]
  %v49 = vmax.f32 %v17, %v33
  %v50 = vmax.f32 %v18, %v34
  %v51 = vmax.f32 %v19, %v35
  %v52 = vmax.f32 %v20, %v36
  %v53 = vmax.f32 %v21, %v37
  %v54 = vmax.f32 %v22, %v38
  %v55 = vmax.f32 %v23, %v39
  %v56 = vmax.f32 %v24, %v40
  %v57 = vmax.f32 %v25, %v41
  %v58 = vmax.f32 %v26, %v42
  %v59 = vmax.f32 %v27, %v43
  %v60 = vmax.f32 %v28, %v44
  %v61 = vmax.f32 %v29, %v45
  %v62 = vmax.f32 %v30, %v46
  %v63 = vmax.f32 %v31, %v47
  %v64 = vmax.f32 %v32, %v48
  %v65 = vld [vmem:[%s2] sm:$0xff]
  %v66 = vld [vmem:[%s2 + $0x8] sm:$0xff]
  %v67 = vld [vmem:[%s2 + $0x10] sm:$0xff]
  %v68 = vld [vmem:[%s2 + $0x18] sm:$0xff]
  %v69 = vld [vmem:[%s2 + $0x20] sm:$0xff]
  %v70 = vld [vmem:[%s2 + $0x28] sm:$0xff]
  %v71 = vld [vmem:[%s2 + $0x30] sm:$0xff]
  %v72 = vld [vmem:[%s2 + $0x38] sm:$0xff]
  %v73 = vld [vmem:[%s2 + $0x40] sm:$0xff]
  %v74 = vld [vmem:[%s2 + $0x48] sm:$0xff]
  %v75 = vld [vmem:[%s2 + $0x50] sm:$0xff]
  %v76 = vld [vmem:[%s2 + $0x58] sm:$0xff]
  %v77 = vld [vmem:[%s2 + $0x60] sm:$0xff]
  %v78 = vld [vmem:[%s2 + $0x68] sm:$0xff]
  %v79 = vld [vmem:[%s2 + $0x70] sm:$0xff]
  %v80 = vld [vmem:[%s2 + $0x78] sm:$0xff]
  %v81 = vld [vmem:[%s3] sm:$0xff]
  %v82 = vld [vmem:[%s3 + $0x8] sm:$0xff]
  %v83 = vld [vmem:[%s3 + $0x10] sm:$0xff]
  %v84 = vld [vmem:[%s3 + $0x18] sm:$0xff]
  %v85 = vld [vmem:[%s3 + $0x20] sm:$0xff]
  %v86 = vld [vmem:[%s3 + $0x28] sm:$0xff]
  %v87 = vld [vmem:[%s3 + $0x30] sm:$0xff]
  %v88 = vld [vmem:[%s3 + $0x38] sm:$0xff]
  %v89 = vld [vmem:[%s3 + $0x40] sm:$0xff]
  %v90 = vld [vmem:[%s3 + $0x48] sm:$0xff]
  %v91 = vld [vmem:[%s3 + $0x50] sm:$0xff]
  %v92 = vld [vmem:[%s3 + $0x58] sm:$0xff]
  %v93 = vld [vmem:[%s3 + $0x60] sm:$0xff]
  %v94 = vld [vmem:[%s3 + $0x68] sm:$0xff]
  %v95 = vld [vmem:[%s3 + $0x70] sm:$0xff]
  %v96 = vld [vmem:[%s3 + $0x78] sm:$0xff]
  %v97 = vmax.f32 %v65, %v81
  %v98 = vmax.f32 %v66, %v82
  %v99 = vmax.f32 %v67, %v83
  %v100 = vmax.f32 %v68, %v84
  %v101 = vmax.f32 %v69, %v85
  %v102 = vmax.f32 %v70, %v86
  %v103 = vmax.f32 %v71, %v87
  %v104 = vmax.f32 %v72, %v88
  %v105 = vmax.f32 %v73, %v89
  %v106 = vmax.f32 %v74, %v90
  %v107 = vmax.f32 %v75, %v91
  %v108 = vmax.f32 %v76, %v92
  %v109 = vmax.f32 %v77, %v93
  %v110 = vmax.f32 %v78, %v94
  %v111 = vmax.f32 %v79, %v95
  %v112 = vmax.f32 %v80, %v96
  %v113 = vmax.f32 %v49, %v97
  %v114 = vmax.f32 %v50, %v98
  %v115 = vmax.f32 %v51, %v99
  %v116 = vmax.f32 %v52, %v100
  %v117 = vmax.f32 %v53, %v101
  %v118 = vmax.f32 %v54, %v102
  %v119 = vmax.f32 %v55, %v103
  %v120 = vmax.f32 %v56, %v104
  %v121 = vmax.f32 %v57, %v105
  %v122 = vmax.f32 %v58, %v106
  %v123 = vmax.f32 %v59, %v107
  %v124 = vmax.f32 %v60, %v108
  %v125 = vmax.f32 %v61, %v109
  %v126 = vmax.f32 %v62, %v110
  %v127 = vmax.f32 %v63, %v111
  %v128 = vmax.f32 %v64, %v112
  %129 = vst [vmem:[%s4] sm:$0xff] %v113
  %130 = vst [vmem:[%s4 + $0x8] sm:$0xff] %v114
  %131 = vst [vmem:[%s4 + $0x10] sm:$0xff] %v115
  %132 = vst [vmem:[%s4 + $0x18] sm:$0xff] %v116
  %133 = vst [vmem:[%s4 + $0x20] sm:$0xff] %v117
  %134 = vst [vmem:[%s4 + $0x28] sm:$0xff] %v118
  %135 = vst [vmem:[%s4 + $0x30] sm:$0xff] %v119
  %136 = vst [vmem:[%s4 + $0x38] sm:$0xff] %v120
  %137 = vst [vmem:[%s4 + $0x40] sm:$0xff] %v121
  %138 = vst [vmem:[%s4 + $0x48] sm:$0xff] %v122
  %139 = vst [vmem:[%s4 + $0x50] sm:$0xff] %v123
  %140 = vst [vmem:[%s4 + $0x58] sm:$0xff] %v124
  %141 = vst [vmem:[%s4 + $0x60] sm:$0xff] %v125
  %142 = vst [vmem:[%s4 + $0x68] sm:$0xff] %v126
  %143 = vst [vmem:[%s4 + $0x70] sm:$0xff] %v127
  %144 = vst [vmem:[%s4 + $0x78] sm:$0xff] %v128
  // Predicated region
  $region18: #{simple_cnn_forward.8} parent=0 // pred_check
    _
  $region19: #{simple_cnn_forward.8} parent=0 // pred_check_branch
    %146 = sbr.rel (0) target = $region21
  $region20: #{simple_cnn_forward.8} parent=0 // pred_region
    _
  $region21: #{simple_cnn_forward.8} parent=0 // pred_fallthru
    _
  // Predicated region
  $region22: #{simple_cnn_forward.8} parent=0 // pred_check
    _
  $region23: #{simple_cnn_forward.8} parent=0 // pred_check_branch
    %148 = sbr.rel (0) target = $region25
  $region24: #{simple_cnn_forward.8} parent=0 // pred_region
    _
  $region25: #{simple_cnn_forward.8} parent=0 // pred_fallthru
    _

// kernel: simple_cnn_forward.9
$region0: #{simple_cnn_forward.9}
  #allocation0 [shape = 'u32[]', space=smem, size = 0x4, offset = 0x4, fixed_abs, tag = 'smem constant byte address 0x4 - core index']
  #allocation1 [shape = 'u32[144,128]{1,0:T(1,128)}', space=vmem, size = 0x12000, scoped, tag = 'internal scratch']
  %s0 = inlined_call_operand.vmem [shape: bf16[128,128], index: 0, kind: input, shape index: {}]
  %s1 = inlined_call_operand.vmem [shape: bf16[128,128], index: 1, kind: input, shape index: {}]
  %s2 = inlined_call_operand.vmem [shape: f32[1,128], index: 2, kind: input, shape index: {}]
  %s3 = inlined_call_operand.vmem [shape: f32[1,128], index: 3, kind: input, shape index: {}]
  %s4 = inlined_call_operand.vmem [shape: f32[128,128], index: 4, kind: output, shape index: {}]
  %s5 = sld [smem:[#allocation0]]
  $region34: #{simple_cnn_forward.9} parent=0
    _
  %s7 = ssub.s32 1, %s5
  %s8 = scalar_select 0, %s7, %s5
  // Predicated region
  $region2: #{simple_cnn_forward.9} parent=0 // pred_check
    _
  $region3: #{simple_cnn_forward.9} parent=0 // pred_check_branch
    %10 = sbr.rel (0) target = $region5
  $region4: #{simple_cnn_forward.9} parent=0 // pred_region
    _
  $region5: #{simple_cnn_forward.9} parent=0 // pred_fallthru
    _
  // Predicated region
  $region6: #{simple_cnn_forward.9} parent=0 // pred_check
    _
  $region7: #{simple_cnn_forward.9} parent=0 // pred_check_branch
    %12 = sbr.rel (0) target = $region9
  $region8: #{simple_cnn_forward.9} parent=0 // pred_region
    _
  $region9: #{simple_cnn_forward.9} parent=0 // pred_fallthru
    _
  // Predicated region
  $region10: #{simple_cnn_forward.9} parent=0 // pred_check
    _
  $region11: #{simple_cnn_forward.9} parent=0 // pred_check_branch
    %14 = sbr.rel (0) target = $region13
  $region12: #{simple_cnn_forward.9} parent=0 // pred_region
    _
  $region13: #{simple_cnn_forward.9} parent=0 // pred_fallthru
    _
  // Predicated region
  $region14: #{simple_cnn_forward.9} parent=0 // pred_check
    _
  $region15: #{simple_cnn_forward.9} parent=0 // pred_check_branch
    %16 = sbr.rel (0) target = $region17
  $region16: #{simple_cnn_forward.9} parent=0 // pred_region
    _
  $region17: #{simple_cnn_forward.9} parent=0 // pred_fallthru
    _
  %p18 = scmp.eq.s32.totalorder 0, 0
  // Predicated region
  $region18: #{simple_cnn_forward.9} parent=0 // pred_check
    %p19 = pneg %p18
  $region19: #{simple_cnn_forward.9} parent=0 // pred_check_branch
    %21 = sbr.rel (%p19) target = $region21
  $region20: #{simple_cnn_forward.9} parent=0 // pred_region
    %22 = vst [vmem:[%s4] sm:$0xff] 0.0
    %23 = vst [vmem:[%s4 + $0x8] sm:$0xff] 0.0
    %24 = vst [vmem:[%s4 + $0x10] sm:$0xff] 0.0
    %25 = vst [vmem:[%s4 + $0x18] sm:$0xff] 0.0
    %26 = vst [vmem:[%s4 + $0x20] sm:$0xff] 0.0
    %27 = vst [vmem:[%s4 + $0x28] sm:$0xff] 0.0
    %28 = vst [vmem:[%s4 + $0x30] sm:$0xff] 0.0
    %29 = vst [vmem:[%s4 + $0x38] sm:$0xff] 0.0
    %30 = vst [vmem:[%s4 + $0x40] sm:$0xff] 0.0
    %31 = vst [vmem:[%s4 + $0x48] sm:$0xff] 0.0
    %32 = vst [vmem:[%s4 + $0x50] sm:$0xff] 0.0
    %33 = vst [vmem:[%s4 + $0x58] sm:$0xff] 0.0
    %34 = vst [vmem:[%s4 + $0x60] sm:$0xff] 0.0
    %35 = vst [vmem:[%s4 + $0x68] sm:$0xff] 0.0
    %36 = vst [vmem:[%s4 + $0x70] sm:$0xff] 0.0
    %37 = vst [vmem:[%s4 + $0x78] sm:$0xff] 0.0
  $region21: #{simple_cnn_forward.9} parent=0 // pred_fallthru
    _
  %v38 = vld [vmem:[%s4] sm:$0xff]
  %v39 = vld [vmem:[%s4 + $0x8] sm:$0xff]
  %v40 = vld [vmem:[%s4 + $0x10] sm:$0xff]
  %v41 = vld [vmem:[%s4 + $0x18] sm:$0xff]
  %v42 = vld [vmem:[%s4 + $0x20] sm:$0xff]
  %v43 = vld [vmem:[%s4 + $0x28] sm:$0xff]
  %v44 = vld [vmem:[%s4 + $0x30] sm:$0xff]
  %v45 = vld [vmem:[%s4 + $0x38] sm:$0xff]
  %v46 = vld [vmem:[%s4 + $0x40] sm:$0xff]
  %v47 = vld [vmem:[%s4 + $0x48] sm:$0xff]
  %v48 = vld [vmem:[%s4 + $0x50] sm:$0xff]
  %v49 = vld [vmem:[%s4 + $0x58] sm:$0xff]
  %v50 = vld [vmem:[%s4 + $0x60] sm:$0xff]
  %v51 = vld [vmem:[%s4 + $0x68] sm:$0xff]
  %v52 = vld [vmem:[%s4 + $0x70] sm:$0xff]
  %v53 = vld [vmem:[%s4 + $0x78] sm:$0xff]
  %v54 = vld [vmem:[%s0] sm:$0xf]
  %v55 = vld [vmem:[%s0 + $0x4] sm:$0xf]
  %v56 = vld [vmem:[%s0 + $0x8] sm:$0xf]
  %v57 = vld [vmem:[%s0 + $0xc] sm:$0xf]
  %v58 = vld [vmem:[%s0 + $0x10] sm:$0xf]
  %v59 = vld [vmem:[%s0 + $0x14] sm:$0xf]
  %v60 = vld [vmem:[%s0 + $0x18] sm:$0xf]
  %v61 = vld [vmem:[%s0 + $0x1c] sm:$0xf]
  %v62 = vld [vmem:[%s0 + $0x20] sm:$0xf]
  %v63 = vld [vmem:[%s0 + $0x24] sm:$0xf]
  %v64 = vld [vmem:[%s0 + $0x28] sm:$0xf]
  %v65 = vld [vmem:[%s0 + $0x2c] sm:$0xf]
  %v66 = vld [vmem:[%s0 + $0x30] sm:$0xf]
  %v67 = vld [vmem:[%s0 + $0x34] sm:$0xf]
  %v68 = vld [vmem:[%s0 + $0x38] sm:$0xf]
  %v69 = vld [vmem:[%s0 + $0x3c] sm:$0xf]
  %v70 = vld [vmem:[%s1] sm:$0xf]
  %v71 = vld [vmem:[%s1 + $0x4] sm:$0xf]
  %v72 = vld [vmem:[%s1 + $0x8] sm:$0xf]
  %v73 = vld [vmem:[%s1 + $0xc] sm:$0xf]
  %v74 = vld [vmem:[%s1 + $0x10] sm:$0xf]
  %v75 = vld [vmem:[%s1 + $0x14] sm:$0xf]
  %v76 = vld [vmem:[%s1 + $0x18] sm:$0xf]
  %v77 = vld [vmem:[%s1 + $0x1c] sm:$0xf]
  %v78 = vld [vmem:[%s1 + $0x20] sm:$0xf]
  %v79 = vld [vmem:[%s1 + $0x24] sm:$0xf]
  %v80 = vld [vmem:[%s1 + $0x28] sm:$0xf]
  %v81 = vld [vmem:[%s1 + $0x2c] sm:$0xf]
  %v82 = vld [vmem:[%s1 + $0x30] sm:$0xf]
  %v83 = vld [vmem:[%s1 + $0x34] sm:$0xf]
  %v84 = vld [vmem:[%s1 + $0x38] sm:$0xf]
  %v85 = vld [vmem:[%s1 + $0x3c] sm:$0xf]
  %v102 = vunpack.c.l.b16 %v54
  %v103 = vunpack.c.l.b16 %v55
  %v104 = vunpack.c.l.b16 %v56
  %v105 = vunpack.c.l.b16 %v57
  %v106 = vunpack.c.l.b16 %v58
  %v107 = vunpack.c.l.b16 %v59
  %v108 = vunpack.c.l.b16 %v60
  %v109 = vunpack.c.l.b16 %v61
  %v110 = vunpack.c.l.b16 %v62
  %v111 = vunpack.c.l.b16 %v63
  %v112 = vunpack.c.l.b16 %v64
  %v113 = vunpack.c.l.b16 %v65
  %v114 = vunpack.c.l.b16 %v66
  %v115 = vunpack.c.l.b16 %v67
  %v116 = vunpack.c.l.b16 %v68
  %v117 = vunpack.c.l.b16 %v69
  %v118 = vpack.c.b16 %v103, %v102
  %v119 = vpack.c.b16 %v105, %v104
  %v120 = vpack.c.b16 %v107, %v106
  %v121 = vpack.c.b16 %v109, %v108
  %v122 = vpack.c.b16 %v111, %v110
  %v123 = vpack.c.b16 %v113, %v112
  %v124 = vpack.c.b16 %v115, %v114
  %v125 = vpack.c.b16 %v117, %v116
  %v150 = vunpack.c.l.b16 %v70
  %v151 = vunpack.c.l.b16 %v71
  %v152 = vunpack.c.l.b16 %v72
  %v153 = vunpack.c.l.b16 %v73
  %v154 = vunpack.c.l.b16 %v74
  %v155 = vunpack.c.l.b16 %v75
  %v156 = vunpack.c.l.b16 %v76
  %v157 = vunpack.c.l.b16 %v77
  %v158 = vunpack.c.l.b16 %v78
  %v159 = vunpack.c.l.b16 %v79
  %v160 = vunpack.c.l.b16 %v80
  %v161 = vunpack.c.l.b16 %v81
  %v162 = vunpack.c.l.b16 %v82
  %v163 = vunpack.c.l.b16 %v83
  %v164 = vunpack.c.l.b16 %v84
  %v165 = vunpack.c.l.b16 %v85
  %v166 = vpack.c.b16 %v151, %v150
  %v167 = vpack.c.b16 %v153, %v152
  %v168 = vpack.c.b16 %v155, %v154
  %v169 = vpack.c.b16 %v157, %v156
  %v170 = vpack.c.b16 %v159, %v158
  %v171 = vpack.c.b16 %v161, %v160
  %v172 = vpack.c.b16 %v163, %v162
  %v173 = vpack.c.b16 %v165, %v164
  %182 = vmatprep.subr.bf16.mxu0 0
  %183 = vmatpush1.bf16.msra.mxu0 %v166
  %184 = vmatprep.subr.bf16.mxu0 0
  %185 = vmatpush1.bf16.msra.mxu0 %v167
  %186 = vmatprep.subr.bf16.mxu0 0
  %187 = vmatpush1.bf16.msra.mxu0 %v168
  %188 = vmatprep.subr.bf16.mxu0 0
  %189 = vmatpush1.bf16.msra.mxu0 %v169
  %190 = vmatprep.subr.bf16.mxu0 0
  %191 = vmatpush1.bf16.msra.mxu0 %v170
  %192 = vmatprep.subr.bf16.mxu0 0
  %193 = vmatpush1.bf16.msra.mxu0 %v171
  %194 = vmatprep.subr.bf16.mxu0 0
  %195 = vmatpush1.bf16.msra.mxu0 %v172
  %196 = vmatprep.subr.bf16.mxu0 0
  %197 = vmatpush1.bf16.msra.mxu0 %v173
  %198 = vmatprep.subr.bf16.mxu0 0
  %199 = vmatpush1.bf16.msra.mxu0 0
  %200 = vmatprep.subr.bf16.mxu0 0
  %201 = vmatpush1.bf16.msra.mxu0 0
  %202 = vmatprep.subr.bf16.mxu0 0
  %203 = vmatpush1.bf16.msra.mxu0 0
  %204 = vmatprep.subr.bf16.mxu0 0
  %205 = vmatpush1.bf16.msra.mxu0 0
  %206 = vmatprep.subr.bf16.mxu0 0
  %207 = vmatpush1.bf16.msra.mxu0 0
  %208 = vmatprep.subr.bf16.mxu0 0
  %209 = vmatpush1.bf16.msra.mxu0 0
  %210 = vmatprep.subr.bf16.mxu0 0
  %211 = vmatpush1.bf16.msra.mxu0 0
  %212 = vmatprep.subr.bf16.mxu0 0
  %213 = vmatpush1.bf16.msra.mxu0 0
  %214 = vmatprep.mubr.bf16.mxu0 0
  %215 = vmatmul.mubr.bf16.gmra.mrb[0].mxu0 %v118
  %v216 = vpop.f32.mrb[0].mxu0
  %v217 = vadd.f32 0.0, %v216
  %v218 = vpop.f32.mrb[0].mxu0
  %v219 = vpop.f32.mrb[0].mxu0
  %v220 = vadd.f32 0.0, %v219
  %v221 = vpop.f32.mrb[0].mxu0
  %222 = vmatprep.mubr.bf16.mxu0 0
  %223 = vmatmul.mubr.bf16.gmra.mrb[0].mxu0 %v119
  %v224 = vpop.f32.mrb[0].mxu0
  %v225 = vadd.f32 0.0, %v224
  %v226 = vpop.f32.mrb[0].mxu0
  %v227 = vpop.f32.mrb[0].mxu0
  %v228 = vadd.f32 0.0, %v227
  %v229 = vpop.f32.mrb[0].mxu0
  %230 = vmatprep.mubr.bf16.mxu0 0
  %231 = vmatmul.mubr.bf16.gmra.mrb[0].mxu0 %v120
  %v232 = vpop.f32.mrb[0].mxu0
  %v233 = vadd.f32 0.0, %v232
  %v234 = vpop.f32.mrb[0].mxu0
  %v235 = vpop.f32.mrb[0].mxu0
  %v236 = vadd.f32 0.0, %v235
  %v237 = vpop.f32.mrb[0].mxu0
  %238 = vmatprep.mubr.bf16.mxu0 0
  %239 = vmatmul.mubr.bf16.gmra.mrb[0].mxu0 %v121
  %v240 = vpop.f32.mrb[0].mxu0
  %v241 = vadd.f32 0.0, %v240
  %v242 = vpop.f32.mrb[0].mxu0
  %v243 = vpop.f32.mrb[0].mxu0
  %v244 = vadd.f32 0.0, %v243
  %v245 = vpop.f32.mrb[0].mxu0
  %246 = vmatprep.mubr.bf16.mxu0 0
  %247 = vmatmul.mubr.bf16.gmra.mrb[0].mxu0 %v122
  %v248 = vpop.f32.mrb[0].mxu0
  %v249 = vadd.f32 0.0, %v248
  %v250 = vpop.f32.mrb[0].mxu0
  %v251 = vpop.f32.mrb[0].mxu0
  %v252 = vadd.f32 0.0, %v251
  %v253 = vpop.f32.mrb[0].mxu0
  %254 = vmatprep.mubr.bf16.mxu0 0
  %255 = vmatmul.mubr.bf16.gmra.mrb[0].mxu0 %v123
  %v256 = vpop.f32.mrb[0].mxu0
  %v257 = vadd.f32 0.0, %v256
  %v258 = vpop.f32.mrb[0].mxu0
  %v259 = vpop.f32.mrb[0].mxu0
  %v260 = vadd.f32 0.0, %v259
  %v261 = vpop.f32.mrb[0].mxu0
  %262 = vmatprep.mubr.bf16.mxu0 0
  %263 = vmatmul.mubr.bf16.gmra.mrb[0].mxu0 %v124
  %v264 = vpop.f32.mrb[0].mxu0
  %v265 = vadd.f32 0.0, %v264
  %v266 = vpop.f32.mrb[0].mxu0
  %v267 = vpop.f32.mrb[0].mxu0
  %v268 = vadd.f32 0.0, %v267
  %v269 = vpop.f32.mrb[0].mxu0
  %270 = vmatprep.mubr.bf16.mxu0 0
  %271 = vmatmul.mubr.bf16.gmra.mrb[0].mxu0 %v125
  %v272 = vpop.f32.mrb[0].mxu0
  %v273 = vadd.f32 0.0, %v272
  %v274 = vpop.f32.mrb[0].mxu0
  %v275 = vpop.f32.mrb[0].mxu0
  %v276 = vadd.f32 0.0, %v275
  %v277 = vpop.f32.mrb[0].mxu0
  %278 = vdwg.mxu0
  %v279 = vadd.f32 %v38, %v217
  %v280 = vadd.f32 %v39, %v220
  %v281 = vadd.f32 %v40, %v225
  %v282 = vadd.f32 %v41, %v228
  %v283 = vadd.f32 %v42, %v233
  %v284 = vadd.f32 %v43, %v236
  %v285 = vadd.f32 %v44, %v241
  %v286 = vadd.f32 %v45, %v244
  %v287 = vadd.f32 %v46, %v249
  %v288 = vadd.f32 %v47, %v252
  %v289 = vadd.f32 %v48, %v257
  %v290 = vadd.f32 %v49, %v260
  %v291 = vadd.f32 %v50, %v265
  %v292 = vadd.f32 %v51, %v268
  %v293 = vadd.f32 %v52, %v273
  %v294 = vadd.f32 %v53, %v276
  %295 = vst [vmem:[%s4] sm:$0xff] %v279
  %296 = vst [vmem:[%s4 + $0x8] sm:$0xff] %v280
  %297 = vst [vmem:[%s4 + $0x10] sm:$0xff] %v281
  %298 = vst [vmem:[%s4 + $0x18] sm:$0xff] %v282
  %299 = vst [vmem:[%s4 + $0x20] sm:$0xff] %v283
  %300 = vst [vmem:[%s4 + $0x28] sm:$0xff] %v284
  %301 = vst [vmem:[%s4 + $0x30] sm:$0xff] %v285
  %302 = vst [vmem:[%s4 + $0x38] sm:$0xff] %v286
  %303 = vst [vmem:[%s4 + $0x40] sm:$0xff] %v287
  %304 = vst [vmem:[%s4 + $0x48] sm:$0xff] %v288
  %305 = vst [vmem:[%s4 + $0x50] sm:$0xff] %v289
  %306 = vst [vmem:[%s4 + $0x58] sm:$0xff] %v290
  %307 = vst [vmem:[%s4 + $0x60] sm:$0xff] %v291
  %308 = vst [vmem:[%s4 + $0x68] sm:$0xff] %v292
  %309 = vst [vmem:[%s4 + $0x70] sm:$0xff] %v293
  %310 = vst [vmem:[%s4 + $0x78] sm:$0xff] %v294
  // Predicated region
  $region22: #{simple_cnn_forward.9} parent=0 // pred_check
    %p311 = pneg %p18
  $region23: #{simple_cnn_forward.9} parent=0 // pred_check_branch
    %313 = sbr.rel (%p311) target = $region25
  $region24: #{simple_cnn_forward.9} parent=0 // pred_region
    %v314 = vld [vmem:[%s4] sm:$0xff]
    %v315 = vld [vmem:[%s4 + $0x8] sm:$0xff]
    %v316 = vld [vmem:[%s4 + $0x10] sm:$0xff]
    %v317 = vld [vmem:[%s4 + $0x18] sm:$0xff]
    %v318 = vld [vmem:[%s4 + $0x20] sm:$0xff]
    %v319 = vld [vmem:[%s4 + $0x28] sm:$0xff]
    %v320 = vld [vmem:[%s4 + $0x30] sm:$0xff]
    %v321 = vld [vmem:[%s4 + $0x38] sm:$0xff]
    %v322 = vld [vmem:[%s4 + $0x40] sm:$0xff]
    %v323 = vld [vmem:[%s4 + $0x48] sm:$0xff]
    %v324 = vld [vmem:[%s4 + $0x50] sm:$0xff]
    %v325 = vld [vmem:[%s4 + $0x58] sm:$0xff]
    %v326 = vld [vmem:[%s4 + $0x60] sm:$0xff]
    %v327 = vld [vmem:[%s4 + $0x68] sm:$0xff]
    %v328 = vld [vmem:[%s4 + $0x70] sm:$0xff]
    %v329 = vld [vmem:[%s4 + $0x78] sm:$0xff]
    %v330 = vld [vmem:[%s2] sm:$0x1]
    %v332 = vlaneseq
    %v333 = vshrl.u32 %v332, 7
    %v334 = vsub.s32 0, %v333
    %v335 = vrot.slane %v330, %v334
    %v337 = vmul.f32 %v314, %v335
    %v338 = vmul.f32 %v315, %v335
    %v339 = vmul.f32 %v316, %v335
    %v340 = vmul.f32 %v317, %v335
    %v341 = vmul.f32 %v318, %v335
    %v342 = vmul.f32 %v319, %v335
    %v343 = vmul.f32 %v320, %v335
    %v344 = vmul.f32 %v321, %v335
    %v345 = vmul.f32 %v322, %v335
    %v346 = vmul.f32 %v323, %v335
    %v347 = vmul.f32 %v324, %v335
    %v348 = vmul.f32 %v325, %v335
    %v349 = vmul.f32 %v326, %v335
    %v350 = vmul.f32 %v327, %v335
    %v351 = vmul.f32 %v328, %v335
    %v352 = vmul.f32 %v329, %v335
    %v353 = vld [vmem:[%s3] sm:$0x1]
    %v355 = vlaneseq
    %v356 = vshrl.u32 %v355, 7
    %v357 = vsub.s32 0, %v356
    %v358 = vrot.slane %v353, %v357
    %v360 = vadd.f32 %v337, %v358
    %v361 = vadd.f32 %v338, %v358
    %v362 = vadd.f32 %v339, %v358
    %v363 = vadd.f32 %v340, %v358
    %v364 = vadd.f32 %v341, %v358
    %v365 = vadd.f32 %v342, %v358
    %v366 = vadd.f32 %v343, %v358
    %v367 = vadd.f32 %v344, %v358
    %v368 = vadd.f32 %v345, %v358
    %v369 = vadd.f32 %v346, %v358
    %v370 = vadd.f32 %v347, %v358
    %v371 = vadd.f32 %v348, %v358
    %v372 = vadd.f32 %v349, %v358
    %v373 = vadd.f32 %v350, %v358
    %v374 = vadd.f32 %v351, %v358
    %v375 = vadd.f32 %v352, %v358
    %v376 = vmax.f32 %v360, 0.0
    %v377 = vmax.f32 %v361, 0.0
    %v378 = vmax.f32 %v362, 0.0
    %v379 = vmax.f32 %v363, 0.0
    %v380 = vmax.f32 %v364, 0.0
    %v381 = vmax.f32 %v365, 0.0
    %v382 = vmax.f32 %v366, 0.0
    %v383 = vmax.f32 %v367, 0.0
    %v384 = vmax.f32 %v368, 0.0
    %v385 = vmax.f32 %v369, 0.0
    %v386 = vmax.f32 %v370, 0.0
    %v387 = vmax.f32 %v371, 0.0
    %v388 = vmax.f32 %v372, 0.0
    %v389 = vmax.f32 %v373, 0.0
    %v390 = vmax.f32 %v374, 0.0
    %v391 = vmax.f32 %v375, 0.0
    %392 = vst [vmem:[%s4] sm:$0xff] %v376
    %393 = vst [vmem:[%s4 + $0x8] sm:$0xff] %v377
    %394 = vst [vmem:[%s4 + $0x10] sm:$0xff] %v378
    %395 = vst [vmem:[%s4 + $0x18] sm:$0xff] %v379
    %396 = vst [vmem:[%s4 + $0x20] sm:$0xff] %v380
    %397 = vst [vmem:[%s4 + $0x28] sm:$0xff] %v381
    %398 = vst [vmem:[%s4 + $0x30] sm:$0xff] %v382
    %399 = vst [vmem:[%s4 + $0x38] sm:$0xff] %v383
    %400 = vst [vmem:[%s4 + $0x40] sm:$0xff] %v384
    %401 = vst [vmem:[%s4 + $0x48] sm:$0xff] %v385
    %402 = vst [vmem:[%s4 + $0x50] sm:$0xff] %v386
    %403 = vst [vmem:[%s4 + $0x58] sm:$0xff] %v387
    %404 = vst [vmem:[%s4 + $0x60] sm:$0xff] %v388
    %405 = vst [vmem:[%s4 + $0x68] sm:$0xff] %v389
    %406 = vst [vmem:[%s4 + $0x70] sm:$0xff] %v390
    %407 = vst [vmem:[%s4 + $0x78] sm:$0xff] %v391
  $region25: #{simple_cnn_forward.9} parent=0 // pred_fallthru
    _
  // Predicated region
  $region26: #{simple_cnn_forward.9} parent=0 // pred_check
    _
  $region27: #{simple_cnn_forward.9} parent=0 // pred_check_branch
    %409 = sbr.rel (0) target = $region29
  $region28: #{simple_cnn_forward.9} parent=0 // pred_region
    _
  $region29: #{simple_cnn_forward.9} parent=0 // pred_fallthru
    _
  // Predicated region
  $region30: #{simple_cnn_forward.9} parent=0 // pred_check
    _
  $region31: #{simple_cnn_forward.9} parent=0 // pred_check_branch
    %411 = sbr.rel (0) target = $region33
  $region32: #{simple_cnn_forward.9} parent=0 // pred_region
    _
  $region33: #{simple_cnn_forward.9} parent=0 // pred_fallthru
    _

// kernel: simple_cnn_forward.10
$region0: #{simple_cnn_forward.10}
  #allocation0 [shape = 'u32[]', space=smem, size = 0x4, offset = 0x4, fixed_abs, tag = 'smem constant byte address 0x4 - core index']
  #allocation1 [shape = 'u32[144,128]{1,0:T(1,128)}', space=vmem, size = 0x12000, scoped, tag = 'internal scratch']
  %s0 = inlined_call_operand.vmem [shape: bf16[128,1152], index: 0, kind: input, shape index: {}]
  %s1 = inlined_call_operand.vmem [shape: bf16[1152,128], index: 1, kind: input, shape index: {}]
  %s2 = inlined_call_operand.vmem [shape: f32[1,128], index: 2, kind: input, shape index: {}]
  %s3 = inlined_call_operand.vmem [shape: f32[1,128], index: 3, kind: input, shape index: {}]
  %s4 = inlined_call_operand.vmem [shape: f32[128,128], index: 4, kind: output, shape index: {}]
  %s5 = sld [smem:[#allocation0]]
  $region83: #{simple_cnn_forward.10} parent=0
    _
  %s7 = ssub.s32 1, %s5
  %s8 = scalar_select 0, %s7, %s5
  $region1: #{simple_cnn_forward.10} parent=0
    #allocation2 [shape = 'u8[196608]{0}', space=vmem, size = 0x30000, scoped, tag = 'input window, operand 0']
    loop: start=0, step=1, limit=5
    $region2: #{simple_cnn_forward.10} parent=1 // loop_pre_header
      _
    $region3: #{simple_cnn_forward.10} parent=1 // loop_header
      %s10 = sphi 0, %s14
      %p11 = scmp.ge.s32.totalorder %s10, 5
      %s17 = sphi 0, %s36
      %s18 = sphi 0, %s32
      %s19 = sphi 0, %s28
      %s20 = sphi 0, %s17
      %s21 = sphi 0, %s18
      %s22 = sphi 0, %s19
      %s23 = sphi 0, %s20
      %s24 = sphi 0, %s21
      %s25 = sphi 0, %s22
      %s41 = sphi 0, %s43
      %s44 = sphi 0, %s41
      %s45 = sphi 0, %s44
      %s61 = sphi 0, %s45
      %s69 = sphi 0, %s71
      %s72 = sphi 0, %s69
      %s73 = sphi 0, %s72
      %s89 = sphi 0, %s73
      %s95 = sphi 0, %s97
      %s98 = sphi 0, %s95
      %s99 = sphi 0, %s98
      %s115 = sphi 0, %s99
      %s121 = sphi 0, %s123
      %s124 = sphi 0, %s121
      %s125 = sphi 0, %s124
      %s141 = sphi 0, %s125
      %s149 = sphi 0, %s151
      %s152 = sphi 0, %s149
      %s153 = sphi 0, %s152
      %s169 = sphi 0, %s153
    $region4: #{simple_cnn_forward.10} parent=1 // loop_header_branch
      %13 = sbr.rel (%p11) target = $region8
    $region5: #{simple_cnn_forward.10} parent=1 // loop_body
      %s15 = ssub.s32 %s10, 1
      %s16 = ssub.s32 %s10, 2
      %s26 = sadd.s32 1, %s19
      %p27 = scmp.ge.s32.totalorder %s26, 3
      %s28 = scalar_select %p27, 0, %s26
      %s29 = sadd.s32 1, %s18
      %s30 = scalar_select %p27, %s29, %s18
      %p31 = scmp.ge.s32.totalorder %s30, 1
      %s32 = scalar_select %p31, 0, %s30
      %s33 = sadd.s32 1, %s17
      %s34 = scalar_select %p31, %s33, %s17
      %p35 = scmp.ge.s32.totalorder %s34, 1
      %s36 = scalar_select %p35, 0, %s34
      %s37 = ssub.s32 %s17, %s36
      %s38 = ssub.s32 %s19, %s28
      %s39 = sor.u32 %s37, %s38
      %p40 = scmp.eq.s32.totalorder %s39, 0
      %s42 = sadd.s32 %s41, 1
      %s43 = scalar_select %p40, %s41, %s42
      %p46 = pneg %p40
      %p47 = scmp.eq.s32.totalorder %s10, 2
      %p48 = por %p46, %p47
      %p49 = scmp.ne.s32.totalorder %s41, %s44
      %p50 = scmp.eq.s32.totalorder %s10, 0
      %p51 = por %p49, %p50
      %p52 = scmp.ne.s32.totalorder %s41, %s44
      %p53 = scmp.eq.s32.totalorder %s15, 2
      %p54 = por %p52, %p53
      %p55 = scmp.ne.s32.totalorder %s44, %s45
      %p56 = scmp.eq.s32.totalorder %s15, 0
      %p57 = por %p55, %p56
      %p58 = scmp.ne.s32.totalorder %s44, %s45
      %p59 = scmp.eq.s32.totalorder %s16, 2
      %p60 = por %p58, %p59
      %p62 = scmp.ne.s32.totalorder %s45, %s61
      %p63 = scmp.eq.s32.totalorder %s16, 0
      %p64 = por %p62, %p63
      %s65 = ssub.s32 %s19, %s28
      %s66 = ssub.s32 %s18, %s32
      %s67 = sor.u32 %s65, %s66
      %p68 = scmp.eq.s32.totalorder %s67, 0
      %s70 = sadd.s32 %s69, 1
      %s71 = scalar_select %p68, %s69, %s70
      %p74 = pneg %p68
      %p75 = scmp.eq.s32.totalorder %s10, 2
      %p76 = por %p74, %p75
      %p77 = scmp.ne.s32.totalorder %s69, %s72
      %p78 = scmp.eq.s32.totalorder %s10, 0
      %p79 = por %p77, %p78
      %p80 = scmp.ne.s32.totalorder %s69, %s72
      %p81 = scmp.eq.s32.totalorder %s15, 2
      %p82 = por %p80, %p81
      %p83 = scmp.ne.s32.totalorder %s72, %s73
      %p84 = scmp.eq.s32.totalorder %s15, 0
      %p85 = por %p83, %p84
      %p86 = scmp.ne.s32.totalorder %s72, %s73
      %p87 = scmp.eq.s32.totalorder %s16, 2
      %p88 = por %p86, %p87
      %p90 = scmp.ne.s32.totalorder %s73, %s89
      %p91 = scmp.eq.s32.totalorder %s16, 0
      %p92 = por %p90, %p91
      %s93 = ssub.s32 %s18, %s32
      %p94 = scmp.eq.s32.totalorder %s93, 0
      %s96 = sadd.s32 %s95, 1
      %s97 = scalar_select %p94, %s95, %s96
      %p100 = pneg %p94
      %p101 = scmp.eq.s32.totalorder %s10, 2
      %p102 = por %p100, %p101
      %p103 = scmp.ne.s32.totalorder %s95, %s98
      %p104 = scmp.eq.s32.totalorder %s10, 0
      %p105 = por %p103, %p104
      %p106 = scmp.ne.s32.totalorder %s95, %s98
      %p107 = scmp.eq.s32.totalorder %s15, 2
      %p108 = por %p106, %p107
      %p109 = scmp.ne.s32.totalorder %s98, %s99
      %p110 = scmp.eq.s32.totalorder %s15, 0
      %p111 = por %p109, %p110
      %p112 = scmp.ne.s32.totalorder %s98, %s99
      %p113 = scmp.eq.s32.totalorder %s16, 2
      %p114 = por %p112, %p113
      %p116 = scmp.ne.s32.totalorder %s99, %s115
      %p117 = scmp.eq.s32.totalorder %s16, 0
      %p118 = por %p116, %p117
      %s119 = ssub.s32 %s18, %s32
      %p120 = scmp.eq.s32.totalorder %s119, 0
      %s122 = sadd.s32 %s121, 1
      %s123 = scalar_select %p120, %s121, %s122
      %p126 = pneg %p120
      %p127 = scmp.eq.s32.totalorder %s10, 2
      %p128 = por %p126, %p127
      %p129 = scmp.ne.s32.totalorder %s121, %s124
      %p130 = scmp.eq.s32.totalorder %s10, 0
      %p131 = por %p129, %p130
      %p132 = scmp.ne.s32.totalorder %s121, %s124
      %p133 = scmp.eq.s32.totalorder %s15, 2
      %p134 = por %p132, %p133
      %p135 = scmp.ne.s32.totalorder %s124, %s125
      %p136 = scmp.eq.s32.totalorder %s15, 0
      %p137 = por %p135, %p136
      %p138 = scmp.ne.s32.totalorder %s124, %s125
      %p139 = scmp.eq.s32.totalorder %s16, 2
      %p140 = por %p138, %p139
      %p142 = scmp.ne.s32.totalorder %s125, %s141
      %p143 = scmp.eq.s32.totalorder %s16, 0
      %p144 = por %p142, %p143
      %s145 = ssub.s32 %s17, %s36
      %s146 = ssub.s32 %s18, %s32
      %s147 = sor.u32 %s145, %s146
      %p148 = scmp.eq.s32.totalorder %s147, 0
      %s150 = sadd.s32 %s149, 1
      %s151 = scalar_select %p148, %s149, %s150
      %p154 = pneg %p148
      %p155 = scmp.eq.s32.totalorder %s10, 2
      %p156 = por %p154, %p155
      %p157 = scmp.ne.s32.totalorder %s149, %s152
      %p158 = scmp.eq.s32.totalorder %s10, 0
      %p159 = por %p157, %p158
      %p160 = scmp.ne.s32.totalorder %s149, %s152
      %p161 = scmp.eq.s32.totalorder %s15, 2
      %p162 = por %p160, %p161
      %p163 = scmp.ne.s32.totalorder %s152, %s153
      %p164 = scmp.eq.s32.totalorder %s15, 0
      %p165 = por %p163, %p164
      %p166 = scmp.ne.s32.totalorder %s152, %s153
      %p167 = scmp.eq.s32.totalorder %s16, 2
      %p168 = por %p166, %p167
      %p170 = scmp.ne.s32.totalorder %s153, %s169
      %p171 = scmp.eq.s32.totalorder %s16, 0
      %p172 = por %p170, %p171
      %p173 = scmp.le.s32.totalorder 1, %s10
      %p174 = scmp.lt.s32.totalorder %s10, 4
      %p175 = pnand %p173, %p174
      %p176 = pneg %p175
      // Predicated region
      $region9: #{simple_cnn_forward.10} parent=5 // pred_check
        _
      $region10: #{simple_cnn_forward.10} parent=5 // pred_check_branch
        %178 = sbr.rel (%p175) target = $region12
      $region11: #{simple_cnn_forward.10} parent=5 // pred_region
        %s179 = ssub.s32 %s10, 1
        // Predicated region
        $region13: #{simple_cnn_forward.10} parent=11 // pred_check
          %p180 = pneg %p111
        $region14: #{simple_cnn_forward.10} parent=11 // pred_check_branch
          %182 = sbr.rel (%p180) target = $region16
        $region15: #{simple_cnn_forward.10} parent=11 // pred_region
          %p183 = scmp.lt.s32.totalorder %s21, 0
          %s184 = scalar_select %p183, %s21, 0
          %s185 = scalar_lea.vmem %s2, %s184
        $region16: #{simple_cnn_forward.10} parent=11 // pred_fallthru
          _
        // Predicated region
        $region17: #{simple_cnn_forward.10} parent=11 // pred_check
          %p186 = pneg %p137
        $region18: #{simple_cnn_forward.10} parent=11 // pred_check_branch
          %188 = sbr.rel (%p186) target = $region20
        $region19: #{simple_cnn_forward.10} parent=11 // pred_region
          %p189 = scmp.lt.s32.totalorder %s21, 0
          %s190 = scalar_select %p189, %s21, 0
          %s191 = scalar_lea.vmem %s3, %s190
        $region20: #{simple_cnn_forward.10} parent=11 // pred_fallthru
          _
      $region12: #{simple_cnn_forward.10} parent=5 // pred_fallthru
        _
      %p192 = scmp.lt.s32.totalorder %s10, 3
      // Predicated region
      $region21: #{simple_cnn_forward.10} parent=5 // pred_check
        %p193 = pneg %p192
      $region22: #{simple_cnn_forward.10} parent=5 // pred_check_branch
        %195 = sbr.rel (%p193) target = $region24
      $region23: #{simple_cnn_forward.10} parent=5 // pred_region
        // Predicated region
        $region25: #{simple_cnn_forward.10} parent=23 // pred_check
          %p196 = pneg %p51
        $region26: #{simple_cnn_forward.10} parent=23 // pred_check_branch
          %198 = sbr.rel (%p196) target = $region28
        $region27: #{simple_cnn_forward.10} parent=23 // pred_region
          %s199 = sand.u32 %s41, 1
          %s200 = sand.u32 %s41, 1
          %s201 = smul.addr %s200, 192
          %s202 = scalar_lea.vmem [#allocation2], %s201
          %s203 = smul.u32 16, %s17
          %s204 = smul.u32 3, %s19
          %s205 = smul.addr %s203, 9
          %s206 = sadd.s32 %s204, %s205
          %s207 = smul.addr %s206, 4
          %s208 = scalar_lea.vmem %s0, %s207
          // Predicated region
          $region29: #{simple_cnn_forward.10} parent=27 // pred_check
            _
          $region30: #{simple_cnn_forward.10} parent=27 // pred_check_branch
            %210 = sbr.rel (0) target = $region32
          $region31: #{simple_cnn_forward.10} parent=27 // pred_region
            // Predicated region
            $region33: #{simple_cnn_forward.10} parent=31 // pred_check
              _
            $region34: #{simple_cnn_forward.10} parent=31 // pred_check_branch
              %212 = sbr.rel (0) target = $region36
            $region35: #{simple_cnn_forward.10} parent=31 // pred_region
              %s213 = scalar_lea.vmem %s208, 8
              %s214 = scalar_lea.vmem %s202, 8 [#allocation2]
              loop: start=0, step=1, limit=1
              $region37: #{simple_cnn_forward.10} parent=35 // loop_pre_header
                _
              $region38: #{simple_cnn_forward.10} parent=35 // loop_header
                %s216 = sphi 0, %s220
                %p217 = scmp.ge.s32.totalorder %s216, 1
                %s221 = sphi %s208, %s208
                %s222 = sphi %s202, %s202
              $region39: #{simple_cnn_forward.10} parent=35 // loop_header_branch
                %219 = sbr.rel (%p217) target = $region43
              $region40: #{simple_cnn_forward.10} parent=35 // loop_body
                %v223 = vld [vmem:[%s221] sm:$0xff]
                %224 = vst [vmem:[%s222] sm:$0xff] %v223
                %v225 = vld [vmem:[%s221 + $0x24] sm:$0xff]
                %226 = vst [vmem:[%s222 + $0xc] sm:$0xff] %v225
                %v227 = vld [vmem:[%s221 + $0x48] sm:$0xff]
                %228 = vst [vmem:[%s222 + $0x18] sm:$0xff] %v227
                %v229 = vld [vmem:[%s221 + $0x6c] sm:$0xff]
                %230 = vst [vmem:[%s222 + $0x24] sm:$0xff] %v229
                %v231 = vld [vmem:[%s221 + $0x90] sm:$0xff]
                %232 = vst [vmem:[%s222 + $0x30] sm:$0xff] %v231
                %v233 = vld [vmem:[%s221 + $0xb4] sm:$0xff]
                %234 = vst [vmem:[%s222 + $0x3c] sm:$0xff] %v233
                %v235 = vld [vmem:[%s221 + $0xd8] sm:$0xff]
                %236 = vst [vmem:[%s222 + $0x48] sm:$0xff] %v235
                %v237 = vld [vmem:[%s221 + $0xfc] sm:$0xff]
                %238 = vst [vmem:[%s222 + $0x54] sm:$0xff] %v237
                %v239 = vld [vmem:[%s221 + $0x120] sm:$0xff]
                %240 = vst [vmem:[%s222 + $0x60] sm:$0xff] %v239
                %v241 = vld [vmem:[%s221 + $0x144] sm:$0xff]
                %242 = vst [vmem:[%s222 + $0x6c] sm:$0xff] %v241
                %v243 = vld [vmem:[%s221 + $0x168] sm:$0xff]
                %244 = vst [vmem:[%s222 + $0x78] sm:$0xff] %v243
                %v245 = vld [vmem:[%s221 + $0x18c] sm:$0xff]
                %246 = vst [vmem:[%s222 + $0x84] sm:$0xff] %v245
                %v247 = vld [vmem:[%s221 + $0x1b0] sm:$0xff]
                %248 = vst [vmem:[%s222 + $0x90] sm:$0xff] %v247
                %v249 = vld [vmem:[%s221 + $0x1d4] sm:$0xff]
                %250 = vst [vmem:[%s222 + $0x9c] sm:$0xff] %v249
                %v251 = vld [vmem:[%s221 + $0x1f8] sm:$0xff]
                %252 = vst [vmem:[%s222 + $0xa8] sm:$0xff] %v251
                %v253 = vld [vmem:[%s221 + $0x21c] sm:$0xff]
                %254 = vst [vmem:[%s222 + $0xb4] sm:$0xff] %v253
              $region41: #{simple_cnn_forward.10} parent=35 // loop_footer
                %s220 = sadd.s32 1, %s216
              $region42: #{simple_cnn_forward.10} parent=35 // loop_footer_branch
                %215 = sbr.rel target = $region38
              $region43: #{simple_cnn_forward.10} parent=35 // loop_exit
                _
              loop: start=0, step=1, limit=1
              $region44: #{simple_cnn_forward.10} parent=35 // loop_pre_header
                _
              $region45: #{simple_cnn_forward.10} parent=35 // loop_header
                %s257 = sphi 0, %s261
                %p258 = scmp.ge.s32.totalorder %s257, 1
                %s262 = sphi %s213, %s213
                %s263 = sphi %s214, %s214
              $region46: #{simple_cnn_forward.10} parent=35 // loop_header_branch
                %260 = sbr.rel (%p258) target = $region50
              $region47: #{simple_cnn_forward.10} parent=35 // loop_body
                %v264 = vld [vmem:[%s262] sm:$0xf]
                %265 = vst [vmem:[%s263] sm:$0xf] %v264
                %v266 = vld [vmem:[%s262 + $0x24] sm:$0xf]
                %267 = vst [vmem:[%s263 + $0xc] sm:$0xf] %v266
                %v268 = vld [vmem:[%s262 + $0x48] sm:$0xf]
                %269 = vst [vmem:[%s263 + $0x18] sm:$0xf] %v268
                %v270 = vld [vmem:[%s262 + $0x6c] sm:$0xf]
                %271 = vst [vmem:[%s263 + $0x24] sm:$0xf] %v270
                %v272 = vld [vmem:[%s262 + $0x90] sm:$0xf]
                %273 = vst [vmem:[%s263 + $0x30] sm:$0xf] %v272
                %v274 = vld [vmem:[%s262 + $0xb4] sm:$0xf]
                %275 = vst [vmem:[%s263 + $0x3c] sm:$0xf] %v274
                %v276 = vld [vmem:[%s262 + $0xd8] sm:$0xf]
                %277 = vst [vmem:[%s263 + $0x48] sm:$0xf] %v276
                %v278 = vld [vmem:[%s262 + $0xfc] sm:$0xf]
                %279 = vst [vmem:[%s263 + $0x54] sm:$0xf] %v278
                %v280 = vld [vmem:[%s262 + $0x120] sm:$0xf]
                %281 = vst [vmem:[%s263 + $0x60] sm:$0xf] %v280
                %v282 = vld [vmem:[%s262 + $0x144] sm:$0xf]
                %283 = vst [vmem:[%s263 + $0x6c] sm:$0xf] %v282
                %v284 = vld [vmem:[%s262 + $0x168] sm:$0xf]
                %285 = vst [vmem:[%s263 + $0x78] sm:$0xf] %v284
                %v286 = vld [vmem:[%s262 + $0x18c] sm:$0xf]
                %287 = vst [vmem:[%s263 + $0x84] sm:$0xf] %v286
                %v288 = vld [vmem:[%s262 + $0x1b0] sm:$0xf]
                %289 = vst [vmem:[%s263 + $0x90] sm:$0xf] %v288
                %v290 = vld [vmem:[%s262 + $0x1d4] sm:$0xf]
                %291 = vst [vmem:[%s263 + $0x9c] sm:$0xf] %v290
                %v292 = vld [vmem:[%s262 + $0x1f8] sm:$0xf]
                %293 = vst [vmem:[%s263 + $0xa8] sm:$0xf] %v292
                %v294 = vld [vmem:[%s262 + $0x21c] sm:$0xf]
                %295 = vst [vmem:[%s263 + $0xb4] sm:$0xf] %v294
              $region48: #{simple_cnn_forward.10} parent=35 // loop_footer
                %s261 = sadd.s32 1, %s257
              $region49: #{simple_cnn_forward.10} parent=35 // loop_footer_branch
                %256 = sbr.rel target = $region45
              $region50: #{simple_cnn_forward.10} parent=35 // loop_exit
                _
            $region36: #{simple_cnn_forward.10} parent=31 // pred_fallthru
              _
          $region32: #{simple_cnn_forward.10} parent=27 // pred_fallthru
            _
          %296 = vnop
        $region28: #{simple_cnn_forward.10} parent=23 // pred_fallthru
          _
        // Predicated region
        $region51: #{simple_cnn_forward.10} parent=23 // pred_check
          %p297 = pneg %p79
        $region52: #{simple_cnn_forward.10} parent=23 // pred_check_branch
          %299 = sbr.rel (%p297) target = $region54
        $region53: #{simple_cnn_forward.10} parent=23 // pred_region
          %s300 = smul.u32 48, %s19
          %p301 = scmp.lt.s32.totalorder %s300, 143
          %s302 = scalar_select %p301, %s300, 143
          %p303 = scmp.lt.s32.totalorder %s18, 0
          %s304 = scalar_select %p303, %s18, 0
          %s305 = sadd.s32 %s304, %s302
          %s306 = smul.addr %s305, 4
          %s307 = scalar_lea.vmem %s1, %s306
          %s308 = smul.u32 48, %s19
        $region54: #{simple_cnn_forward.10} parent=23 // pred_fallthru
          _
      $region24: #{simple_cnn_forward.10} parent=5 // pred_fallthru
        _
      %p309 = scmp.le.s32.totalorder 1, %s10
      %p310 = scmp.lt.s32.totalorder %s10, 4
      %p311 = pnand %p309, %p310
      %p312 = pneg %p311
      // Predicated region
      $region55: #{simple_cnn_forward.10} parent=5 // pred_check
        _
      $region56: #{simple_cnn_forward.10} parent=5 // pred_check_branch
        %314 = sbr.rel (%p311) target = $region58
      $region57: #{simple_cnn_forward.10} parent=5 // pred_region
        %s315 = ssub.s32 %s10, 1
        %s316 = sand.u32 %s44, 1
        %s317 = sand.u32 %s44, 1
        %s318 = smul.addr %s317, 192
        %s319 = scalar_lea.vmem [#allocation2], %s318
        // Predicated region
        $region59: #{simple_cnn_forward.10} parent=57 // pred_check
          %p320 = pneg %p57
        $region60: #{simple_cnn_forward.10} parent=57 // pred_check_branch
          %322 = sbr.rel (%p320) target = $region62
        $region61: #{simple_cnn_forward.10} parent=57 // pred_region
          _
        $region62: #{simple_cnn_forward.10} parent=57 // pred_fallthru
          _
        %s323 = sand.u32 %s44, 1
        %s324 = sand.u32 %s44, 1
        %s325 = smul.addr %s324, 192
        %s326 = scalar_lea.vmem [#allocation2], %s325
        %p327 = pneg %p57
        %p328 = pneg %p54
        %s329 = smul.u32 48, %s22
        %p330 = scmp.lt.s32.totalorder %s329, 143
        %s331 = scalar_select %p330, %s329, 143
        %p332 = scmp.lt.s32.totalorder %s21, 0
        %s333 = scalar_select %p332, %s21, 0
        %s334 = sadd.s32 %s333, %s331
        %s335 = smul.addr %s334, 4
        %s336 = scalar_lea.vmem %s1, %s335
        %p337 = pneg %p85
        %p338 = pneg %p82
        %p339 = scmp.lt.s32.totalorder %s21, 0
        %s340 = scalar_select %p339, %s21, 0
        %s341 = scalar_lea.vmem %s2, %s340
        %p342 = pneg %p111
        %p343 = pneg %p108
        %p344 = scmp.lt.s32.totalorder %s21, 0
        %s345 = scalar_select %p344, %s21, 0
        %s346 = scalar_lea.vmem %s3, %s345
        %p347 = pneg %p137
        %p348 = pneg %p134
        %p349 = pneg %p165
        %p350 = pneg %p162
        %s351 = smul.u32 16, %s20
        %p352 = scmp.lt.s32.totalorder %s351, 15
        %s353 = scalar_select %p352, %s351, 15
        %p354 = scmp.lt.s32.totalorder %s21, 0
        %s355 = scalar_select %p354, %s21, 0
        %s356 = sadd.s32 %s355, %s353
        %s357 = smul.addr %s356, 8
        %s358 = scalar_lea.vmem %s4, %s357
        %s359 = smul.u32 16, %s20
        %s360 = smul.u32 3, %s22
        %s361 = smul.u32 48, %s22
        %p362 = scmp.lt.s32.totalorder %s361, 143
        %s363 = scalar_select %p362, %s361, 143
        %p364 = scmp.lt.s32.totalorder %s21, 0
        %s365 = scalar_select %p364, %s21, 0
        %s366 = sadd.s32 %s365, %s363
        %s367 = smul.addr %s366, 4
        %s368 = scalar_lea.vmem %s1, %s367
        %s369 = smul.u32 48, %s22
        %p370 = scmp.lt.s32.totalorder %s21, 0
        %s371 = scalar_select %p370, %s21, 0
        %s372 = scalar_lea.vmem %s2, %s371
        %p373 = scmp.lt.s32.totalorder %s21, 0
        %s374 = scalar_select %p373, %s21, 0
        %s375 = scalar_lea.vmem %s3, %s374
        %s376 = smul.u32 16, %s20
        %p377 = scmp.lt.s32.totalorder %s376, 15
        %s378 = scalar_select %p377, %s376, 15
        %p379 = scmp.lt.s32.totalorder %s21, 0
        %s380 = scalar_select %p379, %s21, 0
        %s381 = sadd.s32 %s380, %s378
        %s382 = smul.addr %s381, 8
        %s383 = scalar_lea.vmem %s4, %s382
        %s384 = smul.u32 16, %s20
        %p386 = scmp.eq.s32.totalorder %s22, 0
        // Predicated region
        $region63: #{simple_cnn_forward.10} parent=57 // pred_check
          %p387 = pneg %p386
        $region64: #{simple_cnn_forward.10} parent=57 // pred_check_branch
          %389 = sbr.rel (%p387) target = $region66
        $region65: #{simple_cnn_forward.10} parent=57 // pred_region
          %390 = vst [vmem:[%s383] sm:$0xff] 0.0
          %391 = vst [vmem:[%s383 + $0x8] sm:$0xff] 0.0
          %392 = vst [vmem:[%s383 + $0x10] sm:$0xff] 0.0
          %393 = vst [vmem:[%s383 + $0x18] sm:$0xff] 0.0
          %394 = vst [vmem:[%s383 + $0x20] sm:$0xff] 0.0
          %395 = vst [vmem:[%s383 + $0x28] sm:$0xff] 0.0
          %396 = vst [vmem:[%s383 + $0x30] sm:$0xff] 0.0
          %397 = vst [vmem:[%s383 + $0x38] sm:$0xff] 0.0
          %398 = vst [vmem:[%s383 + $0x40] sm:$0xff] 0.0
          %399 = vst [vmem:[%s383 + $0x48] sm:$0xff] 0.0
          %400 = vst [vmem:[%s383 + $0x50] sm:$0xff] 0.0
          %401 = vst [vmem:[%s383 + $0x58] sm:$0xff] 0.0
          %402 = vst [vmem:[%s383 + $0x60] sm:$0xff] 0.0
          %403 = vst [vmem:[%s383 + $0x68] sm:$0xff] 0.0
          %404 = vst [vmem:[%s383 + $0x70] sm:$0xff] 0.0
          %405 = vst [vmem:[%s383 + $0x78] sm:$0xff] 0.0
        $region66: #{simple_cnn_forward.10} parent=57 // pred_fallthru
          _
        %v406 = vld [vmem:[%s383] sm:$0xff]
        %v407 = vld [vmem:[%s383 + $0x8] sm:$0xff]
        %v408 = vld [vmem:[%s383 + $0x10] sm:$0xff]
        %v409 = vld [vmem:[%s383 + $0x18] sm:$0xff]
        %v410 = vld [vmem:[%s383 + $0x20] sm:$0xff]
        %v411 = vld [vmem:[%s383 + $0x28] sm:$0xff]
        %v412 = vld [vmem:[%s383 + $0x30] sm:$0xff]
        %v413 = vld [vmem:[%s383 + $0x38] sm:$0xff]
        %v414 = vld [vmem:[%s383 + $0x40] sm:$0xff]
        %v415 = vld [vmem:[%s383 + $0x48] sm:$0xff]
        %v416 = vld [vmem:[%s383 + $0x50] sm:$0xff]
        %v417 = vld [vmem:[%s383 + $0x58] sm:$0xff]
        %v418 = vld [vmem:[%s383 + $0x60] sm:$0xff]
        %v419 = vld [vmem:[%s383 + $0x68] sm:$0xff]
        %v420 = vld [vmem:[%s383 + $0x70] sm:$0xff]
        %v421 = vld [vmem:[%s383 + $0x78] sm:$0xff]
        %v422 = vld [vmem:[%s319] sm:$0xff]
        %v423 = vld [vmem:[%s319 + $0x8] sm:$0xf]
        %v424 = vld [vmem:[%s319 + $0xc] sm:$0xff]
        %v425 = vld [vmem:[%s319 + $0x14] sm:$0xf]
        %v426 = vld [vmem:[%s319 + $0x18] sm:$0xff]
        %v427 = vld [vmem:[%s319 + $0x20] sm:$0xf]
        %v428 = vld [vmem:[%s319 + $0x24] sm:$0xff]
        %v429 = vld [vmem:[%s319 + $0x2c] sm:$0xf]
        %v430 = vld [vmem:[%s319 + $0x30] sm:$0xff]
        %v431 = vld [vmem:[%s319 + $0x38] sm:$0xf]
        %v432 = vld [vmem:[%s319 + $0x3c] sm:$0xff]
        %v433 = vld [vmem:[%s319 + $0x44] sm:$0xf]
        %v434 = vld [vmem:[%s319 + $0x48] sm:$0xff]
        %v435 = vld [vmem:[%s319 + $0x50] sm:$0xf]
        %v436 = vld [vmem:[%s319 + $0x54] sm:$0xff]
        %v437 = vld [vmem:[%s319 + $0x5c] sm:$0xf]
        %v438 = vld [vmem:[%s319 + $0x60] sm:$0xff]
        %v439 = vld [vmem:[%s319 + $0x68] sm:$0xf]
        %v440 = vld [vmem:[%s319 + $0x6c] sm:$0xff]
        %v441 = vld [vmem:[%s319 + $0x74] sm:$0xf]
        %v442 = vld [vmem:[%s319 + $0x78] sm:$0xff]
        %v443 = vld [vmem:[%s319 + $0x80] sm:$0xf]
        %v444 = vld [vmem:[%s319 + $0x84] sm:$0xff]
        %v445 = vld [vmem:[%s319 + $0x8c] sm:$0xf]
        %v446 = vld [vmem:[%s319 + $0x90] sm:$0xff]
        %v447 = vld [vmem:[%s319 + $0x98] sm:$0xf]
        %v448 = vld [vmem:[%s319 + $0x9c] sm:$0xff]
        %v449 = vld [vmem:[%s319 + $0xa4] sm:$0xf]
        %v450 = vld [vmem:[%s319 + $0xa8] sm:$0xff]
        %v451 = vld [vmem:[%s319 + $0xb0] sm:$0xf]
        %v452 = vld [vmem:[%s319 + $0xb4] sm:$0xff]
        %v453 = vld [vmem:[%s319 + $0xbc] sm:$0xf]
        %v454 = vld [vmem:[%s368] sm:$0xf]
        %v455 = vld [vmem:[%s368 + $0x4] sm:$0xf]
        %v456 = vld [vmem:[%s368 + $0x8] sm:$0xf]
        %v457 = vld [vmem:[%s368 + $0xc] sm:$0xf]
        %v458 = vld [vmem:[%s368 + $0x10] sm:$0xf]
        %v459 = vld [vmem:[%s368 + $0x14] sm:$0xf]
        %v460 = vld [vmem:[%s368 + $0x18] sm:$0xf]
        %v461 = vld [vmem:[%s368 + $0x1c] sm:$0xf]
        %v462 = vld [vmem:[%s368 + $0x20] sm:$0xf]
        %v463 = vld [vmem:[%s368 + $0x24] sm:$0xf]
        %v464 = vld [vmem:[%s368 + $0x28] sm:$0xf]
        %v465 = vld [vmem:[%s368 + $0x2c] sm:$0xf]
        %v466 = vld [vmem:[%s368 + $0x30] sm:$0xf]
        %v467 = vld [vmem:[%s368 + $0x34] sm:$0xf]
        %v468 = vld [vmem:[%s368 + $0x38] sm:$0xf]
        %v469 = vld [vmem:[%s368 + $0x3c] sm:$0xf]
        %v470 = vld [vmem:[%s368 + $0x40] sm:$0xf]
        %v471 = vld [vmem:[%s368 + $0x44] sm:$0xf]
        %v472 = vld [vmem:[%s368 + $0x48] sm:$0xf]
        %v473 = vld [vmem:[%s368 + $0x4c] sm:$0xf]
        %v474 = vld [vmem:[%s368 + $0x50] sm:$0xf]
        %v475 = vld [vmem:[%s368 + $0x54] sm:$0xf]
        %v476 = vld [vmem:[%s368 + $0x58] sm:$0xf]
        %v477 = vld [vmem:[%s368 + $0x5c] sm:$0xf]
        %v478 = vld [vmem:[%s368 + $0x60] sm:$0xf]
        %v479 = vld [vmem:[%s368 + $0x64] sm:$0xf]
        %v480 = vld [vmem:[%s368 + $0x68] sm:$0xf]
        %v481 = vld [vmem:[%s368 + $0x6c] sm:$0xf]
        %v482 = vld [vmem:[%s368 + $0x70] sm:$0xf]
        %v483 = vld [vmem:[%s368 + $0x74] sm:$0xf]
        %v484 = vld [vmem:[%s368 + $0x78] sm:$0xf]
        %v485 = vld [vmem:[%s368 + $0x7c] sm:$0xf]
        %v486 = vld [vmem:[%s368 + $0x80] sm:$0xf]
        %v487 = vld [vmem:[%s368 + $0x84] sm:$0xf]
        %v488 = vld [vmem:[%s368 + $0x88] sm:$0xf]
        %v489 = vld [vmem:[%s368 + $0x8c] sm:$0xf]
        %v490 = vld [vmem:[%s368 + $0x90] sm:$0xf]
        %v491 = vld [vmem:[%s368 + $0x94] sm:$0xf]
        %v492 = vld [vmem:[%s368 + $0x98] sm:$0xf]
        %v493 = vld [vmem:[%s368 + $0x9c] sm:$0xf]
        %v494 = vld [vmem:[%s368 + $0xa0] sm:$0xf]
        %v495 = vld [vmem:[%s368 + $0xa4] sm:$0xf]
        %v496 = vld [vmem:[%s368 + $0xa8] sm:$0xf]
        %v497 = vld [vmem:[%s368 + $0xac] sm:$0xf]
        %v498 = vld [vmem:[%s368 + $0xb0] sm:$0xf]
        %v499 = vld [vmem:[%s368 + $0xb4] sm:$0xf]
        %v500 = vld [vmem:[%s368 + $0xb8] sm:$0xf]
        %v501 = vld [vmem:[%s368 + $0xbc] sm:$0xf]
        %v534 = vunpack.c.l.b16 %v422
        %v535 = vunpack.c.h.b16 %v422
        %v536 = vunpack.c.l.b16 %v423
        %v537 = vunpack.c.l.b16 %v424
        %v538 = vunpack.c.h.b16 %v424
        %v539 = vunpack.c.l.b16 %v425
        %v540 = vunpack.c.l.b16 %v426
        %v541 = vunpack.c.h.b16 %v426
        %v542 = vunpack.c.l.b16 %v427
        %v543 = vunpack.c.l.b16 %v428
        %v544 = vunpack.c.h.b16 %v428
        %v545 = vunpack.c.l.b16 %v429
        %v546 = vunpack.c.l.b16 %v430
        %v547 = vunpack.c.h.b16 %v430
        %v548 = vunpack.c.l.b16 %v431
        %v549 = vunpack.c.l.b16 %v432
        %v550 = vunpack.c.h.b16 %v432
        %v551 = vunpack.c.l.b16 %v433
        %v552 = vunpack.c.l.b16 %v434
        %v553 = vunpack.c.h.b16 %v434
        %v554 = vunpack.c.l.b16 %v435
        %v555 = vunpack.c.l.b16 %v436
        %v556 = vunpack.c.h.b16 %v436
        %v557 = vunpack.c.l.b16 %v437
        %v558 = vunpack.c.l.b16 %v438
        %v559 = vunpack.c.h.b16 %v438
        %v560 = vunpack.c.l.b16 %v439
        %v561 = vunpack.c.l.b16 %v440
        %v562 = vunpack.c.h.b16 %v440
        %v563 = vunpack.c.l.b16 %v441
        %v564 = vunpack.c.l.b16 %v442
        %v565 = vunpack.c.h.b16 %v442
        %v566 = vunpack.c.l.b16 %v443
        %v567 = vunpack.c.l.b16 %v444
        %v568 = vunpack.c.h.b16 %v444
        %v569 = vunpack.c.l.b16 %v445
        %v570 = vunpack.c.l.b16 %v446
        %v571 = vunpack.c.h.b16 %v446
        %v572 = vunpack.c.l.b16 %v447
        %v573 = vunpack.c.l.b16 %v448
        %v574 = vunpack.c.h.b16 %v448
        %v575 = vunpack.c.l.b16 %v449
        %v576 = vunpack.c.l.b16 %v450
        %v577 = vunpack.c.h.b16 %v450
        %v578 = vunpack.c.l.b16 %v451
        %v579 = vunpack.c.l.b16 %v452
        %v580 = vunpack.c.h.b16 %v452
        %v581 = vunpack.c.l.b16 %v453
        %v582 = vpack.c.b16 %v537, %v534
        %v583 = vpack.c.b16 %v538, %v535
        %v584 = vpack.c.b16 %v539, %v536
        %v585 = vpack.c.b16 %v543, %v540
        %v586 = vpack.c.b16 %v544, %v541
        %v587 = vpack.c.b16 %v545, %v542
        %v588 = vpack.c.b16 %v549, %v546
        %v589 = vpack.c.b16 %v550, %v547
        %v590 = vpack.c.b16 %v551, %v548
        %v591 = vpack.c.b16 %v555, %v552
        %v592 = vpack.c.b16 %v556, %v553
        %v593 = vpack.c.b16 %v557, %v554
        %v594 = vpack.c.b16 %v561, %v558
        %v595 = vpack.c.b16 %v562, %v559
        %v596 = vpack.c.b16 %v563, %v560
        %v597 = vpack.c.b16 %v567, %v564
        %v598 = vpack.c.b16 %v568, %v565
        %v599 = vpack.c.b16 %v569, %v566
        %v600 = vpack.c.b16 %v573, %v570
        %v601 = vpack.c.b16 %v574, %v571
        %v602 = vpack.c.b16 %v575, %v572
        %v603 = vpack.c.b16 %v579, %v576
        %v604 = vpack.c.b16 %v580, %v577
        %v605 = vpack.c.b16 %v581, %v578
        %v678 = vunpack.c.l.b16 %v454
        %v679 = vunpack.c.l.b16 %v455
        %v680 = vunpack.c.l.b16 %v456
        %v681 = vunpack.c.l.b16 %v457
        %v682 = vunpack.c.l.b16 %v458
        %v683 = vunpack.c.l.b16 %v459
        %v684 = vunpack.c.l.b16 %v460
        %v685 = vunpack.c.l.b16 %v461
        %v686 = vunpack.c.l.b16 %v462
        %v687 = vunpack.c.l.b16 %v463
        %v688 = vunpack.c.l.b16 %v464
        %v689 = vunpack.c.l.b16 %v465
        %v690 = vunpack.c.l.b16 %v466
        %v691 = vunpack.c.l.b16 %v467
        %v692 = vunpack.c.l.b16 %v468
        %v693 = vunpack.c.l.b16 %v469
        %v694 = vunpack.c.l.b16 %v470
        %v695 = vunpack.c.l.b16 %v471
        %v696 = vunpack.c.l.b16 %v472
        %v697 = vunpack.c.l.b16 %v473
        %v698 = vunpack.c.l.b16 %v474
        %v699 = vunpack.c.l.b16 %v475
        %v700 = vunpack.c.l.b16 %v476
        %v701 = vunpack.c.l.b16 %v477
        %v702 = vunpack.c.l.b16 %v478
        %v703 = vunpack.c.l.b16 %v479
        %v704 = vunpack.c.l.b16 %v480
        %v705 = vunpack.c.l.b16 %v481
        %v706 = vunpack.c.l.b16 %v482
        %v707 = vunpack.c.l.b16 %v483
        %v708 = vunpack.c.l.b16 %v484
        %v709 = vunpack.c.l.b16 %v485
        %v710 = vunpack.c.l.b16 %v486
        %v711 = vunpack.c.l.b16 %v487
        %v712 = vunpack.c.l.b16 %v488
        %v713 = vunpack.c.l.b16 %v489
        %v714 = vunpack.c.l.b16 %v490
        %v715 = vunpack.c.l.b16 %v491
        %v716 = vunpack.c.l.b16 %v492
        %v717 = vunpack.c.l.b16 %v493
        %v718 = vunpack.c.l.b16 %v494
        %v719 = vunpack.c.l.b16 %v495
        %v720 = vunpack.c.l.b16 %v496
        %v721 = vunpack.c.l.b16 %v497
        %v722 = vunpack.c.l.b16 %v498
        %v723 = vunpack.c.l.b16 %v499
        %v724 = vunpack.c.l.b16 %v500
        %v725 = vunpack.c.l.b16 %v501
        %v726 = vpack.c.b16 %v679, %v678
        %v727 = vpack.c.b16 %v681, %v680
        %v728 = vpack.c.b16 %v683, %v682
        %v729 = vpack.c.b16 %v685, %v684
        %v730 = vpack.c.b16 %v687, %v686
        %v731 = vpack.c.b16 %v689, %v688
        %v732 = vpack.c.b16 %v691, %v690
        %v733 = vpack.c.b16 %v693, %v692
        %v734 = vpack.c.b16 %v695, %v694
        %v735 = vpack.c.b16 %v697, %v696
        %v736 = vpack.c.b16 %v699, %v698
        %v737 = vpack.c.b16 %v701, %v700
        %v738 = vpack.c.b16 %v703, %v702
        %v739 = vpack.c.b16 %v705, %v704
        %v740 = vpack.c.b16 %v707, %v706
        %v741 = vpack.c.b16 %v709, %v708
        %v742 = vpack.c.b16 %v711, %v710
        %v743 = vpack.c.b16 %v713, %v712
        %v744 = vpack.c.b16 %v715, %v714
        %v745 = vpack.c.b16 %v717, %v716
        %v746 = vpack.c.b16 %v719, %v718
        %v747 = vpack.c.b16 %v721, %v720
        %v748 = vpack.c.b16 %v723, %v722
        %v749 = vpack.c.b16 %v725, %v724
        %774 = vmatprep.subr.bf16.mxu0 0
        %775 = vmatpush1.bf16.msra.mxu0 %v726
        %776 = vmatprep.subr.bf16.mxu0 0
        %777 = vmatpush1.bf16.msra.mxu0 %v727
        %778 = vmatprep.subr.bf16.mxu0 0
        %779 = vmatpush1.bf16.msra.mxu0 %v728
        %780 = vmatprep.subr.bf16.mxu0 0
        %781 = vmatpush1.bf16.msra.mxu0 %v729
        %782 = vmatprep.subr.bf16.mxu0 0
        %783 = vmatpush1.bf16.msra.mxu0 %v730
        %784 = vmatprep.subr.bf16.mxu0 0
        %785 = vmatpush1.bf16.msra.mxu0 %v731
        %786 = vmatprep.subr.bf16.mxu0 0
        %787 = vmatpush1.bf16.msra.mxu0 %v732
        %788 = vmatprep.subr.bf16.mxu0 0
        %789 = vmatpush1.bf16.msra.mxu0 %v733
        %790 = vmatprep.subr.bf16.mxu0 0
        %791 = vmatpush1.bf16.msra.mxu0 %v734
        %792 = vmatprep.subr.bf16.mxu0 0
        %793 = vmatpush1.bf16.msra.mxu0 %v735
        %794 = vmatprep.subr.bf16.mxu0 0
        %795 = vmatpush1.bf16.msra.mxu0 %v736
        %796 = vmatprep.subr.bf16.mxu0 0
        %797 = vmatpush1.bf16.msra.mxu0 %v737
        %798 = vmatprep.subr.bf16.mxu0 0
        %799 = vmatpush1.bf16.msra.mxu0 %v738
        %800 = vmatprep.subr.bf16.mxu0 0
        %801 = vmatpush1.bf16.msra.mxu0 %v739
        %802 = vmatprep.subr.bf16.mxu0 0
        %803 = vmatpush1.bf16.msra.mxu0 %v740
        %804 = vmatprep.subr.bf16.mxu0 0
        %805 = vmatpush1.bf16.msra.mxu0 %v741
        %806 = vmatprep.mubr.bf16.mxu0 %v583
        %807 = vmatmul.mubr.bf16.gmra.mrb[0].mxu0 %v582
        %v808 = vpop.f32.mrb[0].mxu0
        %v809 = vadd.f32 0.0, %v808
        %v810 = vpop.f32.mrb[0].mxu0
        %v811 = vpop.f32.mrb[0].mxu0
        %v812 = vadd.f32 0.0, %v811
        %v813 = vpop.f32.mrb[0].mxu0
        %814 = vmatprep.mubr.bf16.mxu0 %v586
        %815 = vmatmul.mubr.bf16.gmra.mrb[0].mxu0 %v585
        %v816 = vpop.f32.mrb[0].mxu0
        %v817 = vadd.f32 0.0, %v816
        %v818 = vpop.f32.mrb[0].mxu0
        %v819 = vpop.f32.mrb[0].mxu0
        %v820 = vadd.f32 0.0, %v819
        %v821 = vpop.f32.mrb[0].mxu0
        %822 = vmatprep.mubr.bf16.mxu0 %v589
        %823 = vmatmul.mubr.bf16.gmra.mrb[0].mxu0 %v588
        %v824 = vpop.f32.mrb[0].mxu0
        %v825 = vadd.f32 0.0, %v824
        %v826 = vpop.f32.mrb[0].mxu0
        %v827 = vpop.f32.mrb[0].mxu0
        %v828 = vadd.f32 0.0, %v827
        %v829 = vpop.f32.mrb[0].mxu0
        %830 = vmatprep.mubr.bf16.mxu0 %v592
        %831 = vmatmul.mubr.bf16.gmra.mrb[0].mxu0 %v591
        %v832 = vpop.f32.mrb[0].mxu0
        %v833 = vadd.f32 0.0, %v832
        %v834 = vpop.f32.mrb[0].mxu0
        %v835 = vpop.f32.mrb[0].mxu0
        %v836 = vadd.f32 0.0, %v835
        %v837 = vpop.f32.mrb[0].mxu0
        %838 = vmatprep.mubr.bf16.mxu0 %v595
        %839 = vmatmul.mubr.bf16.gmra.mrb[0].mxu0 %v594
        %v840 = vpop.f32.mrb[0].mxu0
        %v841 = vadd.f32 0.0, %v840
        %v842 = vpop.f32.mrb[0].mxu0
        %v843 = vpop.f32.mrb[0].mxu0
        %v844 = vadd.f32 0.0, %v843
        %v845 = vpop.f32.mrb[0].mxu0
        %846 = vmatprep.mubr.bf16.mxu0 %v598
        %847 = vmatmul.mubr.bf16.gmra.mrb[0].mxu0 %v597
        %v848 = vpop.f32.mrb[0].mxu0
        %v849 = vadd.f32 0.0, %v848
        %v850 = vpop.f32.mrb[0].mxu0
        %v851 = vpop.f32.mrb[0].mxu0
        %v852 = vadd.f32 0.0, %v851
        %v853 = vpop.f32.mrb[0].mxu0
        %854 = vmatprep.mubr.bf16.mxu0 %v601
        %855 = vmatmul.mubr.bf16.gmra.mrb[0].mxu0 %v600
        %v856 = vpop.f32.mrb[0].mxu0
        %v857 = vadd.f32 0.0, %v856
        %v858 = vpop.f32.mrb[0].mxu0
        %v859 = vpop.f32.mrb[0].mxu0
        %v860 = vadd.f32 0.0, %v859
        %v861 = vpop.f32.mrb[0].mxu0
        %862 = vmatprep.mubr.bf16.mxu0 %v604
        %863 = vmatmul.mubr.bf16.gmra.mrb[0].mxu0 %v603
        %v864 = vpop.f32.mrb[0].mxu0
        %v865 = vadd.f32 0.0, %v864
        %v866 = vpop.f32.mrb[0].mxu0
        %v867 = vpop.f32.mrb[0].mxu0
        %v868 = vadd.f32 0.0, %v867
        %v869 = vpop.f32.mrb[0].mxu0
        %870 = vdwg.mxu0
        %871 = vmatprep.subr.bf16.mxu0 0
        %872 = vmatpush1.bf16.msra.mxu0 %v742
        %873 = vmatprep.subr.bf16.mxu0 0
        %874 = vmatpush1.bf16.msra.mxu0 %v743
        %875 = vmatprep.subr.bf16.mxu0 0
        %876 = vmatpush1.bf16.msra.mxu0 %v744
        %877 = vmatprep.subr.bf16.mxu0 0
        %878 = vmatpush1.bf16.msra.mxu0 %v745
        %879 = vmatprep.subr.bf16.mxu0 0
        %880 = vmatpush1.bf16.msra.mxu0 %v746
        %881 = vmatprep.subr.bf16.mxu0 0
        %882 = vmatpush1.bf16.msra.mxu0 %v747
        %883 = vmatprep.subr.bf16.mxu0 0
        %884 = vmatpush1.bf16.msra.mxu0 %v748
        %885 = vmatprep.subr.bf16.mxu0 0
        %886 = vmatpush1.bf16.msra.mxu0 %v749
        %887 = vmatprep.subr.bf16.mxu0 0
        %888 = vmatpush1.bf16.msra.mxu0 0
        %889 = vmatprep.subr.bf16.mxu0 0
        %890 = vmatpush1.bf16.msra.mxu0 0
        %891 = vmatprep.subr.bf16.mxu0 0
        %892 = vmatpush1.bf16.msra.mxu0 0
        %893 = vmatprep.subr.bf16.mxu0 0
        %894 = vmatpush1.bf16.msra.mxu0 0
        %895 = vmatprep.subr.bf16.mxu0 0
        %896 = vmatpush1.bf16.msra.mxu0 0
        %897 = vmatprep.subr.bf16.mxu0 0
        %898 = vmatpush1.bf16.msra.mxu0 0
        %899 = vmatprep.subr.bf16.mxu0 0
        %900 = vmatpush1.bf16.msra.mxu0 0
        %901 = vmatprep.subr.bf16.mxu0 0
        %902 = vmatpush1.bf16.msra.mxu0 0
        %903 = vmatprep.mubr.bf16.mxu0 0
        %904 = vmatmul.mubr.bf16.gmra.mrb[0].mxu0 %v584
        %v905 = vpop.f32.mrb[0].mxu0
        %v906 = vadd.f32 %v809, %v905
        %v907 = vpop.f32.mrb[0].mxu0
        %v908 = vpop.f32.mrb[0].mxu0
        %v909 = vadd.f32 %v812, %v908
        %v910 = vpop.f32.mrb[0].mxu0
        %911 = vmatprep.mubr.bf16.mxu0 0
        %912 = vmatmul.mubr.bf16.gmra.mrb[0].mxu0 %v587
        %v913 = vpop.f32.mrb[0].mxu0
        %v914 = vadd.f32 %v817, %v913
        %v915 = vpop.f32.mrb[0].mxu0
        %v916 = vpop.f32.mrb[0].mxu0
        %v917 = vadd.f32 %v820, %v916
        %v918 = vpop.f32.mrb[0].mxu0
        %919 = vmatprep.mubr.bf16.mxu0 0
        %920 = vmatmul.mubr.bf16.gmra.mrb[0].mxu0 %v590
        %v921 = vpop.f32.mrb[0].mxu0
        %v922 = vadd.f32 %v825, %v921
        %v923 = vpop.f32.mrb[0].mxu0
        %v924 = vpop.f32.mrb[0].mxu0
        %v925 = vadd.f32 %v828, %v924
        %v926 = vpop.f32.mrb[0].mxu0
        %927 = vmatprep.mubr.bf16.mxu0 0
        %928 = vmatmul.mubr.bf16.gmra.mrb[0].mxu0 %v593
        %v929 = vpop.f32.mrb[0].mxu0
        %v930 = vadd.f32 %v833, %v929
        %v931 = vpop.f32.mrb[0].mxu0
        %v932 = vpop.f32.mrb[0].mxu0
        %v933 = vadd.f32 %v836, %v932
        %v934 = vpop.f32.mrb[0].mxu0
        %935 = vmatprep.mubr.bf16.mxu0 0
        %936 = vmatmul.mubr.bf16.gmra.mrb[0].mxu0 %v596
        %v937 = vpop.f32.mrb[0].mxu0
        %v938 = vadd.f32 %v841, %v937
        %v939 = vpop.f32.mrb[0].mxu0
        %v940 = vpop.f32.mrb[0].mxu0
        %v941 = vadd.f32 %v844, %v940
        %v942 = vpop.f32.mrb[0].mxu0
        %943 = vmatprep.mubr.bf16.mxu0 0
        %944 = vmatmul.mubr.bf16.gmra.mrb[0].mxu0 %v599
        %v945 = vpop.f32.mrb[0].mxu0
        %v946 = vadd.f32 %v849, %v945
        %v947 = vpop.f32.mrb[0].mxu0
        %v948 = vpop.f32.mrb[0].mxu0
        %v949 = vadd.f32 %v852, %v948
        %v950 = vpop.f32.mrb[0].mxu0
        %951 = vmatprep.mubr.bf16.mxu0 0
        %952 = vmatmul.mubr.bf16.gmra.mrb[0].mxu0 %v602
        %v953 = vpop.f32.mrb[0].mxu0
        %v954 = vadd.f32 %v857, %v953
        %v955 = vpop.f32.mrb[0].mxu0
        %v956 = vpop.f32.mrb[0].mxu0
        %v957 = vadd.f32 %v860, %v956
        %v958 = vpop.f32.mrb[0].mxu0
        %959 = vmatprep.mubr.bf16.mxu0 0
        %960 = vmatmul.mubr.bf16.gmra.mrb[0].mxu0 %v605
        %v961 = vpop.f32.mrb[0].mxu0
        %v962 = vadd.f32 %v865, %v961
        %v963 = vpop.f32.mrb[0].mxu0
        %v964 = vpop.f32.mrb[0].mxu0
        %v965 = vadd.f32 %v868, %v964
        %v966 = vpop.f32.mrb[0].mxu0
        %967 = vdwg.mxu0
        %v968 = vadd.f32 %v406, %v906
        %v969 = vadd.f32 %v407, %v909
        %v970 = vadd.f32 %v408, %v914
        %v971 = vadd.f32 %v409, %v917
        %v972 = vadd.f32 %v410, %v922
        %v973 = vadd.f32 %v411, %v925
        %v974 = vadd.f32 %v412, %v930
        %v975 = vadd.f32 %v413, %v933
        %v976 = vadd.f32 %v414, %v938
        %v977 = vadd.f32 %v415, %v941
        %v978 = vadd.f32 %v416, %v946
        %v979 = vadd.f32 %v417, %v949
        %v980 = vadd.f32 %v418, %v954
        %v981 = vadd.f32 %v419, %v957
        %v982 = vadd.f32 %v420, %v962
        %v983 = vadd.f32 %v421, %v965
        %984 = vst [vmem:[%s383] sm:$0xff] %v968
        %985 = vst [vmem:[%s383 + $0x8] sm:$0xff] %v969
        %986 = vst [vmem:[%s383 + $0x10] sm:$0xff] %v970
        %987 = vst [vmem:[%s383 + $0x18] sm:$0xff] %v971
        %988 = vst [vmem:[%s383 + $0x20] sm:$0xff] %v972
        %989 = vst [vmem:[%s383 + $0x28] sm:$0xff] %v973
        %990 = vst [vmem:[%s383 + $0x30] sm:$0xff] %v974
        %991 = vst [vmem:[%s383 + $0x38] sm:$0xff] %v975
        %992 = vst [vmem:[%s383 + $0x40] sm:$0xff] %v976
        %993 = vst [vmem:[%s383 + $0x48] sm:$0xff] %v977
        %994 = vst [vmem:[%s383 + $0x50] sm:$0xff] %v978
        %995 = vst [vmem:[%s383 + $0x58] sm:$0xff] %v979
        %996 = vst [vmem:[%s383 + $0x60] sm:$0xff] %v980
        %997 = vst [vmem:[%s383 + $0x68] sm:$0xff] %v981
        %998 = vst [vmem:[%s383 + $0x70] sm:$0xff] %v982
        %999 = vst [vmem:[%s383 + $0x78] sm:$0xff] %v983
        %p1000 = scmp.eq.s32.totalorder %s22, 2
        // Predicated region
        $region67: #{simple_cnn_forward.10} parent=57 // pred_check
          %p1001 = pneg %p1000
        $region68: #{simple_cnn_forward.10} parent=57 // pred_check_branch
          %1003 = sbr.rel (%p1001) target = $region70
        $region69: #{simple_cnn_forward.10} parent=57 // pred_region
          %v1004 = vld [vmem:[%s383] sm:$0xff]
          %v1005 = vld [vmem:[%s383 + $0x8] sm:$0xff]
          %v1006 = vld [vmem:[%s383 + $0x10] sm:$0xff]
          %v1007 = vld [vmem:[%s383 + $0x18] sm:$0xff]
          %v1008 = vld [vmem:[%s383 + $0x20] sm:$0xff]
          %v1009 = vld [vmem:[%s383 + $0x28] sm:$0xff]
          %v1010 = vld [vmem:[%s383 + $0x30] sm:$0xff]
          %v1011 = vld [vmem:[%s383 + $0x38] sm:$0xff]
          %v1012 = vld [vmem:[%s383 + $0x40] sm:$0xff]
          %v1013 = vld [vmem:[%s383 + $0x48] sm:$0xff]
          %v1014 = vld [vmem:[%s383 + $0x50] sm:$0xff]
          %v1015 = vld [vmem:[%s383 + $0x58] sm:$0xff]
          %v1016 = vld [vmem:[%s383 + $0x60] sm:$0xff]
          %v1017 = vld [vmem:[%s383 + $0x68] sm:$0xff]
          %v1018 = vld [vmem:[%s383 + $0x70] sm:$0xff]
          %v1019 = vld [vmem:[%s383 + $0x78] sm:$0xff]
          %v1020 = vld [vmem:[%s372] sm:$0x1]
          %v1022 = vlaneseq
          %v1023 = vshrl.u32 %v1022, 7
          %v1024 = vsub.s32 0, %v1023
          %v1025 = vrot.slane %v1020, %v1024
          %v1027 = vmul.f32 %v1004, %v1025
          %v1028 = vmul.f32 %v1005, %v1025
          %v1029 = vmul.f32 %v1006, %v1025
          %v1030 = vmul.f32 %v1007, %v1025
          %v1031 = vmul.f32 %v1008, %v1025
          %v1032 = vmul.f32 %v1009, %v1025
          %v1033 = vmul.f32 %v1010, %v1025
          %v1034 = vmul.f32 %v1011, %v1025
          %v1035 = vmul.f32 %v1012, %v1025
          %v1036 = vmul.f32 %v1013, %v1025
          %v1037 = vmul.f32 %v1014, %v1025
          %v1038 = vmul.f32 %v1015, %v1025
          %v1039 = vmul.f32 %v1016, %v1025
          %v1040 = vmul.f32 %v1017, %v1025
          %v1041 = vmul.f32 %v1018, %v1025
          %v1042 = vmul.f32 %v1019, %v1025
          %v1043 = vld [vmem:[%s375] sm:$0x1]
          %v1045 = vlaneseq
          %v1046 = vshrl.u32 %v1045, 7
          %v1047 = vsub.s32 0, %v1046
          %v1048 = vrot.slane %v1043, %v1047
          %v1050 = vadd.f32 %v1027, %v1048
          %v1051 = vadd.f32 %v1028, %v1048
          %v1052 = vadd.f32 %v1029, %v1048
          %v1053 = vadd.f32 %v1030, %v1048
          %v1054 = vadd.f32 %v1031, %v1048
          %v1055 = vadd.f32 %v1032, %v1048
          %v1056 = vadd.f32 %v1033, %v1048
          %v1057 = vadd.f32 %v1034, %v1048
          %v1058 = vadd.f32 %v1035, %v1048
          %v1059 = vadd.f32 %v1036, %v1048
          %v1060 = vadd.f32 %v1037, %v1048
          %v1061 = vadd.f32 %v1038, %v1048
          %v1062 = vadd.f32 %v1039, %v1048
          %v1063 = vadd.f32 %v1040, %v1048
          %v1064 = vadd.f32 %v1041, %v1048
          %v1065 = vadd.f32 %v1042, %v1048
          %v1066 = vmax.f32 %v1050, 0.0
          %v1067 = vmax.f32 %v1051, 0.0
          %v1068 = vmax.f32 %v1052, 0.0
          %v1069 = vmax.f32 %v1053, 0.0
          %v1070 = vmax.f32 %v1054, 0.0
          %v1071 = vmax.f32 %v1055, 0.0
          %v1072 = vmax.f32 %v1056, 0.0
          %v1073 = vmax.f32 %v1057, 0.0
          %v1074 = vmax.f32 %v1058, 0.0
          %v1075 = vmax.f32 %v1059, 0.0
          %v1076 = vmax.f32 %v1060, 0.0
          %v1077 = vmax.f32 %v1061, 0.0
          %v1078 = vmax.f32 %v1062, 0.0
          %v1079 = vmax.f32 %v1063, 0.0
          %v1080 = vmax.f32 %v1064, 0.0
          %v1081 = vmax.f32 %v1065, 0.0
          %1082 = vst [vmem:[%s383] sm:$0xff] %v1066
          %1083 = vst [vmem:[%s383 + $0x8] sm:$0xff] %v1067
          %1084 = vst [vmem:[%s383 + $0x10] sm:$0xff] %v1068
          %1085 = vst [vmem:[%s383 + $0x18] sm:$0xff] %v1069
          %1086 = vst [vmem:[%s383 + $0x20] sm:$0xff] %v1070
          %1087 = vst [vmem:[%s383 + $0x28] sm:$0xff] %v1071
          %1088 = vst [vmem:[%s383 + $0x30] sm:$0xff] %v1072
          %1089 = vst [vmem:[%s383 + $0x38] sm:$0xff] %v1073
          %1090 = vst [vmem:[%s383 + $0x40] sm:$0xff] %v1074
          %1091 = vst [vmem:[%s383 + $0x48] sm:$0xff] %v1075
          %1092 = vst [vmem:[%s383 + $0x50] sm:$0xff] %v1076
          %1093 = vst [vmem:[%s383 + $0x58] sm:$0xff] %v1077
          %1094 = vst [vmem:[%s383 + $0x60] sm:$0xff] %v1078
          %1095 = vst [vmem:[%s383 + $0x68] sm:$0xff] %v1079
          %1096 = vst [vmem:[%s383 + $0x70] sm:$0xff] %v1080
          %1097 = vst [vmem:[%s383 + $0x78] sm:$0xff] %v1081
        $region70: #{simple_cnn_forward.10} parent=57 // pred_fallthru
          _
        %s1098 = smul.u32 16, %s20
        %p1099 = scmp.lt.s32.totalorder %s1098, 15
        %s1100 = scalar_select %p1099, %s1098, 15
        %p1101 = scmp.lt.s32.totalorder %s21, 0
        %s1102 = scalar_select %p1101, %s21, 0
        %s1103 = sadd.s32 %s1102, %s1100
        %s1104 = smul.addr %s1103, 8
        %s1105 = scalar_lea.vmem %s4, %s1104
        // Predicated region
        $region71: #{simple_cnn_forward.10} parent=57 // pred_check
          %p1106 = pneg %p162
        $region72: #{simple_cnn_forward.10} parent=57 // pred_check_branch
          %1108 = sbr.rel (%p1106) target = $region74
        $region73: #{simple_cnn_forward.10} parent=57 // pred_region
          %s1109 = smul.u32 16, %s20
        $region74: #{simple_cnn_forward.10} parent=57 // pred_fallthru
          _
        // Predicated region
        $region75: #{simple_cnn_forward.10} parent=57 // pred_check
          %p1110 = pneg %p162
        $region76: #{simple_cnn_forward.10} parent=57 // pred_check_branch
          %1112 = sbr.rel (%p1110) target = $region78
        $region77: #{simple_cnn_forward.10} parent=57 // pred_region
          %s1113 = smul.u32 16, %s20
          %p1114 = scmp.lt.s32.totalorder %s1113, 15
          %s1115 = scalar_select %p1114, %s1113, 15
          %p1116 = scmp.lt.s32.totalorder %s21, 0
          %s1117 = scalar_select %p1116, %s21, 0
          %s1118 = sadd.s32 %s1117, %s1115
          %s1119 = smul.addr %s1118, 8
          %s1120 = scalar_lea.vmem %s4, %s1119
        $region78: #{simple_cnn_forward.10} parent=57 // pred_fallthru
          _
      $region58: #{simple_cnn_forward.10} parent=5 // pred_fallthru
        _
      %p1121 = scmp.le.s32.totalorder 2, %s10
      // Predicated region
      $region79: #{simple_cnn_forward.10} parent=5 // pred_check
        %p1122 = pneg %p1121
      $region80: #{simple_cnn_forward.10} parent=5 // pred_check_branch
        %1124 = sbr.rel (%p1122) target = $region82
      $region81: #{simple_cnn_forward.10} parent=5 // pred_region
        %s1125 = ssub.s32 %s10, 2
      $region82: #{simple_cnn_forward.10} parent=5 // pred_fallthru
        _
    $region6: #{simple_cnn_forward.10} parent=1 // loop_footer
      %s14 = sadd.s32 1, %s10
    $region7: #{simple_cnn_forward.10} parent=1 // loop_footer_branch
      %9 = sbr.rel target = $region3
    $region8: #{simple_cnn_forward.10} parent=1 // loop_exit
      _

// kernel: simple_cnn_forward.12
$region0: #{simple_cnn_forward.12}
  #allocation0 [shape = 'u32[]', space=smem, size = 0x4, offset = 0x4, fixed_abs, tag = 'smem constant byte address 0x4 - core index']
  #allocation1 [shape = 'u32[144,128]{1,0:T(1,128)}', space=vmem, size = 0x12000, scoped, tag = 'internal scratch']
  %s0 = inlined_call_operand.vmem [shape: f32[32,128], index: 0, kind: input, shape index: {}]
  %s1 = inlined_call_operand.vmem [shape: f32[32,128], index: 1, kind: input, shape index: {}]
  %s2 = inlined_call_operand.vmem [shape: f32[32,128], index: 2, kind: input, shape index: {}]
  %s3 = inlined_call_operand.vmem [shape: f32[32,128], index: 3, kind: input, shape index: {}]
  %s4 = inlined_call_operand.vmem [shape: f32[32,128], index: 4, kind: output, shape index: {}]
  %s5 = sld [smem:[#allocation0]]
  $region26: #{simple_cnn_forward.12} parent=0
    _
  %s7 = ssub.s32 1, %s5
  %s8 = scalar_select 0, %s7, %s5
  // Predicated region
  $region2: #{simple_cnn_forward.12} parent=0 // pred_check
    _
  $region3: #{simple_cnn_forward.12} parent=0 // pred_check_branch
    %10 = sbr.rel (0) target = $region5
  $region4: #{simple_cnn_forward.12} parent=0 // pred_region
    _
  $region5: #{simple_cnn_forward.12} parent=0 // pred_fallthru
    _
  // Predicated region
  $region6: #{simple_cnn_forward.12} parent=0 // pred_check
    _
  $region7: #{simple_cnn_forward.12} parent=0 // pred_check_branch
    %12 = sbr.rel (0) target = $region9
  $region8: #{simple_cnn_forward.12} parent=0 // pred_region
    _
  $region9: #{simple_cnn_forward.12} parent=0 // pred_fallthru
    _
  // Predicated region
  $region10: #{simple_cnn_forward.12} parent=0 // pred_check
    _
  $region11: #{simple_cnn_forward.12} parent=0 // pred_check_branch
    %14 = sbr.rel (0) target = $region13
  $region12: #{simple_cnn_forward.12} parent=0 // pred_region
    _
  $region13: #{simple_cnn_forward.12} parent=0 // pred_fallthru
    _
  // Predicated region
  $region14: #{simple_cnn_forward.12} parent=0 // pred_check
    _
  $region15: #{simple_cnn_forward.12} parent=0 // pred_check_branch
    %16 = sbr.rel (0) target = $region17
  $region16: #{simple_cnn_forward.12} parent=0 // pred_region
    _
  $region17: #{simple_cnn_forward.12} parent=0 // pred_fallthru
    _
  %v17 = vld [vmem:[%s0] sm:$0xff]
  %v18 = vld [vmem:[%s0 + $0x8] sm:$0xff]
  %v19 = vld [vmem:[%s0 + $0x10] sm:$0xff]
  %v20 = vld [vmem:[%s0 + $0x18] sm:$0xff]
  %v21 = vld [vmem:[%s1] sm:$0xff]
  %v22 = vld [vmem:[%s1 + $0x8] sm:$0xff]
  %v23 = vld [vmem:[%s1 + $0x10] sm:$0xff]
  %v24 = vld [vmem:[%s1 + $0x18] sm:$0xff]
  %v25 = vmax.f32 %v17, %v21
  %v26 = vmax.f32 %v18, %v22
  %v27 = vmax.f32 %v19, %v23
  %v28 = vmax.f32 %v20, %v24
  %v29 = vld [vmem:[%s2] sm:$0xff]
  %v30 = vld [vmem:[%s2 + $0x8] sm:$0xff]
  %v31 = vld [vmem:[%s2 + $0x10] sm:$0xff]
  %v32 = vld [vmem:[%s2 + $0x18] sm:$0xff]
  %v33 = vld [vmem:[%s3] sm:$0xff]
  %v34 = vld [vmem:[%s3 + $0x8] sm:$0xff]
  %v35 = vld [vmem:[%s3 + $0x10] sm:$0xff]
  %v36 = vld [vmem:[%s3 + $0x18] sm:$0xff]
  %v37 = vmax.f32 %v29, %v33
  %v38 = vmax.f32 %v30, %v34
  %v39 = vmax.f32 %v31, %v35
  %v40 = vmax.f32 %v32, %v36
  %v41 = vmax.f32 %v25, %v37
  %v42 = vmax.f32 %v26, %v38
  %v43 = vmax.f32 %v27, %v39
  %v44 = vmax.f32 %v28, %v40
  %45 = vst [vmem:[%s4] sm:$0xff] %v41
  %46 = vst [vmem:[%s4 + $0x8] sm:$0xff] %v42
  %47 = vst [vmem:[%s4 + $0x10] sm:$0xff] %v43
  %48 = vst [vmem:[%s4 + $0x18] sm:$0xff] %v44
  // Predicated region
  $region18: #{simple_cnn_forward.12} parent=0 // pred_check
    _
  $region19: #{simple_cnn_forward.12} parent=0 // pred_check_branch
    %50 = sbr.rel (0) target = $region21
  $region20: #{simple_cnn_forward.12} parent=0 // pred_region
    _
  $region21: #{simple_cnn_forward.12} parent=0 // pred_fallthru
    _
  // Predicated region
  $region22: #{simple_cnn_forward.12} parent=0 // pred_check
    _
  $region23: #{simple_cnn_forward.12} parent=0 // pred_check_branch
    %52 = sbr.rel (0) target = $region25
  $region24: #{simple_cnn_forward.12} parent=0 // pred_region
    _
  $region25: #{simple_cnn_forward.12} parent=0 // pred_fallthru
    _

// kernel: simple_cnn_forward.13
$region0: #{simple_cnn_forward.13}
  #allocation0 [shape = 'u32[]', space=smem, size = 0x4, offset = 0x4, fixed_abs, tag = 'smem constant byte address 0x4 - core index']
  #allocation1 [shape = 'u32[144,128]{1,0:T(1,128)}', space=vmem, size = 0x12000, scoped, tag = 'internal scratch']
  %s0 = inlined_call_operand.vmem [shape: bf16[32,1152], index: 0, kind: input, shape index: {}]
  %s1 = inlined_call_operand.vmem [shape: bf16[1152,128], index: 1, kind: input, shape index: {}]
  %s2 = inlined_call_operand.vmem [shape: f32[1,128], index: 2, kind: input, shape index: {}]
  %s3 = inlined_call_operand.vmem [shape: f32[1,128], index: 3, kind: input, shape index: {}]
  %s4 = inlined_call_operand.vmem [shape: f32[32,128], index: 4, kind: output, shape index: {}]
  %s5 = sld [smem:[#allocation0]]
  $region83: #{simple_cnn_forward.13} parent=0
    _
  %s7 = ssub.s32 1, %s5
  %s8 = scalar_select 0, %s7, %s5
  $region1: #{simple_cnn_forward.13} parent=0
    #allocation2 [shape = 'u8[49152]{0}', space=vmem, size = 0xc000, scoped, tag = 'input window, operand 0']
    loop: start=0, step=1, limit=5
    $region2: #{simple_cnn_forward.13} parent=1 // loop_pre_header
      _
    $region3: #{simple_cnn_forward.13} parent=1 // loop_header
      %s10 = sphi 0, %s14
      %p11 = scmp.ge.s32.totalorder %s10, 5
      %s17 = sphi 0, %s36
      %s18 = sphi 0, %s32
      %s19 = sphi 0, %s28
      %s20 = sphi 0, %s17
      %s21 = sphi 0, %s18
      %s22 = sphi 0, %s19
      %s23 = sphi 0, %s20
      %s24 = sphi 0, %s21
      %s25 = sphi 0, %s22
      %s41 = sphi 0, %s43
      %s44 = sphi 0, %s41
      %s45 = sphi 0, %s44
      %s61 = sphi 0, %s45
      %s69 = sphi 0, %s71
      %s72 = sphi 0, %s69
      %s73 = sphi 0, %s72
      %s89 = sphi 0, %s73
      %s95 = sphi 0, %s97
      %s98 = sphi 0, %s95
      %s99 = sphi 0, %s98
      %s115 = sphi 0, %s99
      %s121 = sphi 0, %s123
      %s124 = sphi 0, %s121
      %s125 = sphi 0, %s124
      %s141 = sphi 0, %s125
      %s149 = sphi 0, %s151
      %s152 = sphi 0, %s149
      %s153 = sphi 0, %s152
      %s169 = sphi 0, %s153
    $region4: #{simple_cnn_forward.13} parent=1 // loop_header_branch
      %13 = sbr.rel (%p11) target = $region8
    $region5: #{simple_cnn_forward.13} parent=1 // loop_body
      %s15 = ssub.s32 %s10, 1
      %s16 = ssub.s32 %s10, 2
      %s26 = sadd.s32 1, %s19
      %p27 = scmp.ge.s32.totalorder %s26, 3
      %s28 = scalar_select %p27, 0, %s26
      %s29 = sadd.s32 1, %s18
      %s30 = scalar_select %p27, %s29, %s18
      %p31 = scmp.ge.s32.totalorder %s30, 1
      %s32 = scalar_select %p31, 0, %s30
      %s33 = sadd.s32 1, %s17
      %s34 = scalar_select %p31, %s33, %s17
      %p35 = scmp.ge.s32.totalorder %s34, 1
      %s36 = scalar_select %p35, 0, %s34
      %s37 = ssub.s32 %s17, %s36
      %s38 = ssub.s32 %s19, %s28
      %s39 = sor.u32 %s37, %s38
      %p40 = scmp.eq.s32.totalorder %s39, 0
      %s42 = sadd.s32 %s41, 1
      %s43 = scalar_select %p40, %s41, %s42
      %p46 = pneg %p40
      %p47 = scmp.eq.s32.totalorder %s10, 2
      %p48 = por %p46, %p47
      %p49 = scmp.ne.s32.totalorder %s41, %s44
      %p50 = scmp.eq.s32.totalorder %s10, 0
      %p51 = por %p49, %p50
      %p52 = scmp.ne.s32.totalorder %s41, %s44
      %p53 = scmp.eq.s32.totalorder %s15, 2
      %p54 = por %p52, %p53
      %p55 = scmp.ne.s32.totalorder %s44, %s45
      %p56 = scmp.eq.s32.totalorder %s15, 0
      %p57 = por %p55, %p56
      %p58 = scmp.ne.s32.totalorder %s44, %s45
      %p59 = scmp.eq.s32.totalorder %s16, 2
      %p60 = por %p58, %p59
      %p62 = scmp.ne.s32.totalorder %s45, %s61
      %p63 = scmp.eq.s32.totalorder %s16, 0
      %p64 = por %p62, %p63
      %s65 = ssub.s32 %s19, %s28
      %s66 = ssub.s32 %s18, %s32
      %s67 = sor.u32 %s65, %s66
      %p68 = scmp.eq.s32.totalorder %s67, 0
      %s70 = sadd.s32 %s69, 1
      %s71 = scalar_select %p68, %s69, %s70
      %p74 = pneg %p68
      %p75 = scmp.eq.s32.totalorder %s10, 2
      %p76 = por %p74, %p75
      %p77 = scmp.ne.s32.totalorder %s69, %s72
      %p78 = scmp.eq.s32.totalorder %s10, 0
      %p79 = por %p77, %p78
      %p80 = scmp.ne.s32.totalorder %s69, %s72
      %p81 = scmp.eq.s32.totalorder %s15, 2
      %p82 = por %p80, %p81
      %p83 = scmp.ne.s32.totalorder %s72, %s73
      %p84 = scmp.eq.s32.totalorder %s15, 0
      %p85 = por %p83, %p84
      %p86 = scmp.ne.s32.totalorder %s72, %s73
      %p87 = scmp.eq.s32.totalorder %s16, 2
      %p88 = por %p86, %p87
      %p90 = scmp.ne.s32.totalorder %s73, %s89
      %p91 = scmp.eq.s32.totalorder %s16, 0
      %p92 = por %p90, %p91
      %s93 = ssub.s32 %s18, %s32
      %p94 = scmp.eq.s32.totalorder %s93, 0
      %s96 = sadd.s32 %s95, 1
      %s97 = scalar_select %p94, %s95, %s96
      %p100 = pneg %p94
      %p101 = scmp.eq.s32.totalorder %s10, 2
      %p102 = por %p100, %p101
      %p103 = scmp.ne.s32.totalorder %s95, %s98
      %p104 = scmp.eq.s32.totalorder %s10, 0
      %p105 = por %p103, %p104
      %p106 = scmp.ne.s32.totalorder %s95, %s98
      %p107 = scmp.eq.s32.totalorder %s15, 2
      %p108 = por %p106, %p107
      %p109 = scmp.ne.s32.totalorder %s98, %s99
      %p110 = scmp.eq.s32.totalorder %s15, 0
      %p111 = por %p109, %p110
      %p112 = scmp.ne.s32.totalorder %s98, %s99
      %p113 = scmp.eq.s32.totalorder %s16, 2
      %p114 = por %p112, %p113
      %p116 = scmp.ne.s32.totalorder %s99, %s115
      %p117 = scmp.eq.s32.totalorder %s16, 0
      %p118 = por %p116, %p117
      %s119 = ssub.s32 %s18, %s32
      %p120 = scmp.eq.s32.totalorder %s119, 0
      %s122 = sadd.s32 %s121, 1
      %s123 = scalar_select %p120, %s121, %s122
      %p126 = pneg %p120
      %p127 = scmp.eq.s32.totalorder %s10, 2
      %p128 = por %p126, %p127
      %p129 = scmp.ne.s32.totalorder %s121, %s124
      %p130 = scmp.eq.s32.totalorder %s10, 0
      %p131 = por %p129, %p130
      %p132 = scmp.ne.s32.totalorder %s121, %s124
      %p133 = scmp.eq.s32.totalorder %s15, 2
      %p134 = por %p132, %p133
      %p135 = scmp.ne.s32.totalorder %s124, %s125
      %p136 = scmp.eq.s32.totalorder %s15, 0
      %p137 = por %p135, %p136
      %p138 = scmp.ne.s32.totalorder %s124, %s125
      %p139 = scmp.eq.s32.totalorder %s16, 2
      %p140 = por %p138, %p139
      %p142 = scmp.ne.s32.totalorder %s125, %s141
      %p143 = scmp.eq.s32.totalorder %s16, 0
      %p144 = por %p142, %p143
      %s145 = ssub.s32 %s17, %s36
      %s146 = ssub.s32 %s18, %s32
      %s147 = sor.u32 %s145, %s146
      %p148 = scmp.eq.s32.totalorder %s147, 0
      %s150 = sadd.s32 %s149, 1
      %s151 = scalar_select %p148, %s149, %s150
      %p154 = pneg %p148
      %p155 = scmp.eq.s32.totalorder %s10, 2
      %p156 = por %p154, %p155
      %p157 = scmp.ne.s32.totalorder %s149, %s152
      %p158 = scmp.eq.s32.totalorder %s10, 0
      %p159 = por %p157, %p158
      %p160 = scmp.ne.s32.totalorder %s149, %s152
      %p161 = scmp.eq.s32.totalorder %s15, 2
      %p162 = por %p160, %p161
      %p163 = scmp.ne.s32.totalorder %s152, %s153
      %p164 = scmp.eq.s32.totalorder %s15, 0
      %p165 = por %p163, %p164
      %p166 = scmp.ne.s32.totalorder %s152, %s153
      %p167 = scmp.eq.s32.totalorder %s16, 2
      %p168 = por %p166, %p167
      %p170 = scmp.ne.s32.totalorder %s153, %s169
      %p171 = scmp.eq.s32.totalorder %s16, 0
      %p172 = por %p170, %p171
      %p173 = scmp.le.s32.totalorder 1, %s10
      %p174 = scmp.lt.s32.totalorder %s10, 4
      %p175 = pnand %p173, %p174
      %p176 = pneg %p175
      // Predicated region
      $region9: #{simple_cnn_forward.13} parent=5 // pred_check
        _
      $region10: #{simple_cnn_forward.13} parent=5 // pred_check_branch
        %178 = sbr.rel (%p175) target = $region12
      $region11: #{simple_cnn_forward.13} parent=5 // pred_region
        %s179 = ssub.s32 %s10, 1
        // Predicated region
        $region13: #{simple_cnn_forward.13} parent=11 // pred_check
          %p180 = pneg %p111
        $region14: #{simple_cnn_forward.13} parent=11 // pred_check_branch
          %182 = sbr.rel (%p180) target = $region16
        $region15: #{simple_cnn_forward.13} parent=11 // pred_region
          %p183 = scmp.lt.s32.totalorder %s21, 0
          %s184 = scalar_select %p183, %s21, 0
          %s185 = scalar_lea.vmem %s2, %s184
        $region16: #{simple_cnn_forward.13} parent=11 // pred_fallthru
          _
        // Predicated region
        $region17: #{simple_cnn_forward.13} parent=11 // pred_check
          %p186 = pneg %p137
        $region18: #{simple_cnn_forward.13} parent=11 // pred_check_branch
          %188 = sbr.rel (%p186) target = $region20
        $region19: #{simple_cnn_forward.13} parent=11 // pred_region
          %p189 = scmp.lt.s32.totalorder %s21, 0
          %s190 = scalar_select %p189, %s21, 0
          %s191 = scalar_lea.vmem %s3, %s190
        $region20: #{simple_cnn_forward.13} parent=11 // pred_fallthru
          _
      $region12: #{simple_cnn_forward.13} parent=5 // pred_fallthru
        _
      %p192 = scmp.lt.s32.totalorder %s10, 3
      // Predicated region
      $region21: #{simple_cnn_forward.13} parent=5 // pred_check
        %p193 = pneg %p192
      $region22: #{simple_cnn_forward.13} parent=5 // pred_check_branch
        %195 = sbr.rel (%p193) target = $region24
      $region23: #{simple_cnn_forward.13} parent=5 // pred_region
        // Predicated region
        $region25: #{simple_cnn_forward.13} parent=23 // pred_check
          %p196 = pneg %p51
        $region26: #{simple_cnn_forward.13} parent=23 // pred_check_branch
          %198 = sbr.rel (%p196) target = $region28
        $region27: #{simple_cnn_forward.13} parent=23 // pred_region
          %s199 = sand.u32 %s41, 1
          %s200 = sand.u32 %s41, 1
          %s201 = smul.addr %s200, 48
          %s202 = scalar_lea.vmem [#allocation2], %s201
          %s203 = smul.u32 4, %s17
          %s204 = smul.u32 3, %s19
          %s205 = smul.addr %s203, 9
          %s206 = sadd.s32 %s204, %s205
          %s207 = smul.addr %s206, 4
          %s208 = scalar_lea.vmem %s0, %s207
          // Predicated region
          $region29: #{simple_cnn_forward.13} parent=27 // pred_check
            _
          $region30: #{simple_cnn_forward.13} parent=27 // pred_check_branch
            %210 = sbr.rel (0) target = $region32
          $region31: #{simple_cnn_forward.13} parent=27 // pred_region
            // Predicated region
            $region33: #{simple_cnn_forward.13} parent=31 // pred_check
              _
            $region34: #{simple_cnn_forward.13} parent=31 // pred_check_branch
              %212 = sbr.rel (0) target = $region36
            $region35: #{simple_cnn_forward.13} parent=31 // pred_region
              %s213 = scalar_lea.vmem %s208, 8
              %s214 = scalar_lea.vmem %s202, 8 [#allocation2]
              loop: start=0, step=1, limit=1
              $region37: #{simple_cnn_forward.13} parent=35 // loop_pre_header
                _
              $region38: #{simple_cnn_forward.13} parent=35 // loop_header
                %s216 = sphi 0, %s220
                %p217 = scmp.ge.s32.totalorder %s216, 1
                %s221 = sphi %s208, %s208
                %s222 = sphi %s202, %s202
              $region39: #{simple_cnn_forward.13} parent=35 // loop_header_branch
                %219 = sbr.rel (%p217) target = $region43
              $region40: #{simple_cnn_forward.13} parent=35 // loop_body
                %v223 = vld [vmem:[%s221] sm:$0xff]
                %224 = vst [vmem:[%s222] sm:$0xff] %v223
                %v225 = vld [vmem:[%s221 + $0x24] sm:$0xff]
                %226 = vst [vmem:[%s222 + $0xc] sm:$0xff] %v225
                %v227 = vld [vmem:[%s221 + $0x48] sm:$0xff]
                %228 = vst [vmem:[%s222 + $0x18] sm:$0xff] %v227
                %v229 = vld [vmem:[%s221 + $0x6c] sm:$0xff]
                %230 = vst [vmem:[%s222 + $0x24] sm:$0xff] %v229
              $region41: #{simple_cnn_forward.13} parent=35 // loop_footer
                %s220 = sadd.s32 1, %s216
              $region42: #{simple_cnn_forward.13} parent=35 // loop_footer_branch
                %215 = sbr.rel target = $region38
              $region43: #{simple_cnn_forward.13} parent=35 // loop_exit
                _
              loop: start=0, step=1, limit=1
              $region44: #{simple_cnn_forward.13} parent=35 // loop_pre_header
                _
              $region45: #{simple_cnn_forward.13} parent=35 // loop_header
                %s233 = sphi 0, %s237
                %p234 = scmp.ge.s32.totalorder %s233, 1
                %s238 = sphi %s213, %s213
                %s239 = sphi %s214, %s214
              $region46: #{simple_cnn_forward.13} parent=35 // loop_header_branch
                %236 = sbr.rel (%p234) target = $region50
              $region47: #{simple_cnn_forward.13} parent=35 // loop_body
                %v240 = vld [vmem:[%s238] sm:$0xf]
                %241 = vst [vmem:[%s239] sm:$0xf] %v240
                %v242 = vld [vmem:[%s238 + $0x24] sm:$0xf]
                %243 = vst [vmem:[%s239 + $0xc] sm:$0xf] %v242
                %v244 = vld [vmem:[%s238 + $0x48] sm:$0xf]
                %245 = vst [vmem:[%s239 + $0x18] sm:$0xf] %v244
                %v246 = vld [vmem:[%s238 + $0x6c] sm:$0xf]
                %247 = vst [vmem:[%s239 + $0x24] sm:$0xf] %v246
              $region48: #{simple_cnn_forward.13} parent=35 // loop_footer
                %s237 = sadd.s32 1, %s233
              $region49: #{simple_cnn_forward.13} parent=35 // loop_footer_branch
                %232 = sbr.rel target = $region45
              $region50: #{simple_cnn_forward.13} parent=35 // loop_exit
                _
            $region36: #{simple_cnn_forward.13} parent=31 // pred_fallthru
              _
          $region32: #{simple_cnn_forward.13} parent=27 // pred_fallthru
            _
          %248 = vnop
        $region28: #{simple_cnn_forward.13} parent=23 // pred_fallthru
          _
        // Predicated region
        $region51: #{simple_cnn_forward.13} parent=23 // pred_check
          %p249 = pneg %p79
        $region52: #{simple_cnn_forward.13} parent=23 // pred_check_branch
          %251 = sbr.rel (%p249) target = $region54
        $region53: #{simple_cnn_forward.13} parent=23 // pred_region
          %s252 = smul.u32 48, %s19
          %p253 = scmp.lt.s32.totalorder %s252, 143
          %s254 = scalar_select %p253, %s252, 143
          %p255 = scmp.lt.s32.totalorder %s18, 0
          %s256 = scalar_select %p255, %s18, 0
          %s257 = sadd.s32 %s256, %s254
          %s258 = smul.addr %s257, 4
          %s259 = scalar_lea.vmem %s1, %s258
          %s260 = smul.u32 48, %s19
        $region54: #{simple_cnn_forward.13} parent=23 // pred_fallthru
          _
      $region24: #{simple_cnn_forward.13} parent=5 // pred_fallthru
        _
      %p261 = scmp.le.s32.totalorder 1, %s10
      %p262 = scmp.lt.s32.totalorder %s10, 4
      %p263 = pnand %p261, %p262
      %p264 = pneg %p263
      // Predicated region
      $region55: #{simple_cnn_forward.13} parent=5 // pred_check
        _
      $region56: #{simple_cnn_forward.13} parent=5 // pred_check_branch
        %266 = sbr.rel (%p263) target = $region58
      $region57: #{simple_cnn_forward.13} parent=5 // pred_region
        %s267 = ssub.s32 %s10, 1
        %s268 = sand.u32 %s44, 1
        %s269 = sand.u32 %s44, 1
        %s270 = smul.addr %s269, 48
        %s271 = scalar_lea.vmem [#allocation2], %s270
        // Predicated region
        $region59: #{simple_cnn_forward.13} parent=57 // pred_check
          %p272 = pneg %p57
        $region60: #{simple_cnn_forward.13} parent=57 // pred_check_branch
          %274 = sbr.rel (%p272) target = $region62
        $region61: #{simple_cnn_forward.13} parent=57 // pred_region
          _
        $region62: #{simple_cnn_forward.13} parent=57 // pred_fallthru
          _
        %s275 = sand.u32 %s44, 1
        %s276 = sand.u32 %s44, 1
        %s277 = smul.addr %s276, 48
        %s278 = scalar_lea.vmem [#allocation2], %s277
        %p279 = pneg %p57
        %p280 = pneg %p54
        %s281 = smul.u32 48, %s22
        %p282 = scmp.lt.s32.totalorder %s281, 143
        %s283 = scalar_select %p282, %s281, 143
        %p284 = scmp.lt.s32.totalorder %s21, 0
        %s285 = scalar_select %p284, %s21, 0
        %s286 = sadd.s32 %s285, %s283
        %s287 = smul.addr %s286, 4
        %s288 = scalar_lea.vmem %s1, %s287
        %p289 = pneg %p85
        %p290 = pneg %p82
        %p291 = scmp.lt.s32.totalorder %s21, 0
        %s292 = scalar_select %p291, %s21, 0
        %s293 = scalar_lea.vmem %s2, %s292
        %p294 = pneg %p111
        %p295 = pneg %p108
        %p296 = scmp.lt.s32.totalorder %s21, 0
        %s297 = scalar_select %p296, %s21, 0
        %s298 = scalar_lea.vmem %s3, %s297
        %p299 = pneg %p137
        %p300 = pneg %p134
        %p301 = pneg %p165
        %p302 = pneg %p162
        %s303 = smul.u32 4, %s20
        %p304 = scmp.lt.s32.totalorder %s303, 3
        %s305 = scalar_select %p304, %s303, 3
        %p306 = scmp.lt.s32.totalorder %s21, 0
        %s307 = scalar_select %p306, %s21, 0
        %s308 = sadd.s32 %s307, %s305
        %s309 = smul.addr %s308, 8
        %s310 = scalar_lea.vmem %s4, %s309
        %s311 = smul.u32 4, %s20
        %s312 = smul.u32 3, %s22
        %s313 = smul.u32 48, %s22
        %p314 = scmp.lt.s32.totalorder %s313, 143
        %s315 = scalar_select %p314, %s313, 143
        %p316 = scmp.lt.s32.totalorder %s21, 0
        %s317 = scalar_select %p316, %s21, 0
        %s318 = sadd.s32 %s317, %s315
        %s319 = smul.addr %s318, 4
        %s320 = scalar_lea.vmem %s1, %s319
        %s321 = smul.u32 48, %s22
        %p322 = scmp.lt.s32.totalorder %s21, 0
        %s323 = scalar_select %p322, %s21, 0
        %s324 = scalar_lea.vmem %s2, %s323
        %p325 = scmp.lt.s32.totalorder %s21, 0
        %s326 = scalar_select %p325, %s21, 0
        %s327 = scalar_lea.vmem %s3, %s326
        %s328 = smul.u32 4, %s20
        %p329 = scmp.lt.s32.totalorder %s328, 3
        %s330 = scalar_select %p329, %s328, 3
        %p331 = scmp.lt.s32.totalorder %s21, 0
        %s332 = scalar_select %p331, %s21, 0
        %s333 = sadd.s32 %s332, %s330
        %s334 = smul.addr %s333, 8
        %s335 = scalar_lea.vmem %s4, %s334
        %s336 = smul.u32 4, %s20
        %p338 = scmp.eq.s32.totalorder %s22, 0
        // Predicated region
        $region63: #{simple_cnn_forward.13} parent=57 // pred_check
          %p339 = pneg %p338
        $region64: #{simple_cnn_forward.13} parent=57 // pred_check_branch
          %341 = sbr.rel (%p339) target = $region66
        $region65: #{simple_cnn_forward.13} parent=57 // pred_region
          %342 = vst [vmem:[%s335] sm:$0xff] 0.0
          %343 = vst [vmem:[%s335 + $0x8] sm:$0xff] 0.0
          %344 = vst [vmem:[%s335 + $0x10] sm:$0xff] 0.0
          %345 = vst [vmem:[%s335 + $0x18] sm:$0xff] 0.0
        $region66: #{simple_cnn_forward.13} parent=57 // pred_fallthru
          _
        %v346 = vld [vmem:[%s335] sm:$0xff]
        %v347 = vld [vmem:[%s335 + $0x8] sm:$0xff]
        %v348 = vld [vmem:[%s335 + $0x10] sm:$0xff]
        %v349 = vld [vmem:[%s335 + $0x18] sm:$0xff]
        %v350 = vld [vmem:[%s271] sm:$0xff]
        %v351 = vld [vmem:[%s271 + $0x8] sm:$0xf]
        %v352 = vld [vmem:[%s271 + $0xc] sm:$0xff]
        %v353 = vld [vmem:[%s271 + $0x14] sm:$0xf]
        %v354 = vld [vmem:[%s271 + $0x18] sm:$0xff]
        %v355 = vld [vmem:[%s271 + $0x20] sm:$0xf]
        %v356 = vld [vmem:[%s271 + $0x24] sm:$0xff]
        %v357 = vld [vmem:[%s271 + $0x2c] sm:$0xf]
        %v358 = vld [vmem:[%s320] sm:$0xf]
        %v359 = vld [vmem:[%s320 + $0x4] sm:$0xf]
        %v360 = vld [vmem:[%s320 + $0x8] sm:$0xf]
        %v361 = vld [vmem:[%s320 + $0xc] sm:$0xf]
        %v362 = vld [vmem:[%s320 + $0x10] sm:$0xf]
        %v363 = vld [vmem:[%s320 + $0x14] sm:$0xf]
        %v364 = vld [vmem:[%s320 + $0x18] sm:$0xf]
        %v365 = vld [vmem:[%s320 + $0x1c] sm:$0xf]
        %v366 = vld [vmem:[%s320 + $0x20] sm:$0xf]
        %v367 = vld [vmem:[%s320 + $0x24] sm:$0xf]
        %v368 = vld [vmem:[%s320 + $0x28] sm:$0xf]
        %v369 = vld [vmem:[%s320 + $0x2c] sm:$0xf]
        %v370 = vld [vmem:[%s320 + $0x30] sm:$0xf]
        %v371 = vld [vmem:[%s320 + $0x34] sm:$0xf]
        %v372 = vld [vmem:[%s320 + $0x38] sm:$0xf]
        %v373 = vld [vmem:[%s320 + $0x3c] sm:$0xf]
        %v374 = vld [vmem:[%s320 + $0x40] sm:$0xf]
        %v375 = vld [vmem:[%s320 + $0x44] sm:$0xf]
        %v376 = vld [vmem:[%s320 + $0x48] sm:$0xf]
        %v377 = vld [vmem:[%s320 + $0x4c] sm:$0xf]
        %v378 = vld [vmem:[%s320 + $0x50] sm:$0xf]
        %v379 = vld [vmem:[%s320 + $0x54] sm:$0xf]
        %v380 = vld [vmem:[%s320 + $0x58] sm:$0xf]
        %v381 = vld [vmem:[%s320 + $0x5c] sm:$0xf]
        %v382 = vld [vmem:[%s320 + $0x60] sm:$0xf]
        %v383 = vld [vmem:[%s320 + $0x64] sm:$0xf]
        %v384 = vld [vmem:[%s320 + $0x68] sm:$0xf]
        %v385 = vld [vmem:[%s320 + $0x6c] sm:$0xf]
        %v386 = vld [vmem:[%s320 + $0x70] sm:$0xf]
        %v387 = vld [vmem:[%s320 + $0x74] sm:$0xf]
        %v388 = vld [vmem:[%s320 + $0x78] sm:$0xf]
        %v389 = vld [vmem:[%s320 + $0x7c] sm:$0xf]
        %v390 = vld [vmem:[%s320 + $0x80] sm:$0xf]
        %v391 = vld [vmem:[%s320 + $0x84] sm:$0xf]
        %v392 = vld [vmem:[%s320 + $0x88] sm:$0xf]
        %v393 = vld [vmem:[%s320 + $0x8c] sm:$0xf]
        %v394 = vld [vmem:[%s320 + $0x90] sm:$0xf]
        %v395 = vld [vmem:[%s320 + $0x94] sm:$0xf]
        %v396 = vld [vmem:[%s320 + $0x98] sm:$0xf]
        %v397 = vld [vmem:[%s320 + $0x9c] sm:$0xf]
        %v398 = vld [vmem:[%s320 + $0xa0] sm:$0xf]
        %v399 = vld [vmem:[%s320 + $0xa4] sm:$0xf]
        %v400 = vld [vmem:[%s320 + $0xa8] sm:$0xf]
        %v401 = vld [vmem:[%s320 + $0xac] sm:$0xf]
        %v402 = vld [vmem:[%s320 + $0xb0] sm:$0xf]
        %v403 = vld [vmem:[%s320 + $0xb4] sm:$0xf]
        %v404 = vld [vmem:[%s320 + $0xb8] sm:$0xf]
        %v405 = vld [vmem:[%s320 + $0xbc] sm:$0xf]
        %v414 = vunpack.c.l.b16 %v350
        %v415 = vunpack.c.h.b16 %v350
        %v416 = vunpack.c.l.b16 %v351
        %v417 = vunpack.c.l.b16 %v352
        %v418 = vunpack.c.h.b16 %v352
        %v419 = vunpack.c.l.b16 %v353
        %v420 = vunpack.c.l.b16 %v354
        %v421 = vunpack.c.h.b16 %v354
        %v422 = vunpack.c.l.b16 %v355
        %v423 = vunpack.c.l.b16 %v356
        %v424 = vunpack.c.h.b16 %v356
        %v425 = vunpack.c.l.b16 %v357
        %v426 = vpack.c.b16 %v417, %v414
        %v427 = vpack.c.b16 %v418, %v415
        %v428 = vpack.c.b16 %v419, %v416
        %v429 = vpack.c.b16 %v423, %v420
        %v430 = vpack.c.b16 %v424, %v421
        %v431 = vpack.c.b16 %v425, %v422
        %v486 = vunpack.c.l.b16 %v358
        %v487 = vunpack.c.l.b16 %v359
        %v488 = vunpack.c.l.b16 %v360
        %v489 = vunpack.c.l.b16 %v361
        %v490 = vunpack.c.l.b16 %v362
        %v491 = vunpack.c.l.b16 %v363
        %v492 = vunpack.c.l.b16 %v364
        %v493 = vunpack.c.l.b16 %v365
        %v494 = vunpack.c.l.b16 %v366
        %v495 = vunpack.c.l.b16 %v367
        %v496 = vunpack.c.l.b16 %v368
        %v497 = vunpack.c.l.b16 %v369
        %v498 = vunpack.c.l.b16 %v370
        %v499 = vunpack.c.l.b16 %v371
        %v500 = vunpack.c.l.b16 %v372
        %v501 = vunpack.c.l.b16 %v373
        %v502 = vunpack.c.l.b16 %v374
        %v503 = vunpack.c.l.b16 %v375
        %v504 = vunpack.c.l.b16 %v376
        %v505 = vunpack.c.l.b16 %v377
        %v506 = vunpack.c.l.b16 %v378
        %v507 = vunpack.c.l.b16 %v379
        %v508 = vunpack.c.l.b16 %v380
        %v509 = vunpack.c.l.b16 %v381
        %v510 = vunpack.c.l.b16 %v382
        %v511 = vunpack.c.l.b16 %v383
        %v512 = vunpack.c.l.b16 %v384
        %v513 = vunpack.c.l.b16 %v385
        %v514 = vunpack.c.l.b16 %v386
        %v515 = vunpack.c.l.b16 %v387
        %v516 = vunpack.c.l.b16 %v388
        %v517 = vunpack.c.l.b16 %v389
        %v518 = vunpack.c.l.b16 %v390
        %v519 = vunpack.c.l.b16 %v391
        %v520 = vunpack.c.l.b16 %v392
        %v521 = vunpack.c.l.b16 %v393
        %v522 = vunpack.c.l.b16 %v394
        %v523 = vunpack.c.l.b16 %v395
        %v524 = vunpack.c.l.b16 %v396
        %v525 = vunpack.c.l.b16 %v397
        %v526 = vunpack.c.l.b16 %v398
        %v527 = vunpack.c.l.b16 %v399
        %v528 = vunpack.c.l.b16 %v400
        %v529 = vunpack.c.l.b16 %v401
        %v530 = vunpack.c.l.b16 %v402
        %v531 = vunpack.c.l.b16 %v403
        %v532 = vunpack.c.l.b16 %v404
        %v533 = vunpack.c.l.b16 %v405
        %v534 = vpack.c.b16 %v487, %v486
        %v535 = vpack.c.b16 %v489, %v488
        %v536 = vpack.c.b16 %v491, %v490
        %v537 = vpack.c.b16 %v493, %v492
        %v538 = vpack.c.b16 %v495, %v494
        %v539 = vpack.c.b16 %v497, %v496
        %v540 = vpack.c.b16 %v499, %v498
        %v541 = vpack.c.b16 %v501, %v500
        %v542 = vpack.c.b16 %v503, %v502
        %v543 = vpack.c.b16 %v505, %v504
        %v544 = vpack.c.b16 %v507, %v506
        %v545 = vpack.c.b16 %v509, %v508
        %v546 = vpack.c.b16 %v511, %v510
        %v547 = vpack.c.b16 %v513, %v512
        %v548 = vpack.c.b16 %v515, %v514
        %v549 = vpack.c.b16 %v517, %v516
        %v550 = vpack.c.b16 %v519, %v518
        %v551 = vpack.c.b16 %v521, %v520
        %v552 = vpack.c.b16 %v523, %v522
        %v553 = vpack.c.b16 %v525, %v524
        %v554 = vpack.c.b16 %v527, %v526
        %v555 = vpack.c.b16 %v529, %v528
        %v556 = vpack.c.b16 %v531, %v530
        %v557 = vpack.c.b16 %v533, %v532
        %582 = vmatprep.subr.bf16.mxu0 0
        %583 = vmatpush1.bf16.msra.mxu0 %v534
        %584 = vmatprep.subr.bf16.mxu0 0
        %585 = vmatpush1.bf16.msra.mxu0 %v535
        %586 = vmatprep.subr.bf16.mxu0 0
        %587 = vmatpush1.bf16.msra.mxu0 %v536
        %588 = vmatprep.subr.bf16.mxu0 0
        %589 = vmatpush1.bf16.msra.mxu0 %v537
        %590 = vmatprep.subr.bf16.mxu0 0
        %591 = vmatpush1.bf16.msra.mxu0 %v538
        %592 = vmatprep.subr.bf16.mxu0 0
        %593 = vmatpush1.bf16.msra.mxu0 %v539
        %594 = vmatprep.subr.bf16.mxu0 0
        %595 = vmatpush1.bf16.msra.mxu0 %v540
        %596 = vmatprep.subr.bf16.mxu0 0
        %597 = vmatpush1.bf16.msra.mxu0 %v541
        %598 = vmatprep.subr.bf16.mxu0 0
        %599 = vmatpush1.bf16.msra.mxu0 %v542
        %600 = vmatprep.subr.bf16.mxu0 0
        %601 = vmatpush1.bf16.msra.mxu0 %v543
        %602 = vmatprep.subr.bf16.mxu0 0
        %603 = vmatpush1.bf16.msra.mxu0 %v544
        %604 = vmatprep.subr.bf16.mxu0 0
        %605 = vmatpush1.bf16.msra.mxu0 %v545
        %606 = vmatprep.subr.bf16.mxu0 0
        %607 = vmatpush1.bf16.msra.mxu0 %v546
        %608 = vmatprep.subr.bf16.mxu0 0
        %609 = vmatpush1.bf16.msra.mxu0 %v547
        %610 = vmatprep.subr.bf16.mxu0 0
        %611 = vmatpush1.bf16.msra.mxu0 %v548
        %612 = vmatprep.subr.bf16.mxu0 0
        %613 = vmatpush1.bf16.msra.mxu0 %v549
        %614 = vmatprep.mubr.bf16.mxu0 %v427
        %615 = vmatmul.mubr.bf16.gmra.mrb[0].mxu0 %v426
        %v616 = vpop.f32.mrb[0].mxu0
        %v617 = vadd.f32 0.0, %v616
        %v618 = vpop.f32.mrb[0].mxu0
        %v619 = vpop.f32.mrb[0].mxu0
        %v620 = vadd.f32 0.0, %v619
        %v621 = vpop.f32.mrb[0].mxu0
        %622 = vmatprep.mubr.bf16.mxu0 %v430
        %623 = vmatmul.mubr.bf16.gmra.mrb[0].mxu0 %v429
        %v624 = vpop.f32.mrb[0].mxu0
        %v625 = vadd.f32 0.0, %v624
        %v626 = vpop.f32.mrb[0].mxu0
        %v627 = vpop.f32.mrb[0].mxu0
        %v628 = vadd.f32 0.0, %v627
        %v629 = vpop.f32.mrb[0].mxu0
        %630 = vdwg.mxu0
        %631 = vmatprep.subr.bf16.mxu0 0
        %632 = vmatpush1.bf16.msra.mxu0 %v550
        %633 = vmatprep.subr.bf16.mxu0 0
        %634 = vmatpush1.bf16.msra.mxu0 %v551
        %635 = vmatprep.subr.bf16.mxu0 0
        %636 = vmatpush1.bf16.msra.mxu0 %v552
        %637 = vmatprep.subr.bf16.mxu0 0
        %638 = vmatpush1.bf16.msra.mxu0 %v553
        %639 = vmatprep.subr.bf16.mxu0 0
        %640 = vmatpush1.bf16.msra.mxu0 %v554
        %641 = vmatprep.subr.bf16.mxu0 0
        %642 = vmatpush1.bf16.msra.mxu0 %v555
        %643 = vmatprep.subr.bf16.mxu0 0
        %644 = vmatpush1.bf16.msra.mxu0 %v556
        %645 = vmatprep.subr.bf16.mxu0 0
        %646 = vmatpush1.bf16.msra.mxu0 %v557
        %647 = vmatprep.subr.bf16.mxu0 0
        %648 = vmatpush1.bf16.msra.mxu0 0
        %649 = vmatprep.subr.bf16.mxu0 0
        %650 = vmatpush1.bf16.msra.mxu0 0
        %651 = vmatprep.subr.bf16.mxu0 0
        %652 = vmatpush1.bf16.msra.mxu0 0
        %653 = vmatprep.subr.bf16.mxu0 0
        %654 = vmatpush1.bf16.msra.mxu0 0
        %655 = vmatprep.subr.bf16.mxu0 0
        %656 = vmatpush1.bf16.msra.mxu0 0
        %657 = vmatprep.subr.bf16.mxu0 0
        %658 = vmatpush1.bf16.msra.mxu0 0
        %659 = vmatprep.subr.bf16.mxu0 0
        %660 = vmatpush1.bf16.msra.mxu0 0
        %661 = vmatprep.subr.bf16.mxu0 0
        %662 = vmatpush1.bf16.msra.mxu0 0
        %663 = vmatprep.mubr.bf16.mxu0 0
        %664 = vmatmul.mubr.bf16.gmra.mrb[0].mxu0 %v428
        %v665 = vpop.f32.mrb[0].mxu0
        %v666 = vadd.f32 %v617, %v665
        %v667 = vpop.f32.mrb[0].mxu0
        %v668 = vpop.f32.mrb[0].mxu0
        %v669 = vadd.f32 %v620, %v668
        %v670 = vpop.f32.mrb[0].mxu0
        %671 = vmatprep.mubr.bf16.mxu0 0
        %672 = vmatmul.mubr.bf16.gmra.mrb[0].mxu0 %v431
        %v673 = vpop.f32.mrb[0].mxu0
        %v674 = vadd.f32 %v625, %v673
        %v675 = vpop.f32.mrb[0].mxu0
        %v676 = vpop.f32.mrb[0].mxu0
        %v677 = vadd.f32 %v628, %v676
        %v678 = vpop.f32.mrb[0].mxu0
        %679 = vdwg.mxu0
        %v680 = vadd.f32 %v346, %v666
        %v681 = vadd.f32 %v347, %v669
        %v682 = vadd.f32 %v348, %v674
        %v683 = vadd.f32 %v349, %v677
        %684 = vst [vmem:[%s335] sm:$0xff] %v680
        %685 = vst [vmem:[%s335 + $0x8] sm:$0xff] %v681
        %686 = vst [vmem:[%s335 + $0x10] sm:$0xff] %v682
        %687 = vst [vmem:[%s335 + $0x18] sm:$0xff] %v683
        %p688 = scmp.eq.s32.totalorder %s22, 2
        // Predicated region
        $region67: #{simple_cnn_forward.13} parent=57 // pred_check
          %p689 = pneg %p688
        $region68: #{simple_cnn_forward.13} parent=57 // pred_check_branch
          %691 = sbr.rel (%p689) target = $region70
        $region69: #{simple_cnn_forward.13} parent=57 // pred_region
          %v692 = vld [vmem:[%s335] sm:$0xff]
          %v693 = vld [vmem:[%s335 + $0x8] sm:$0xff]
          %v694 = vld [vmem:[%s335 + $0x10] sm:$0xff]
          %v695 = vld [vmem:[%s335 + $0x18] sm:$0xff]
          %v696 = vld [vmem:[%s324] sm:$0x1]
          %v698 = vlaneseq
          %v699 = vshrl.u32 %v698, 7
          %v700 = vsub.s32 0, %v699
          %v701 = vrot.slane %v696, %v700
          %v703 = vmul.f32 %v692, %v701
          %v704 = vmul.f32 %v693, %v701
          %v705 = vmul.f32 %v694, %v701
          %v706 = vmul.f32 %v695, %v701
          %v707 = vld [vmem:[%s327] sm:$0x1]
          %v709 = vlaneseq
          %v710 = vshrl.u32 %v709, 7
          %v711 = vsub.s32 0, %v710
          %v712 = vrot.slane %v707, %v711
          %v714 = vadd.f32 %v703, %v712
          %v715 = vadd.f32 %v704, %v712
          %v716 = vadd.f32 %v705, %v712
          %v717 = vadd.f32 %v706, %v712
          %v718 = vmax.f32 %v714, 0.0
          %v719 = vmax.f32 %v715, 0.0
          %v720 = vmax.f32 %v716, 0.0
          %v721 = vmax.f32 %v717, 0.0
          %722 = vst [vmem:[%s335] sm:$0xff] %v718
          %723 = vst [vmem:[%s335 + $0x8] sm:$0xff] %v719
          %724 = vst [vmem:[%s335 + $0x10] sm:$0xff] %v720
          %725 = vst [vmem:[%s335 + $0x18] sm:$0xff] %v721
        $region70: #{simple_cnn_forward.13} parent=57 // pred_fallthru
          _
        %s726 = smul.u32 4, %s20
        %p727 = scmp.lt.s32.totalorder %s726, 3
        %s728 = scalar_select %p727, %s726, 3
        %p729 = scmp.lt.s32.totalorder %s21, 0
        %s730 = scalar_select %p729, %s21, 0
        %s731 = sadd.s32 %s730, %s728
        %s732 = smul.addr %s731, 8
        %s733 = scalar_lea.vmem %s4, %s732
        // Predicated region
        $region71: #{simple_cnn_forward.13} parent=57 // pred_check
          %p734 = pneg %p162
        $region72: #{simple_cnn_forward.13} parent=57 // pred_check_branch
          %736 = sbr.rel (%p734) target = $region74
        $region73: #{simple_cnn_forward.13} parent=57 // pred_region
          %s737 = smul.u32 4, %s20
        $region74: #{simple_cnn_forward.13} parent=57 // pred_fallthru
          _
        // Predicated region
        $region75: #{simple_cnn_forward.13} parent=57 // pred_check
          %p738 = pneg %p162
        $region76: #{simple_cnn_forward.13} parent=57 // pred_check_branch
          %740 = sbr.rel (%p738) target = $region78
        $region77: #{simple_cnn_forward.13} parent=57 // pred_region
          %s741 = smul.u32 4, %s20
          %p742 = scmp.lt.s32.totalorder %s741, 3
          %s743 = scalar_select %p742, %s741, 3
          %p744 = scmp.lt.s32.totalorder %s21, 0
          %s745 = scalar_select %p744, %s21, 0
          %s746 = sadd.s32 %s745, %s743
          %s747 = smul.addr %s746, 8
          %s748 = scalar_lea.vmem %s4, %s747
        $region78: #{simple_cnn_forward.13} parent=57 // pred_fallthru
          _
      $region58: #{simple_cnn_forward.13} parent=5 // pred_fallthru
        _
      %p749 = scmp.le.s32.totalorder 2, %s10
      // Predicated region
      $region79: #{simple_cnn_forward.13} parent=5 // pred_check
        %p750 = pneg %p749
      $region80: #{simple_cnn_forward.13} parent=5 // pred_check_branch
        %752 = sbr.rel (%p750) target = $region82
      $region81: #{simple_cnn_forward.13} parent=5 // pred_region
        %s753 = ssub.s32 %s10, 2
      $region82: #{simple_cnn_forward.13} parent=5 // pred_fallthru
        _
    $region6: #{simple_cnn_forward.13} parent=1 // loop_footer
      %s14 = sadd.s32 1, %s10
    $region7: #{simple_cnn_forward.13} parent=1 // loop_footer_branch
      %9 = sbr.rel target = $region3
    $region8: #{simple_cnn_forward.13} parent=1 // loop_exit
      _

</llo_original>
